<compile_context>
chip_gen: v7x
topology: tpu7x:2x2x1
jax: 0.10.0
libtpu: 0.0.40
codegen_flags: <defaults>
</compile_context>

<pallas_src>
import functools

import jax
import jax.numpy as jnp
from jax.experimental import pallas as pl
from jax.experimental.pallas import tpu as pltpu


def _tile_lanes(v, k):
    """Replicate a (H, w) tile k times along the lane axis -> (H, w*k)."""
    return jnp.concatenate([v] * k, axis=1)


def _lsk_kernel(x_ref,
                w0r_ref, b0r_ref, wspr_ref, bspr_ref,
                w1r_ref, b1r_ref, w2r_ref, b2r_ref,
                wsqr_ref, bsqr_ref, wfr_ref, bfr_ref,
                out_ref,
                pad0_ref, padsp_ref, agg_ref,
                *, C, H, W):
    """One batch element of LSKblock.forward, packed channel-major in lanes."""
    f32 = jnp.float32
    Ch = C // 2
    WC = W * C            # packed lane width (128 at the toy size)
    WCh = W * Ch
    SEG = W + 6           # one padded map segment inside the squeeze buffer

    # ---- border-only zeroing of the persistent padded scratch --------------
    P0R, P0L = H + 4, WC + 4
    pad0_ref[0:2, :] = jnp.zeros((2, P0L), f32)
    pad0_ref[H + 2:P0R, :] = jnp.zeros((2, P0L), f32)
    pad0_ref[:, 0:2] = jnp.zeros((P0R, 2), f32)
    pad0_ref[:, WC + 2:P0L] = jnp.zeros((P0R, 2), f32)

    PSR, PSL = H + 18, WC + 18
    padsp_ref[0:9, :] = jnp.zeros((9, PSL), f32)
    padsp_ref[H + 9:PSR, :] = jnp.zeros((9, PSL), f32)
    padsp_ref[:, 0:9] = jnp.zeros((PSR, 9), f32)
    padsp_ref[:, WC + 9:PSL] = jnp.zeros((PSR, 9), f32)

    # ---- conv0: depthwise 5x5, pad 2 (25 packed taps) -----------------------
    pad0_ref[2:2 + H, 2:2 + WC] = x_ref[0]            # single packed copy
    acc = jnp.zeros((H, WC), f32) + b0r_ref[0]
    for ki in range(5):
        for kj in range(5):
            acc = acc + w0r_ref[ki * 5 + kj] * pad0_ref[ki:ki + H, kj:kj + WC]
    a1dw = acc                                        # conv0 output, packed

    # ---- conv_spatial: depthwise 7x7, dilation 3, pad 9 (49 packed taps) ----
    padsp_ref[9:9 + H, 9:9 + WC] = a1dw
    acc = jnp.zeros((H, WC), f32) + bspr_ref[0]
    for ki in range(7):
        for kj in range(7):
            acc = acc + wspr_ref[ki * 7 + kj] * \
                padsp_ref[3 * ki:3 * ki + H, 3 * kj:3 * kj + WC]
    a2dw = acc                                        # conv_spatial output

    # ---- conv1 / conv2: 1x1, C -> C/2, kept packed as (H, W*Ch) -------------
    attn1 = jnp.zeros((H, WCh), f32) + b1r_ref[0]
    attn2 = jnp.zeros((H, WCh), f32) + b2r_ref[0]
    for c in range(C):
        attn1 = attn1 + w1r_ref[c] * _tile_lanes(a1dw[:, c * W:(c + 1) * W], Ch)
        attn2 = attn2 + w2r_ref[c] * _tile_lanes(a2dw[:, c * W:(c + 1) * W], Ch)

    # ---- channel mean / max over concat([attn1, attn2]) ---------------------
    t12 = attn1 + attn2
    m12 = jnp.maximum(attn1, attn2)
    total = t12[:, 0:W]
    mx = m12[:, 0:W]
    for o in range(1, Ch):
        total = total + t12[:, o * W:(o + 1) * W]
        mx = jnp.maximum(mx, m12[:, o * W:(o + 1) * W])
    avg = total * (1.0 / C)

    # ---- conv_squeeze: 2 -> 2, 7x7, pad 3 (49 packed taps over 4 segments) --
    agg_ref[...] = jnp.zeros_like(agg_ref)            # tiny buffer: full zero
    agg_ref[3:3 + H, 3:3 + W] = avg
    agg_ref[3:3 + H, SEG + 3:SEG + 3 + W] = mx
    agg_ref[3:3 + H, 2 * SEG + 3:2 * SEG + 3 + W] = avg
    agg_ref[3:3 + H, 3 * SEG + 3:3 * SEG + 3 + W] = mx
    L = 4 * SEG
    accsq = jnp.zeros((H, L), f32) + bsqr_ref[0]
    for ki in range(7):
        for kj in range(7):
            accsq = accsq + wsqr_ref[ki * 7 + kj] * agg_ref[ki:ki + H, kj:kj + L]
    sig0 = jax.nn.sigmoid(accsq[:, 0:W] + accsq[:, SEG:SEG + W])
    sig1 = jax.nn.sigmoid(accsq[:, 2 * SEG:2 * SEG + W] +
                          accsq[:, 3 * SEG:3 * SEG + W])

    # ---- gate, final 1x1 conv (C/2 -> C), multiply by x, one dense store ----
    mix = attn1 * _tile_lanes(sig0, Ch) + attn2 * _tile_lanes(sig1, Ch)
    attn_full = jnp.zeros((H, WC), f32) + bfr_ref[0]
    for c in range(Ch):
        attn_full = attn_full + wfr_ref[c] * _tile_lanes(mix[:, c * W:(c + 1) * W], C)
    out_ref[0] = x_ref[0] * attn_full


@jax.jit
def lsk_block(x, w0, b0, wsp, bsp, w1, b1, w2, b2, wsq, bsq, wf, bf):
    """LSKblock.forward.  x: (N, C, H, W) NCHW; weights in PyTorch layouts."""
    f32 = jnp.float32
    N, C, H, W = x.shape
    Ch = C // 2
    WC = W * C
    SEG = W + 6

    # Packed lane-dense layout (N, H, C*W).  In a channels-last pipeline the
    # transposes below disappear.
    x_p = jnp.transpose(x.astype(f32), (0, 2, 1, 3)).reshape(N, H, WC)

    w_idx = jnp.arange(W)

    # depthwise 5x5 tap rows: row[ki*5+kj, c*W+w] = w0[c,ki,kj] * in_range(w)
    w0f = w0.reshape(C, 25).astype(f32)
    off5 = w_idx[None, :] + (jnp.arange(25) % 5)[:, None] - 2
    m5 = ((off5 >= 0) & (off5 < W)).astype(f32)                       # (25, W)
    w0rows = jnp.repeat(w0f, W, axis=0).T * jnp.tile(m5, (1, C))      # (25, WC)
    b0row = jnp.repeat(b0.astype(f32), W)[None, :]                    # (1, WC)

    # depthwise 7x7, dilation 3 tap rows
    wspf = wsp.reshape(C, 49).astype(f32)
    off7 = w_idx[None, :] + 3 * (jnp.arange(49) % 7)[:, None] - 9
    m7 = ((off7 >= 0) & (off7 < W)).astype(f32)                       # (49, W)
    wsprows = jnp.repeat(wspf, W, axis=0).T * jnp.tile(m7, (1, C))    # (49, WC)
    bsprow = jnp.repeat(bsp.astype(f32), W)[None, :]

    # 1x1 conv rows: w1rows[c, o*W+w] = w1[o, c]
    w1rows = jnp.repeat(w1.reshape(Ch, C).astype(f32).T, W, axis=1)   # (C, W*Ch)
    w2rows = jnp.repeat(w2.reshape(Ch, C).astype(f32).T, W, axis=1)
    b1row = jnp.repeat(b1.astype(f32), W)[None, :]                    # (1, W*Ch)
    b2row = jnp.repeat(b2.astype(f32), W)[None, :]
    wfrows = jnp.repeat(wf.reshape(C, Ch).astype(f32).T, W, axis=1)   # (Ch, WC)
    bfrow = jnp.repeat(bf.astype(f32), W)[None, :]                    # (1, WC)

    # conv_squeeze rows over 4 packed (out, in) segments of width SEG
    wsqf = wsq.reshape(2, 2, 49).astype(f32)
    bsqf = bsq.astype(f32)
    wsqrows = jnp.zeros((49, 4 * SEG), f32)
    for o in range(2):
        for ci in range(2):
            s = (2 * o + ci) * SEG
            wsqrows = wsqrows.at[:, s:s + W].set(
                jnp.broadcast_to(wsqf[o, ci][:, None], (49, W)))
    bsqrow = jnp.zeros((1, 4 * SEG), f32)
    bsqrow = bsqrow.at[0, 0:W].set(bsqf[0])
    bsqrow = bsqrow.at[0, 2 * SEG:2 * SEG + W].set(bsqf[1])

    kernel = functools.partial(_lsk_kernel, C=C, H=H, W=W)

    def full(shape):
        return pl.BlockSpec(shape, lambda n: (0,) * len(shape))

    cost = pl.CostEstimate(
        flops=N * H * W * (2 * C * (25 + 49) + 6 * C * Ch + 2 * 2 * 49 * 2 + 8 * C),
        transcendentals=2 * N * H * W,
        bytes_accessed=2 * N * C * H * W * 4)

    out_p = pl.pallas_call(
        kernel,
        out_shape=jax.ShapeDtypeStruct((N, H, WC), f32),
        grid_spec=pltpu.PrefetchScalarGridSpec(
            num_scalar_prefetch=0,
            grid=(N,),
            in_specs=[
                pl.BlockSpec((1, H, WC), lambda n: (n, 0, 0)),   # x (packed)
                full(w0rows.shape), full(b0row.shape),
                full(wsprows.shape), full(bsprow.shape),
                full(w1rows.shape), full(b1row.shape),
                full(w2rows.shape), full(b2row.shape),
                full(wsqrows.shape), full(bsqrow.shape),
                full(wfrows.shape), full(bfrow.shape),
            ],
            out_specs=pl.BlockSpec((1, H, WC), lambda n: (n, 0, 0)),
            scratch_shapes=[
                pltpu.VMEM((H + 4, WC + 4), f32),        # conv0 padded input
                pltpu.VMEM((H + 18, WC + 18), f32),      # conv_spatial padded input
                pltpu.VMEM((H + 6, 4 * SEG + 8), f32),   # conv_squeeze packed input
            ],
        ),
        compiler_params=pltpu.CompilerParams(
            dimension_semantics=("parallel",),
            vmem_limit_bytes=4 * 1024 * 1024,
        ),
        cost_estimate=cost,
    )(x_p, w0rows, b0row, wsprows, bsprow,
      w1rows, b1row, w2rows, b2row, wsqrows, bsqrow, wfrows, bfrow)

    # back to NCHW (contiguous reshape + one transpose)
    return jnp.transpose(out_p.reshape(N, H, C, W), (0, 2, 1, 3))


# ------------------------- pure-JAX reference --------------------------------
def _conv_ref(x, w, b, *, pad, dil=1, groups=1):
    out = jax.lax.conv_general_dilated(
        x, w, window_strides=(1, 1),
        padding=[(pad, pad), (pad, pad)],
        rhs_dilation=(dil, dil),
        dimension_numbers=("NCHW", "OIHW", "NCHW"),
        feature_group_count=groups,
        precision=jax.lax.Precision.HIGHEST)
    return out + b.reshape(1, -1, 1, 1)


def lsk_reference(x, w0, b0, wsp, bsp, w1, b1, w2, b2, wsq, bsq, wf, bf):
    dim = x.shape[1]
    attn1 = _conv_ref(x, w0, b0, pad=2, groups=dim)
    attn2 = _conv_ref(attn1, wsp, bsp, pad=9, dil=3, groups=dim)
    a1 = _conv_ref(attn1, w1, b1, pad=0)
    a2 = _conv_ref(attn2, w2, b2, pad=0)
    attn = jnp.concatenate([a1, a2], axis=1)
    avg = jnp.mean(attn, axis=1, keepdims=True)
    mx = jnp.max(attn, axis=1, keepdims=True)
    agg = jnp.concatenate([avg, mx], axis=1)
    sig = jax.nn.sigmoid(_conv_ref(agg, wsq, bsq, pad=3))
    attn = a1 * sig[:, 0:1] + a2 * sig[:, 1:2]
    attn = _conv_ref(attn, wf, bf, pad=0)
    return x * attn


if __name__ == "__main__":
    N, dim, H, W = 2, 8, 16, 16

    key = jax.random.PRNGKey(0)
    ks = jax.random.split(key, 13)
    x = jax.random.normal(ks[0], (N, dim, H, W), dtype=jnp.float32)
    w0 = jax.random.normal(ks[1], (dim, 1, 5, 5), dtype=jnp.float32) * 0.2
    b0 = jax.random.normal(ks[2], (dim,), dtype=jnp.float32) * 0.1
    wsp = jax.random.normal(ks[3], (dim, 1, 7, 7), dtype=jnp.float32) * 0.1
    bsp = jax.random.normal(ks[4], (dim,), dtype=jnp.float32) * 0.1
    w1 = jax.random.normal(ks[5], (dim // 2, dim, 1, 1), dtype=jnp.float32) * 0.2
    b1 = jax.random.normal(ks[6], (dim // 2,), dtype=jnp.float32) * 0.1
    w2 = jax.random.normal(ks[7], (dim // 2, dim, 1, 1), dtype=jnp.float32) * 0.2
    b2 = jax.random.normal(ks[8], (dim // 2,), dtype=jnp.float32) * 0.1
    wsq = jax.random.normal(ks[9], (2, 2, 7, 7), dtype=jnp.float32) * 0.1
    bsq = jax.random.normal(ks[10], (2,), dtype=jnp.float32) * 0.1
    wf = jax.random.normal(ks[11], (dim, dim // 2, 1, 1), dtype=jnp.float32) * 0.2
    bf = jax.random.normal(ks[12], (dim,), dtype=jnp.float32) * 0.1

    out = lsk_block(x, w0, b0, wsp, bsp, w1, b1, w2, b2, wsq, bsq, wf, bf)
    out = jax.block_until_ready(out)

    ref = lsk_reference(x, w0, b0, wsp, bsp, w1, b1, w2, b2, wsq, bsq, wf, bf)
    assert out.shape == (N, dim, H, W), out.shape
    max_err = float(jnp.max(jnp.abs(out - ref)))
    assert jnp.allclose(out, ref, atol=1e-3, rtol=1e-3), max_err

    print("KERNEL_OK")
</pallas_src>

<mosaic_0001>
module attributes {stable_mosaic.version = 11 : i64} {
  func.func @_lsk_kernel(%arg0: i32, %arg1: memref<1x16x128xf32, #tpu.memory_space<vmem>>, %arg2: memref<25x128xf32, #tpu.memory_space<vmem>>, %arg3: memref<1x128xf32, #tpu.memory_space<vmem>>, %arg4: memref<49x128xf32, #tpu.memory_space<vmem>>, %arg5: memref<1x128xf32, #tpu.memory_space<vmem>>, %arg6: memref<8x64xf32, #tpu.memory_space<vmem>>, %arg7: memref<1x64xf32, #tpu.memory_space<vmem>>, %arg8: memref<8x64xf32, #tpu.memory_space<vmem>>, %arg9: memref<1x64xf32, #tpu.memory_space<vmem>>, %arg10: memref<49x88xf32, #tpu.memory_space<vmem>>, %arg11: memref<1x88xf32, #tpu.memory_space<vmem>>, %arg12: memref<4x128xf32, #tpu.memory_space<vmem>>, %arg13: memref<1x128xf32, #tpu.memory_space<vmem>>, %arg14: memref<1x16x128xf32, #tpu.memory_space<vmem>>, %arg15: memref<20x132xf32, #tpu.memory_space<vmem>>, %arg16: memref<34x146xf32, #tpu.memory_space<vmem>>, %arg17: memref<22x96xf32, #tpu.memory_space<vmem>>) attributes {dimension_semantics = [#tpu.dimension_semantics<parallel>], iteration_bounds = array<i64: 2>, scalar_prefetch = 0 : i64, scratch_operands = 3 : i64, tpu.core_type = #tpu.core_type<tc>, window_params = [{transform_indices = @transform_0, window_bounds = array<i64: 1, 16, 128>}, {pipeline_mode = #tpu.pipeline_mode<synchronous>, transform_indices = @transform_1, window_bounds = array<i64: 25, 128>}, {pipeline_mode = #tpu.pipeline_mode<synchronous>, transform_indices = @transform_2, window_bounds = array<i64: 1, 128>}, {pipeline_mode = #tpu.pipeline_mode<synchronous>, transform_indices = @transform_3, window_bounds = array<i64: 49, 128>}, {pipeline_mode = #tpu.pipeline_mode<synchronous>, transform_indices = @transform_4, window_bounds = array<i64: 1, 128>}, {pipeline_mode = #tpu.pipeline_mode<synchronous>, transform_indices = @transform_5, window_bounds = array<i64: 8, 64>}, {pipeline_mode = #tpu.pipeline_mode<synchronous>, transform_indices = @transform_6, window_bounds = array<i64: 1, 64>}, {pipeline_mode = #tpu.pipeline_mode<synchronous>, transform_indices = @transform_7, window_bounds = array<i64: 8, 64>}, {pipeline_mode = #tpu.pipeline_mode<synchronous>, transform_indices = @transform_8, window_bounds = array<i64: 1, 64>}, {pipeline_mode = #tpu.pipeline_mode<synchronous>, transform_indices = @transform_9, window_bounds = array<i64: 49, 88>}, {pipeline_mode = #tpu.pipeline_mode<synchronous>, transform_indices = @transform_10, window_bounds = array<i64: 1, 88>}, {pipeline_mode = #tpu.pipeline_mode<synchronous>, transform_indices = @transform_11, window_bounds = array<i64: 4, 128>}, {pipeline_mode = #tpu.pipeline_mode<synchronous>, transform_indices = @transform_12, window_bounds = array<i64: 1, 128>}, {transform_indices = @transform_13, window_bounds = array<i64: 1, 16, 128>}]} {
    %cst = arith.constant 0.000000e+00 : f32
    %0 = vector.broadcast %cst : f32 to vector<2x132xf32>
    %c0 = arith.constant 0 : index
    %c0_0 = arith.constant 0 : index
    %1 = vector.load %arg15[%c0, %c0_0] : memref<20x132xf32, #tpu.memory_space<vmem>>, vector<2x132xf32>
    tpu.vector_store %arg15[%c0, %c0_0], %0 {strides = array<i32>} : memref<20x132xf32, #tpu.memory_space<vmem>>, vector<2x132xf32>,
    %cst_1 = arith.constant 0.000000e+00 : f32
    %2 = vector.broadcast %cst_1 : f32 to vector<2x132xf32>
    %c18 = arith.constant 18 : index
    %c0_2 = arith.constant 0 : index
    %3 = vector.load %arg15[%c18, %c0_2] : memref<20x132xf32, #tpu.memory_space<vmem>>, vector<2x132xf32>
    tpu.vector_store %arg15[%c18, %c0_2], %2 {strides = array<i32>} : memref<20x132xf32, #tpu.memory_space<vmem>>, vector<2x132xf32>,
    %cst_3 = arith.constant 0.000000e+00 : f32
    %4 = vector.broadcast %cst_3 : f32 to vector<20x2xf32>
    %c0_4 = arith.constant 0 : index
    %c0_5 = arith.constant 0 : index
    %5 = vector.load %arg15[%c0_4, %c0_5] : memref<20x132xf32, #tpu.memory_space<vmem>>, vector<20x2xf32>
    tpu.vector_store %arg15[%c0_4, %c0_5], %4 {strides = array<i32>} : memref<20x132xf32, #tpu.memory_space<vmem>>, vector<20x2xf32>,
    %cst_6 = arith.constant 0.000000e+00 : f32
    %6 = vector.broadcast %cst_6 : f32 to vector<20x2xf32>
    %c0_7 = arith.constant 0 : index
    %c130 = arith.constant 130 : index
    %7 = vector.load %arg15[%c0_7, %c130] : memref<20x132xf32, #tpu.memory_space<vmem>>, vector<20x2xf32>
    tpu.vector_store %arg15[%c0_7, %c130], %6 {strides = array<i32>} : memref<20x132xf32, #tpu.memory_space<vmem>>, vector<20x2xf32>,
    %cst_8 = arith.constant 0.000000e+00 : f32
    %8 = vector.broadcast %cst_8 : f32 to vector<9x146xf32>
    %c0_9 = arith.constant 0 : index
    %c0_10 = arith.constant 0 : index
    %9 = vector.load %arg16[%c0_9, %c0_10] : memref<34x146xf32, #tpu.memory_space<vmem>>, vector<9x146xf32>
    tpu.vector_store %arg16[%c0_9, %c0_10], %8 {strides = array<i32>} : memref<34x146xf32, #tpu.memory_space<vmem>>, vector<9x146xf32>,
    %cst_11 = arith.constant 0.000000e+00 : f32
    %10 = vector.broadcast %cst_11 : f32 to vector<9x146xf32>
    %c25 = arith.constant 25 : index
    %c0_12 = arith.constant 0 : index
    %11 = vector.load %arg16[%c25, %c0_12] : memref<34x146xf32, #tpu.memory_space<vmem>>, vector<9x146xf32>
    tpu.vector_store %arg16[%c25, %c0_12], %10 {strides = array<i32>} : memref<34x146xf32, #tpu.memory_space<vmem>>, vector<9x146xf32>,
    %cst_13 = arith.constant 0.000000e+00 : f32
    %12 = vector.broadcast %cst_13 : f32 to vector<34x9xf32>
    %c0_14 = arith.constant 0 : index
    %c0_15 = arith.constant 0 : index
    %13 = vector.load %arg16[%c0_14, %c0_15] : memref<34x146xf32, #tpu.memory_space<vmem>>, vector<34x9xf32>
    tpu.vector_store %arg16[%c0_14, %c0_15], %12 {strides = array<i32>} : memref<34x146xf32, #tpu.memory_space<vmem>>, vector<34x9xf32>,
    %cst_16 = arith.constant 0.000000e+00 : f32
    %14 = vector.broadcast %cst_16 : f32 to vector<34x9xf32>
    %c0_17 = arith.constant 0 : index
    %c137 = arith.constant 137 : index
    %15 = vector.load %arg16[%c0_17, %c137] : memref<34x146xf32, #tpu.memory_space<vmem>>, vector<34x9xf32>
    tpu.vector_store %arg16[%c0_17, %c137], %14 {strides = array<i32>} : memref<34x146xf32, #tpu.memory_space<vmem>>, vector<34x9xf32>,
    %c0_18 = arith.constant 0 : index
    %c0_19 = arith.constant 0 : index
    %c0_20 = arith.constant 0 : index
    %16 = vector.load %arg1[%c0_18, %c0_19, %c0_20] : memref<1x16x128xf32, #tpu.memory_space<vmem>>, vector<1x16x128xf32>
    %17 = vector.shape_cast %16 : vector<1x16x128xf32> to vector<16x128xf32>
    %c2 = arith.constant 2 : index
    %c2_21 = arith.constant 2 : index
    %18 = vector.load %arg15[%c2, %c2_21] : memref<20x132xf32, #tpu.memory_space<vmem>>, vector<16x128xf32>
    tpu.vector_store %arg15[%c2, %c2_21], %17 {strides = array<i32>} : memref<20x132xf32, #tpu.memory_space<vmem>>, vector<16x128xf32>,
    %cst_22 = arith.constant 0.000000e+00 : f32
    %19 = vector.broadcast %cst_22 : f32 to vector<16x128xf32>
    %c0_23 = arith.constant 0 : index
    %c0_24 = arith.constant 0 : index
    %20 = vector.load %arg3[%c0_23, %c0_24] : memref<1x128xf32, #tpu.memory_space<vmem>>, vector<1x128xf32>
    %21 = vector.shape_cast %20 : vector<1x128xf32> to vector<128xf32>
    %22 = vector.shape_cast %21 : vector<128xf32> to vector<1x128xf32>
    %23 = vector.broadcast %22 : vector<1x128xf32> to vector<16x128xf32>
    %24 = arith.addf %19, %23 : vector<16x128xf32>
    %c0_25 = arith.constant 0 : index
    %c0_26 = arith.constant 0 : index
    %25 = vector.load %arg2[%c0_25, %c0_26] : memref<25x128xf32, #tpu.memory_space<vmem>>, vector<1x128xf32>
    %26 = vector.shape_cast %25 : vector<1x128xf32> to vector<128xf32>
    %c0_27 = arith.constant 0 : index
    %c0_28 = arith.constant 0 : index
    %27 = vector.load %arg15[%c0_27, %c0_28] : memref<20x132xf32, #tpu.memory_space<vmem>>, vector<16x128xf32>
    %28 = vector.shape_cast %26 : vector<128xf32> to vector<1x128xf32>
    %29 = vector.broadcast %28 : vector<1x128xf32> to vector<16x128xf32>
    %30 = arith.mulf %29, %27 : vector<16x128xf32>
    %31 = arith.addf %24, %30 : vector<16x128xf32>
    %c1 = arith.constant 1 : index
    %c0_29 = arith.constant 0 : index
    %32 = vector.load %arg2[%c1, %c0_29] : memref<25x128xf32, #tpu.memory_space<vmem>>, vector<1x128xf32>
    %33 = vector.shape_cast %32 : vector<1x128xf32> to vector<128xf32>
    %c0_30 = arith.constant 0 : index
    %c1_31 = arith.constant 1 : index
    %34 = vector.load %arg15[%c0_30, %c1_31] : memref<20x132xf32, #tpu.memory_space<vmem>>, vector<16x128xf32>
    %35 = vector.shape_cast %33 : vector<128xf32> to vector<1x128xf32>
    %36 = vector.broadcast %35 : vector<1x128xf32> to vector<16x128xf32>
    %37 = arith.mulf %36, %34 : vector<16x128xf32>
    %38 = arith.addf %31, %37 : vector<16x128xf32>
    %c2_32 = arith.constant 2 : index
    %c0_33 = arith.constant 0 : index
    %39 = vector.load %arg2[%c2_32, %c0_33] : memref<25x128xf32, #tpu.memory_space<vmem>>, vector<1x128xf32>
    %40 = vector.shape_cast %39 : vector<1x128xf32> to vector<128xf32>
    %c0_34 = arith.constant 0 : index
    %c2_35 = arith.constant 2 : index
    %41 = vector.load %arg15[%c0_34, %c2_35] : memref<20x132xf32, #tpu.memory_space<vmem>>, vector<16x128xf32>
    %42 = vector.shape_cast %40 : vector<128xf32> to vector<1x128xf32>
    %43 = vector.broadcast %42 : vector<1x128xf32> to vector<16x128xf32>
    %44 = arith.mulf %43, %41 : vector<16x128xf32>
    %45 = arith.addf %38, %44 : vector<16x128xf32>
    %c3 = arith.constant 3 : index
    %c0_36 = arith.constant 0 : index
    %46 = vector.load %arg2[%c3, %c0_36] : memref<25x128xf32, #tpu.memory_space<vmem>>, vector<1x128xf32>
    %47 = vector.shape_cast %46 : vector<1x128xf32> to vector<128xf32>
    %c0_37 = arith.constant 0 : index
    %c3_38 = arith.constant 3 : index
    %48 = vector.load %arg15[%c0_37, %c3_38] : memref<20x132xf32, #tpu.memory_space<vmem>>, vector<16x128xf32>
    %49 = vector.shape_cast %47 : vector<128xf32> to vector<1x128xf32>
    %50 = vector.broadcast %49 : vector<1x128xf32> to vector<16x128xf32>
    %51 = arith.mulf %50, %48 : vector<16x128xf32>
    %52 = arith.addf %45, %51 : vector<16x128xf32>
    %c4 = arith.constant 4 : index
    %c0_39 = arith.constant 0 : index
    %53 = vector.load %arg2[%c4, %c0_39] : memref<25x128xf32, #tpu.memory_space<vmem>>, vector<1x128xf32>
    %54 = vector.shape_cast %53 : vector<1x128xf32> to vector<128xf32>
    %c0_40 = arith.constant 0 : index
    %c4_41 = arith.constant 4 : index
    %55 = vector.load %arg15[%c0_40, %c4_41] : memref<20x132xf32, #tpu.memory_space<vmem>>, vector<16x128xf32>
    %56 = vector.shape_cast %54 : vector<128xf32> to vector<1x128xf32>
    %57 = vector.broadcast %56 : vector<1x128xf32> to vector<16x128xf32>
    %58 = arith.mulf %57, %55 : vector<16x128xf32>
    %59 = arith.addf %52, %58 : vector<16x128xf32>
    %c5 = arith.constant 5 : index
    %c0_42 = arith.constant 0 : index
    %60 = vector.load %arg2[%c5, %c0_42] : memref<25x128xf32, #tpu.memory_space<vmem>>, vector<1x128xf32>
    %61 = vector.shape_cast %60 : vector<1x128xf32> to vector<128xf32>
    %c1_43 = arith.constant 1 : index
    %c0_44 = arith.constant 0 : index
    %62 = vector.load %arg15[%c1_43, %c0_44] : memref<20x132xf32, #tpu.memory_space<vmem>>, vector<16x128xf32>
    %63 = vector.shape_cast %61 : vector<128xf32> to vector<1x128xf32>
    %64 = vector.broadcast %63 : vector<1x128xf32> to vector<16x128xf32>
    %65 = arith.mulf %64, %62 : vector<16x128xf32>
    %66 = arith.addf %59, %65 : vector<16x128xf32>
    %c6 = arith.constant 6 : index
    %c0_45 = arith.constant 0 : index
    %67 = vector.load %arg2[%c6, %c0_45] : memref<25x128xf32, #tpu.memory_space<vmem>>, vector<1x128xf32>
    %68 = vector.shape_cast %67 : vector<1x128xf32> to vector<128xf32>
    %c1_46 = arith.constant 1 : index
    %c1_47 = arith.constant 1 : index
    %69 = vector.load %arg15[%c1_46, %c1_47] : memref<20x132xf32, #tpu.memory_space<vmem>>, vector<16x128xf32>
    %70 = vector.shape_cast %68 : vector<128xf32> to vector<1x128xf32>
    %71 = vector.broadcast %70 : vector<1x128xf32> to vector<16x128xf32>
    %72 = arith.mulf %71, %69 : vector<16x128xf32>
    %73 = arith.addf %66, %72 : vector<16x128xf32>
    %c7 = arith.constant 7 : index
    %c0_48 = arith.constant 0 : index
    %74 = vector.load %arg2[%c7, %c0_48] : memref<25x128xf32, #tpu.memory_space<vmem>>, vector<1x128xf32>
    %75 = vector.shape_cast %74 : vector<1x128xf32> to vector<128xf32>
    %c1_49 = arith.constant 1 : index
    %c2_50 = arith.constant 2 : index
    %76 = vector.load %arg15[%c1_49, %c2_50] : memref<20x132xf32, #tpu.memory_space<vmem>>, vector<16x128xf32>
    %77 = vector.shape_cast %75 : vector<128xf32> to vector<1x128xf32>
    %78 = vector.broadcast %77 : vector<1x128xf32> to vector<16x128xf32>
    %79 = arith.mulf %78, %76 : vector<16x128xf32>
    %80 = arith.addf %73, %79 : vector<16x128xf32>
    %c8 = arith.constant 8 : index
    %c0_51 = arith.constant 0 : index
    %81 = vector.load %arg2[%c8, %c0_51] : memref<25x128xf32, #tpu.memory_space<vmem>>, vector<1x128xf32>
    %82 = vector.shape_cast %81 : vector<1x128xf32> to vector<128xf32>
    %c1_52 = arith.constant 1 : index
    %c3_53 = arith.constant 3 : index
    %83 = vector.load %arg15[%c1_52, %c3_53] : memref<20x132xf32, #tpu.memory_space<vmem>>, vector<16x128xf32>
    %84 = vector.shape_cast %82 : vector<128xf32> to vector<1x128xf32>
    %85 = vector.broadcast %84 : vector<1x128xf32> to vector<16x128xf32>
    %86 = arith.mulf %85, %83 : vector<16x128xf32>
    %87 = arith.addf %80, %86 : vector<16x128xf32>
    %c9 = arith.constant 9 : index
    %c0_54 = arith.constant 0 : index
    %88 = vector.load %arg2[%c9, %c0_54] : memref<25x128xf32, #tpu.memory_space<vmem>>, vector<1x128xf32>
    %89 = vector.shape_cast %88 : vector<1x128xf32> to vector<128xf32>
    %c1_55 = arith.constant 1 : index
    %c4_56 = arith.constant 4 : index
    %90 = vector.load %arg15[%c1_55, %c4_56] : memref<20x132xf32, #tpu.memory_space<vmem>>, vector<16x128xf32>
    %91 = vector.shape_cast %89 : vector<128xf32> to vector<1x128xf32>
    %92 = vector.broadcast %91 : vector<1x128xf32> to vector<16x128xf32>
    %93 = arith.mulf %92, %90 : vector<16x128xf32>
    %94 = arith.addf %87, %93 : vector<16x128xf32>
    %c10 = arith.constant 10 : index
    %c0_57 = arith.constant 0 : index
    %95 = vector.load %arg2[%c10, %c0_57] : memref<25x128xf32, #tpu.memory_space<vmem>>, vector<1x128xf32>
    %96 = vector.shape_cast %95 : vector<1x128xf32> to vector<128xf32>
    %c2_58 = arith.constant 2 : index
    %c0_59 = arith.constant 0 : index
    %97 = vector.load %arg15[%c2_58, %c0_59] : memref<20x132xf32, #tpu.memory_space<vmem>>, vector<16x128xf32>
    %98 = vector.shape_cast %96 : vector<128xf32> to vector<1x128xf32>
    %99 = vector.broadcast %98 : vector<1x128xf32> to vector<16x128xf32>
    %100 = arith.mulf %99, %97 : vector<16x128xf32>
    %101 = arith.addf %94, %100 : vector<16x128xf32>
    %c11 = arith.constant 11 : index
    %c0_60 = arith.constant 0 : index
    %102 = vector.load %arg2[%c11, %c0_60] : memref<25x128xf32, #tpu.memory_space<vmem>>, vector<1x128xf32>
    %103 = vector.shape_cast %102 : vector<1x128xf32> to vector<128xf32>
    %c2_61 = arith.constant 2 : index
    %c1_62 = arith.constant 1 : index
    %104 = vector.load %arg15[%c2_61, %c1_62] : memref<20x132xf32, #tpu.memory_space<vmem>>, vector<16x128xf32>
    %105 = vector.shape_cast %103 : vector<128xf32> to vector<1x128xf32>
    %106 = vector.broadcast %105 : vector<1x128xf32> to vector<16x128xf32>
    %107 = arith.mulf %106, %104 : vector<16x128xf32>
    %108 = arith.addf %101, %107 : vector<16x128xf32>
    %c12 = arith.constant 12 : index
    %c0_63 = arith.constant 0 : index
    %109 = vector.load %arg2[%c12, %c0_63] : memref<25x128xf32, #tpu.memory_space<vmem>>, vector<1x128xf32>
    %110 = vector.shape_cast %109 : vector<1x128xf32> to vector<128xf32>
    %c2_64 = arith.constant 2 : index
    %c2_65 = arith.constant 2 : index
    %111 = vector.load %arg15[%c2_64, %c2_65] : memref<20x132xf32, #tpu.memory_space<vmem>>, vector<16x128xf32>
    %112 = vector.shape_cast %110 : vector<128xf32> to vector<1x128xf32>
    %113 = vector.broadcast %112 : vector<1x128xf32> to vector<16x128xf32>
    %114 = arith.mulf %113, %111 : vector<16x128xf32>
    %115 = arith.addf %108, %114 : vector<16x128xf32>
    %c13 = arith.constant 13 : index
    %c0_66 = arith.constant 0 : index
    %116 = vector.load %arg2[%c13, %c0_66] : memref<25x128xf32, #tpu.memory_space<vmem>>, vector<1x128xf32>
    %117 = vector.shape_cast %116 : vector<1x128xf32> to vector<128xf32>
    %c2_67 = arith.constant 2 : index
    %c3_68 = arith.constant 3 : index
    %118 = vector.load %arg15[%c2_67, %c3_68] : memref<20x132xf32, #tpu.memory_space<vmem>>, vector<16x128xf32>
    %119 = vector.shape_cast %117 : vector<128xf32> to vector<1x128xf32>
    %120 = vector.broadcast %119 : vector<1x128xf32> to vector<16x128xf32>
    %121 = arith.mulf %120, %118 : vector<16x128xf32>
    %122 = arith.addf %115, %121 : vector<16x128xf32>
    %c14 = arith.constant 14 : index
    %c0_69 = arith.constant 0 : index
    %123 = vector.load %arg2[%c14, %c0_69] : memref<25x128xf32, #tpu.memory_space<vmem>>, vector<1x128xf32>
    %124 = vector.shape_cast %123 : vector<1x128xf32> to vector<128xf32>
    %c2_70 = arith.constant 2 : index
    %c4_71 = arith.constant 4 : index
    %125 = vector.load %arg15[%c2_70, %c4_71] : memref<20x132xf32, #tpu.memory_space<vmem>>, vector<16x128xf32>
    %126 = vector.shape_cast %124 : vector<128xf32> to vector<1x128xf32>
    %127 = vector.broadcast %126 : vector<1x128xf32> to vector<16x128xf32>
    %128 = arith.mulf %127, %125 : vector<16x128xf32>
    %129 = arith.addf %122, %128 : vector<16x128xf32>
    %c15 = arith.constant 15 : index
    %c0_72 = arith.constant 0 : index
    %130 = vector.load %arg2[%c15, %c0_72] : memref<25x128xf32, #tpu.memory_space<vmem>>, vector<1x128xf32>
    %131 = vector.shape_cast %130 : vector<1x128xf32> to vector<128xf32>
    %c3_73 = arith.constant 3 : index
    %c0_74 = arith.constant 0 : index
    %132 = vector.load %arg15[%c3_73, %c0_74] : memref<20x132xf32, #tpu.memory_space<vmem>>, vector<16x128xf32>
    %133 = vector.shape_cast %131 : vector<128xf32> to vector<1x128xf32>
    %134 = vector.broadcast %133 : vector<1x128xf32> to vector<16x128xf32>
    %135 = arith.mulf %134, %132 : vector<16x128xf32>
    %136 = arith.addf %129, %135 : vector<16x128xf32>
    %c16 = arith.constant 16 : index
    %c0_75 = arith.constant 0 : index
    %137 = vector.load %arg2[%c16, %c0_75] : memref<25x128xf32, #tpu.memory_space<vmem>>, vector<1x128xf32>
    %138 = vector.shape_cast %137 : vector<1x128xf32> to vector<128xf32>
    %c3_76 = arith.constant 3 : index
    %c1_77 = arith.constant 1 : index
    %139 = vector.load %arg15[%c3_76, %c1_77] : memref<20x132xf32, #tpu.memory_space<vmem>>, vector<16x128xf32>
    %140 = vector.shape_cast %138 : vector<128xf32> to vector<1x128xf32>
    %141 = vector.broadcast %140 : vector<1x128xf32> to vector<16x128xf32>
    %142 = arith.mulf %141, %139 : vector<16x128xf32>
    %143 = arith.addf %136, %142 : vector<16x128xf32>
    %c17 = arith.constant 17 : index
    %c0_78 = arith.constant 0 : index
    %144 = vector.load %arg2[%c17, %c0_78] : memref<25x128xf32, #tpu.memory_space<vmem>>, vector<1x128xf32>
    %145 = vector.shape_cast %144 : vector<1x128xf32> to vector<128xf32>
    %c3_79 = arith.constant 3 : index
    %c2_80 = arith.constant 2 : index
    %146 = vector.load %arg15[%c3_79, %c2_80] : memref<20x132xf32, #tpu.memory_space<vmem>>, vector<16x128xf32>
    %147 = vector.shape_cast %145 : vector<128xf32> to vector<1x128xf32>
    %148 = vector.broadcast %147 : vector<1x128xf32> to vector<16x128xf32>
    %149 = arith.mulf %148, %146 : vector<16x128xf32>
    %150 = arith.addf %143, %149 : vector<16x128xf32>
    %c18_81 = arith.constant 18 : index
    %c0_82 = arith.constant 0 : index
    %151 = vector.load %arg2[%c18_81, %c0_82] : memref<25x128xf32, #tpu.memory_space<vmem>>, vector<1x128xf32>
    %152 = vector.shape_cast %151 : vector<1x128xf32> to vector<128xf32>
    %c3_83 = arith.constant 3 : index
    %c3_84 = arith.constant 3 : index
    %153 = vector.load %arg15[%c3_83, %c3_84] : memref<20x132xf32, #tpu.memory_space<vmem>>, vector<16x128xf32>
    %154 = vector.shape_cast %152 : vector<128xf32> to vector<1x128xf32>
    %155 = vector.broadcast %154 : vector<1x128xf32> to vector<16x128xf32>
    %156 = arith.mulf %155, %153 : vector<16x128xf32>
    %157 = arith.addf %150, %156 : vector<16x128xf32>
    %c19 = arith.constant 19 : index
    %c0_85 = arith.constant 0 : index
    %158 = vector.load %arg2[%c19, %c0_85] : memref<25x128xf32, #tpu.memory_space<vmem>>, vector<1x128xf32>
    %159 = vector.shape_cast %158 : vector<1x128xf32> to vector<128xf32>
    %c3_86 = arith.constant 3 : index
    %c4_87 = arith.constant 4 : index
    %160 = vector.load %arg15[%c3_86, %c4_87] : memref<20x132xf32, #tpu.memory_space<vmem>>, vector<16x128xf32>
    %161 = vector.shape_cast %159 : vector<128xf32> to vector<1x128xf32>
    %162 = vector.broadcast %161 : vector<1x128xf32> to vector<16x128xf32>
    %163 = arith.mulf %162, %160 : vector<16x128xf32>
    %164 = arith.addf %157, %163 : vector<16x128xf32>
    %c20 = arith.constant 20 : index
    %c0_88 = arith.constant 0 : index
    %165 = vector.load %arg2[%c20, %c0_88] : memref<25x128xf32, #tpu.memory_space<vmem>>, vector<1x128xf32>
    %166 = vector.shape_cast %165 : vector<1x128xf32> to vector<128xf32>
    %c4_89 = arith.constant 4 : index
    %c0_90 = arith.constant 0 : index
    %167 = vector.load %arg15[%c4_89, %c0_90] : memref<20x132xf32, #tpu.memory_space<vmem>>, vector<16x128xf32>
    %168 = vector.shape_cast %166 : vector<128xf32> to vector<1x128xf32>
    %169 = vector.broadcast %168 : vector<1x128xf32> to vector<16x128xf32>
    %170 = arith.mulf %169, %167 : vector<16x128xf32>
    %171 = arith.addf %164, %170 : vector<16x128xf32>
    %c21 = arith.constant 21 : index
    %c0_91 = arith.constant 0 : index
    %172 = vector.load %arg2[%c21, %c0_91] : memref<25x128xf32, #tpu.memory_space<vmem>>, vector<1x128xf32>
    %173 = vector.shape_cast %172 : vector<1x128xf32> to vector<128xf32>
    %c4_92 = arith.constant 4 : index
    %c1_93 = arith.constant 1 : index
    %174 = vector.load %arg15[%c4_92, %c1_93] : memref<20x132xf32, #tpu.memory_space<vmem>>, vector<16x128xf32>
    %175 = vector.shape_cast %173 : vector<128xf32> to vector<1x128xf32>
    %176 = vector.broadcast %175 : vector<1x128xf32> to vector<16x128xf32>
    %177 = arith.mulf %176, %174 : vector<16x128xf32>
    %178 = arith.addf %171, %177 : vector<16x128xf32>
    %c22 = arith.constant 22 : index
    %c0_94 = arith.constant 0 : index
    %179 = vector.load %arg2[%c22, %c0_94] : memref<25x128xf32, #tpu.memory_space<vmem>>, vector<1x128xf32>
    %180 = vector.shape_cast %179 : vector<1x128xf32> to vector<128xf32>
    %c4_95 = arith.constant 4 : index
    %c2_96 = arith.constant 2 : index
    %181 = vector.load %arg15[%c4_95, %c2_96] : memref<20x132xf32, #tpu.memory_space<vmem>>, vector<16x128xf32>
    %182 = vector.shape_cast %180 : vector<128xf32> to vector<1x128xf32>
    %183 = vector.broadcast %182 : vector<1x128xf32> to vector<16x128xf32>
    %184 = arith.mulf %183, %181 : vector<16x128xf32>
    %185 = arith.addf %178, %184 : vector<16x128xf32>
    %c23 = arith.constant 23 : index
    %c0_97 = arith.constant 0 : index
    %186 = vector.load %arg2[%c23, %c0_97] : memref<25x128xf32, #tpu.memory_space<vmem>>, vector<1x128xf32>
    %187 = vector.shape_cast %186 : vector<1x128xf32> to vector<128xf32>
    %c4_98 = arith.constant 4 : index
    %c3_99 = arith.constant 3 : index
    %188 = vector.load %arg15[%c4_98, %c3_99] : memref<20x132xf32, #tpu.memory_space<vmem>>, vector<16x128xf32>
    %189 = vector.shape_cast %187 : vector<128xf32> to vector<1x128xf32>
    %190 = vector.broadcast %189 : vector<1x128xf32> to vector<16x128xf32>
    %191 = arith.mulf %190, %188 : vector<16x128xf32>
    %192 = arith.addf %185, %191 : vector<16x128xf32>
    %c24 = arith.constant 24 : index
    %c0_100 = arith.constant 0 : index
    %193 = vector.load %arg2[%c24, %c0_100] : memref<25x128xf32, #tpu.memory_space<vmem>>, vector<1x128xf32>
    %194 = vector.shape_cast %193 : vector<1x128xf32> to vector<128xf32>
    %c4_101 = arith.constant 4 : index
    %c4_102 = arith.constant 4 : index
    %195 = vector.load %arg15[%c4_101, %c4_102] : memref<20x132xf32, #tpu.memory_space<vmem>>, vector<16x128xf32>
    %196 = vector.shape_cast %194 : vector<128xf32> to vector<1x128xf32>
    %197 = vector.broadcast %196 : vector<1x128xf32> to vector<16x128xf32>
    %198 = arith.mulf %197, %195 : vector<16x128xf32>
    %199 = arith.addf %192, %198 : vector<16x128xf32>
    %c9_103 = arith.constant 9 : index
    %c9_104 = arith.constant 9 : index
    %200 = vector.load %arg16[%c9_103, %c9_104] : memref<34x146xf32, #tpu.memory_space<vmem>>, vector<16x128xf32>
    tpu.vector_store %arg16[%c9_103, %c9_104], %199 {strides = array<i32>} : memref<34x146xf32, #tpu.memory_space<vmem>>, vector<16x128xf32>,
    %cst_105 = arith.constant 0.000000e+00 : f32
    %201 = vector.broadcast %cst_105 : f32 to vector<16x128xf32>
    %c0_106 = arith.constant 0 : index
    %c0_107 = arith.constant 0 : index
    %202 = vector.load %arg5[%c0_106, %c0_107] : memref<1x128xf32, #tpu.memory_space<vmem>>, vector<1x128xf32>
    %203 = vector.shape_cast %202 : vector<1x128xf32> to vector<128xf32>
    %204 = vector.shape_cast %203 : vector<128xf32> to vector<1x128xf32>
    %205 = vector.broadcast %204 : vector<1x128xf32> to vector<16x128xf32>
    %206 = arith.addf %201, %205 : vector<16x128xf32>
    %c0_108 = arith.constant 0 : index
    %c0_109 = arith.constant 0 : index
    %207 = vector.load %arg4[%c0_108, %c0_109] : memref<49x128xf32, #tpu.memory_space<vmem>>, vector<1x128xf32>
    %208 = vector.shape_cast %207 : vector<1x128xf32> to vector<128xf32>
    %c0_110 = arith.constant 0 : index
    %c0_111 = arith.constant 0 : index
    %209 = vector.load %arg16[%c0_110, %c0_111] : memref<34x146xf32, #tpu.memory_space<vmem>>, vector<16x128xf32>
    %210 = vector.shape_cast %208 : vector<128xf32> to vector<1x128xf32>
    %211 = vector.broadcast %210 : vector<1x128xf32> to vector<16x128xf32>
    %212 = arith.mulf %211, %209 : vector<16x128xf32>
    %213 = arith.addf %206, %212 : vector<16x128xf32>
    %c1_112 = arith.constant 1 : index
    %c0_113 = arith.constant 0 : index
    %214 = vector.load %arg4[%c1_112, %c0_113] : memref<49x128xf32, #tpu.memory_space<vmem>>, vector<1x128xf32>
    %215 = vector.shape_cast %214 : vector<1x128xf32> to vector<128xf32>
    %c0_114 = arith.constant 0 : index
    %c3_115 = arith.constant 3 : index
    %216 = vector.load %arg16[%c0_114, %c3_115] : memref<34x146xf32, #tpu.memory_space<vmem>>, vector<16x128xf32>
    %217 = vector.shape_cast %215 : vector<128xf32> to vector<1x128xf32>
    %218 = vector.broadcast %217 : vector<1x128xf32> to vector<16x128xf32>
    %219 = arith.mulf %218, %216 : vector<16x128xf32>
    %220 = arith.addf %213, %219 : vector<16x128xf32>
    %c2_116 = arith.constant 2 : index
    %c0_117 = arith.constant 0 : index
    %221 = vector.load %arg4[%c2_116, %c0_117] : memref<49x128xf32, #tpu.memory_space<vmem>>, vector<1x128xf32>
    %222 = vector.shape_cast %221 : vector<1x128xf32> to vector<128xf32>
    %c0_118 = arith.constant 0 : index
    %c6_119 = arith.constant 6 : index
    %223 = vector.load %arg16[%c0_118, %c6_119] : memref<34x146xf32, #tpu.memory_space<vmem>>, vector<16x128xf32>
    %224 = vector.shape_cast %222 : vector<128xf32> to vector<1x128xf32>
    %225 = vector.broadcast %224 : vector<1x128xf32> to vector<16x128xf32>
    %226 = arith.mulf %225, %223 : vector<16x128xf32>
    %227 = arith.addf %220, %226 : vector<16x128xf32>
    %c3_120 = arith.constant 3 : index
    %c0_121 = arith.constant 0 : index
    %228 = vector.load %arg4[%c3_120, %c0_121] : memref<49x128xf32, #tpu.memory_space<vmem>>, vector<1x128xf32>
    %229 = vector.shape_cast %228 : vector<1x128xf32> to vector<128xf32>
    %c0_122 = arith.constant 0 : index
    %c9_123 = arith.constant 9 : index
    %230 = vector.load %arg16[%c0_122, %c9_123] : memref<34x146xf32, #tpu.memory_space<vmem>>, vector<16x128xf32>
    %231 = vector.shape_cast %229 : vector<128xf32> to vector<1x128xf32>
    %232 = vector.broadcast %231 : vector<1x128xf32> to vector<16x128xf32>
    %233 = arith.mulf %232, %230 : vector<16x128xf32>
    %234 = arith.addf %227, %233 : vector<16x128xf32>
    %c4_124 = arith.constant 4 : index
    %c0_125 = arith.constant 0 : index
    %235 = vector.load %arg4[%c4_124, %c0_125] : memref<49x128xf32, #tpu.memory_space<vmem>>, vector<1x128xf32>
    %236 = vector.shape_cast %235 : vector<1x128xf32> to vector<128xf32>
    %c0_126 = arith.constant 0 : index
    %c12_127 = arith.constant 12 : index
    %237 = vector.load %arg16[%c0_126, %c12_127] : memref<34x146xf32, #tpu.memory_space<vmem>>, vector<16x128xf32>
    %238 = vector.shape_cast %236 : vector<128xf32> to vector<1x128xf32>
    %239 = vector.broadcast %238 : vector<1x128xf32> to vector<16x128xf32>
    %240 = arith.mulf %239, %237 : vector<16x128xf32>
    %241 = arith.addf %234, %240 : vector<16x128xf32>
    %c5_128 = arith.constant 5 : index
    %c0_129 = arith.constant 0 : index
    %242 = vector.load %arg4[%c5_128, %c0_129] : memref<49x128xf32, #tpu.memory_space<vmem>>, vector<1x128xf32>
    %243 = vector.shape_cast %242 : vector<1x128xf32> to vector<128xf32>
    %c0_130 = arith.constant 0 : index
    %c15_131 = arith.constant 15 : index
    %244 = vector.load %arg16[%c0_130, %c15_131] : memref<34x146xf32, #tpu.memory_space<vmem>>, vector<16x128xf32>
    %245 = vector.shape_cast %243 : vector<128xf32> to vector<1x128xf32>
    %246 = vector.broadcast %245 : vector<1x128xf32> to vector<16x128xf32>
    %247 = arith.mulf %246, %244 : vector<16x128xf32>
    %248 = arith.addf %241, %247 : vector<16x128xf32>
    %c6_132 = arith.constant 6 : index
    %c0_133 = arith.constant 0 : index
    %249 = vector.load %arg4[%c6_132, %c0_133] : memref<49x128xf32, #tpu.memory_space<vmem>>, vector<1x128xf32>
    %250 = vector.shape_cast %249 : vector<1x128xf32> to vector<128xf32>
    %c0_134 = arith.constant 0 : index
    %c18_135 = arith.constant 18 : index
    %251 = vector.load %arg16[%c0_134, %c18_135] : memref<34x146xf32, #tpu.memory_space<vmem>>, vector<16x128xf32>
    %252 = vector.shape_cast %250 : vector<128xf32> to vector<1x128xf32>
    %253 = vector.broadcast %252 : vector<1x128xf32> to vector<16x128xf32>
    %254 = arith.mulf %253, %251 : vector<16x128xf32>
    %255 = arith.addf %248, %254 : vector<16x128xf32>
    %c7_136 = arith.constant 7 : index
    %c0_137 = arith.constant 0 : index
    %256 = vector.load %arg4[%c7_136, %c0_137] : memref<49x128xf32, #tpu.memory_space<vmem>>, vector<1x128xf32>
    %257 = vector.shape_cast %256 : vector<1x128xf32> to vector<128xf32>
    %c3_138 = arith.constant 3 : index
    %c0_139 = arith.constant 0 : index
    %258 = vector.load %arg16[%c3_138, %c0_139] : memref<34x146xf32, #tpu.memory_space<vmem>>, vector<16x128xf32>
    %259 = vector.shape_cast %257 : vector<128xf32> to vector<1x128xf32>
    %260 = vector.broadcast %259 : vector<1x128xf32> to vector<16x128xf32>
    %261 = arith.mulf %260, %258 : vector<16x128xf32>
    %262 = arith.addf %255, %261 : vector<16x128xf32>
    %c8_140 = arith.constant 8 : index
    %c0_141 = arith.constant 0 : index
    %263 = vector.load %arg4[%c8_140, %c0_141] : memref<49x128xf32, #tpu.memory_space<vmem>>, vector<1x128xf32>
    %264 = vector.shape_cast %263 : vector<1x128xf32> to vector<128xf32>
    %c3_142 = arith.constant 3 : index
    %c3_143 = arith.constant 3 : index
    %265 = vector.load %arg16[%c3_142, %c3_143] : memref<34x146xf32, #tpu.memory_space<vmem>>, vector<16x128xf32>
    %266 = vector.shape_cast %264 : vector<128xf32> to vector<1x128xf32>
    %267 = vector.broadcast %266 : vector<1x128xf32> to vector<16x128xf32>
    %268 = arith.mulf %267, %265 : vector<16x128xf32>
    %269 = arith.addf %262, %268 : vector<16x128xf32>
    %c9_144 = arith.constant 9 : index
    %c0_145 = arith.constant 0 : index
    %270 = vector.load %arg4[%c9_144, %c0_145] : memref<49x128xf32, #tpu.memory_space<vmem>>, vector<1x128xf32>
    %271 = vector.shape_cast %270 : vector<1x128xf32> to vector<128xf32>
    %c3_146 = arith.constant 3 : index
    %c6_147 = arith.constant 6 : index
    %272 = vector.load %arg16[%c3_146, %c6_147] : memref<34x146xf32, #tpu.memory_space<vmem>>, vector<16x128xf32>
    %273 = vector.shape_cast %271 : vector<128xf32> to vector<1x128xf32>
    %274 = vector.broadcast %273 : vector<1x128xf32> to vector<16x128xf32>
    %275 = arith.mulf %274, %272 : vector<16x128xf32>
    %276 = arith.addf %269, %275 : vector<16x128xf32>
    %c10_148 = arith.constant 10 : index
    %c0_149 = arith.constant 0 : index
    %277 = vector.load %arg4[%c10_148, %c0_149] : memref<49x128xf32, #tpu.memory_space<vmem>>, vector<1x128xf32>
    %278 = vector.shape_cast %277 : vector<1x128xf32> to vector<128xf32>
    %c3_150 = arith.constant 3 : index
    %c9_151 = arith.constant 9 : index
    %279 = vector.load %arg16[%c3_150, %c9_151] : memref<34x146xf32, #tpu.memory_space<vmem>>, vector<16x128xf32>
    %280 = vector.shape_cast %278 : vector<128xf32> to vector<1x128xf32>
    %281 = vector.broadcast %280 : vector<1x128xf32> to vector<16x128xf32>
    %282 = arith.mulf %281, %279 : vector<16x128xf32>
    %283 = arith.addf %276, %282 : vector<16x128xf32>
    %c11_152 = arith.constant 11 : index
    %c0_153 = arith.constant 0 : index
    %284 = vector.load %arg4[%c11_152, %c0_153] : memref<49x128xf32, #tpu.memory_space<vmem>>, vector<1x128xf32>
    %285 = vector.shape_cast %284 : vector<1x128xf32> to vector<128xf32>
    %c3_154 = arith.constant 3 : index
    %c12_155 = arith.constant 12 : index
    %286 = vector.load %arg16[%c3_154, %c12_155] : memref<34x146xf32, #tpu.memory_space<vmem>>, vector<16x128xf32>
    %287 = vector.shape_cast %285 : vector<128xf32> to vector<1x128xf32>
    %288 = vector.broadcast %287 : vector<1x128xf32> to vector<16x128xf32>
    %289 = arith.mulf %288, %286 : vector<16x128xf32>
    %290 = arith.addf %283, %289 : vector<16x128xf32>
    %c12_156 = arith.constant 12 : index
    %c0_157 = arith.constant 0 : index
    %291 = vector.load %arg4[%c12_156, %c0_157] : memref<49x128xf32, #tpu.memory_space<vmem>>, vector<1x128xf32>
    %292 = vector.shape_cast %291 : vector<1x128xf32> to vector<128xf32>
    %c3_158 = arith.constant 3 : index
    %c15_159 = arith.constant 15 : index
    %293 = vector.load %arg16[%c3_158, %c15_159] : memref<34x146xf32, #tpu.memory_space<vmem>>, vector<16x128xf32>
    %294 = vector.shape_cast %292 : vector<128xf32> to vector<1x128xf32>
    %295 = vector.broadcast %294 : vector<1x128xf32> to vector<16x128xf32>
    %296 = arith.mulf %295, %293 : vector<16x128xf32>
    %297 = arith.addf %290, %296 : vector<16x128xf32>
    %c13_160 = arith.constant 13 : index
    %c0_161 = arith.constant 0 : index
    %298 = vector.load %arg4[%c13_160, %c0_161] : memref<49x128xf32, #tpu.memory_space<vmem>>, vector<1x128xf32>
    %299 = vector.shape_cast %298 : vector<1x128xf32> to vector<128xf32>
    %c3_162 = arith.constant 3 : index
    %c18_163 = arith.constant 18 : index
    %300 = vector.load %arg16[%c3_162, %c18_163] : memref<34x146xf32, #tpu.memory_space<vmem>>, vector<16x128xf32>
    %301 = vector.shape_cast %299 : vector<128xf32> to vector<1x128xf32>
    %302 = vector.broadcast %301 : vector<1x128xf32> to vector<16x128xf32>
    %303 = arith.mulf %302, %300 : vector<16x128xf32>
    %304 = arith.addf %297, %303 : vector<16x128xf32>
    %c14_164 = arith.constant 14 : index
    %c0_165 = arith.constant 0 : index
    %305 = vector.load %arg4[%c14_164, %c0_165] : memref<49x128xf32, #tpu.memory_space<vmem>>, vector<1x128xf32>
    %306 = vector.shape_cast %305 : vector<1x128xf32> to vector<128xf32>
    %c6_166 = arith.constant 6 : index
    %c0_167 = arith.constant 0 : index
    %307 = vector.load %arg16[%c6_166, %c0_167] : memref<34x146xf32, #tpu.memory_space<vmem>>, vector<16x128xf32>
    %308 = vector.shape_cast %306 : vector<128xf32> to vector<1x128xf32>
    %309 = vector.broadcast %308 : vector<1x128xf32> to vector<16x128xf32>
    %310 = arith.mulf %309, %307 : vector<16x128xf32>
    %311 = arith.addf %304, %310 : vector<16x128xf32>
    %c15_168 = arith.constant 15 : index
    %c0_169 = arith.constant 0 : index
    %312 = vector.load %arg4[%c15_168, %c0_169] : memref<49x128xf32, #tpu.memory_space<vmem>>, vector<1x128xf32>
    %313 = vector.shape_cast %312 : vector<1x128xf32> to vector<128xf32>
    %c6_170 = arith.constant 6 : index
    %c3_171 = arith.constant 3 : index
    %314 = vector.load %arg16[%c6_170, %c3_171] : memref<34x146xf32, #tpu.memory_space<vmem>>, vector<16x128xf32>
    %315 = vector.shape_cast %313 : vector<128xf32> to vector<1x128xf32>
    %316 = vector.broadcast %315 : vector<1x128xf32> to vector<16x128xf32>
    %317 = arith.mulf %316, %314 : vector<16x128xf32>
    %318 = arith.addf %311, %317 : vector<16x128xf32>
    %c16_172 = arith.constant 16 : index
    %c0_173 = arith.constant 0 : index
    %319 = vector.load %arg4[%c16_172, %c0_173] : memref<49x128xf32, #tpu.memory_space<vmem>>, vector<1x128xf32>
    %320 = vector.shape_cast %319 : vector<1x128xf32> to vector<128xf32>
    %c6_174 = arith.constant 6 : index
    %c6_175 = arith.constant 6 : index
    %321 = vector.load %arg16[%c6_174, %c6_175] : memref<34x146xf32, #tpu.memory_space<vmem>>, vector<16x128xf32>
    %322 = vector.shape_cast %320 : vector<128xf32> to vector<1x128xf32>
    %323 = vector.broadcast %322 : vector<1x128xf32> to vector<16x128xf32>
    %324 = arith.mulf %323, %321 : vector<16x128xf32>
    %325 = arith.addf %318, %324 : vector<16x128xf32>
    %c17_176 = arith.constant 17 : index
    %c0_177 = arith.constant 0 : index
    %326 = vector.load %arg4[%c17_176, %c0_177] : memref<49x128xf32, #tpu.memory_space<vmem>>, vector<1x128xf32>
    %327 = vector.shape_cast %326 : vector<1x128xf32> to vector<128xf32>
    %c6_178 = arith.constant 6 : index
    %c9_179 = arith.constant 9 : index
    %328 = vector.load %arg16[%c6_178, %c9_179] : memref<34x146xf32, #tpu.memory_space<vmem>>, vector<16x128xf32>
    %329 = vector.shape_cast %327 : vector<128xf32> to vector<1x128xf32>
    %330 = vector.broadcast %329 : vector<1x128xf32> to vector<16x128xf32>
    %331 = arith.mulf %330, %328 : vector<16x128xf32>
    %332 = arith.addf %325, %331 : vector<16x128xf32>
    %c18_180 = arith.constant 18 : index
    %c0_181 = arith.constant 0 : index
    %333 = vector.load %arg4[%c18_180, %c0_181] : memref<49x128xf32, #tpu.memory_space<vmem>>, vector<1x128xf32>
    %334 = vector.shape_cast %333 : vector<1x128xf32> to vector<128xf32>
    %c6_182 = arith.constant 6 : index
    %c12_183 = arith.constant 12 : index
    %335 = vector.load %arg16[%c6_182, %c12_183] : memref<34x146xf32, #tpu.memory_space<vmem>>, vector<16x128xf32>
    %336 = vector.shape_cast %334 : vector<128xf32> to vector<1x128xf32>
    %337 = vector.broadcast %336 : vector<1x128xf32> to vector<16x128xf32>
    %338 = arith.mulf %337, %335 : vector<16x128xf32>
    %339 = arith.addf %332, %338 : vector<16x128xf32>
    %c19_184 = arith.constant 19 : index
    %c0_185 = arith.constant 0 : index
    %340 = vector.load %arg4[%c19_184, %c0_185] : memref<49x128xf32, #tpu.memory_space<vmem>>, vector<1x128xf32>
    %341 = vector.shape_cast %340 : vector<1x128xf32> to vector<128xf32>
    %c6_186 = arith.constant 6 : index
    %c15_187 = arith.constant 15 : index
    %342 = vector.load %arg16[%c6_186, %c15_187] : memref<34x146xf32, #tpu.memory_space<vmem>>, vector<16x128xf32>
    %343 = vector.shape_cast %341 : vector<128xf32> to vector<1x128xf32>
    %344 = vector.broadcast %343 : vector<1x128xf32> to vector<16x128xf32>
    %345 = arith.mulf %344, %342 : vector<16x128xf32>
    %346 = arith.addf %339, %345 : vector<16x128xf32>
    %c20_188 = arith.constant 20 : index
    %c0_189 = arith.constant 0 : index
    %347 = vector.load %arg4[%c20_188, %c0_189] : memref<49x128xf32, #tpu.memory_space<vmem>>, vector<1x128xf32>
    %348 = vector.shape_cast %347 : vector<1x128xf32> to vector<128xf32>
    %c6_190 = arith.constant 6 : index
    %c18_191 = arith.constant 18 : index
    %349 = vector.load %arg16[%c6_190, %c18_191] : memref<34x146xf32, #tpu.memory_space<vmem>>, vector<16x128xf32>
    %350 = vector.shape_cast %348 : vector<128xf32> to vector<1x128xf32>
    %351 = vector.broadcast %350 : vector<1x128xf32> to vector<16x128xf32>
    %352 = arith.mulf %351, %349 : vector<16x128xf32>
    %353 = arith.addf %346, %352 : vector<16x128xf32>
    %c21_192 = arith.constant 21 : index
    %c0_193 = arith.constant 0 : index
    %354 = vector.load %arg4[%c21_192, %c0_193] : memref<49x128xf32, #tpu.memory_space<vmem>>, vector<1x128xf32>
    %355 = vector.shape_cast %354 : vector<1x128xf32> to vector<128xf32>
    %c9_194 = arith.constant 9 : index
    %c0_195 = arith.constant 0 : index
    %356 = vector.load %arg16[%c9_194, %c0_195] : memref<34x146xf32, #tpu.memory_space<vmem>>, vector<16x128xf32>
    %357 = vector.shape_cast %355 : vector<128xf32> to vector<1x128xf32>
    %358 = vector.broadcast %357 : vector<1x128xf32> to vector<16x128xf32>
    %359 = arith.mulf %358, %356 : vector<16x128xf32>
    %360 = arith.addf %353, %359 : vector<16x128xf32>
    %c22_196 = arith.constant 22 : index
    %c0_197 = arith.constant 0 : index
    %361 = vector.load %arg4[%c22_196, %c0_197] : memref<49x128xf32, #tpu.memory_space<vmem>>, vector<1x128xf32>
    %362 = vector.shape_cast %361 : vector<1x128xf32> to vector<128xf32>
    %c9_198 = arith.constant 9 : index
    %c3_199 = arith.constant 3 : index
    %363 = vector.load %arg16[%c9_198, %c3_199] : memref<34x146xf32, #tpu.memory_space<vmem>>, vector<16x128xf32>
    %364 = vector.shape_cast %362 : vector<128xf32> to vector<1x128xf32>
    %365 = vector.broadcast %364 : vector<1x128xf32> to vector<16x128xf32>
    %366 = arith.mulf %365, %363 : vector<16x128xf32>
    %367 = arith.addf %360, %366 : vector<16x128xf32>
    %c23_200 = arith.constant 23 : index
    %c0_201 = arith.constant 0 : index
    %368 = vector.load %arg4[%c23_200, %c0_201] : memref<49x128xf32, #tpu.memory_space<vmem>>, vector<1x128xf32>
    %369 = vector.shape_cast %368 : vector<1x128xf32> to vector<128xf32>
    %c9_202 = arith.constant 9 : index
    %c6_203 = arith.constant 6 : index
    %370 = vector.load %arg16[%c9_202, %c6_203] : memref<34x146xf32, #tpu.memory_space<vmem>>, vector<16x128xf32>
    %371 = vector.shape_cast %369 : vector<128xf32> to vector<1x128xf32>
    %372 = vector.broadcast %371 : vector<1x128xf32> to vector<16x128xf32>
    %373 = arith.mulf %372, %370 : vector<16x128xf32>
    %374 = arith.addf %367, %373 : vector<16x128xf32>
    %c24_204 = arith.constant 24 : index
    %c0_205 = arith.constant 0 : index
    %375 = vector.load %arg4[%c24_204, %c0_205] : memref<49x128xf32, #tpu.memory_space<vmem>>, vector<1x128xf32>
    %376 = vector.shape_cast %375 : vector<1x128xf32> to vector<128xf32>
    %c9_206 = arith.constant 9 : index
    %c9_207 = arith.constant 9 : index
    %377 = vector.load %arg16[%c9_206, %c9_207] : memref<34x146xf32, #tpu.memory_space<vmem>>, vector<16x128xf32>
    %378 = vector.shape_cast %376 : vector<128xf32> to vector<1x128xf32>
    %379 = vector.broadcast %378 : vector<1x128xf32> to vector<16x128xf32>
    %380 = arith.mulf %379, %377 : vector<16x128xf32>
    %381 = arith.addf %374, %380 : vector<16x128xf32>
    %c25_208 = arith.constant 25 : index
    %c0_209 = arith.constant 0 : index
    %382 = vector.load %arg4[%c25_208, %c0_209] : memref<49x128xf32, #tpu.memory_space<vmem>>, vector<1x128xf32>
    %383 = vector.shape_cast %382 : vector<1x128xf32> to vector<128xf32>
    %c9_210 = arith.constant 9 : index
    %c12_211 = arith.constant 12 : index
    %384 = vector.load %arg16[%c9_210, %c12_211] : memref<34x146xf32, #tpu.memory_space<vmem>>, vector<16x128xf32>
    %385 = vector.shape_cast %383 : vector<128xf32> to vector<1x128xf32>
    %386 = vector.broadcast %385 : vector<1x128xf32> to vector<16x128xf32>
    %387 = arith.mulf %386, %384 : vector<16x128xf32>
    %388 = arith.addf %381, %387 : vector<16x128xf32>
    %c26 = arith.constant 26 : index
    %c0_212 = arith.constant 0 : index
    %389 = vector.load %arg4[%c26, %c0_212] : memref<49x128xf32, #tpu.memory_space<vmem>>, vector<1x128xf32>
    %390 = vector.shape_cast %389 : vector<1x128xf32> to vector<128xf32>
    %c9_213 = arith.constant 9 : index
    %c15_214 = arith.constant 15 : index
    %391 = vector.load %arg16[%c9_213, %c15_214] : memref<34x146xf32, #tpu.memory_space<vmem>>, vector<16x128xf32>
    %392 = vector.shape_cast %390 : vector<128xf32> to vector<1x128xf32>
    %393 = vector.broadcast %392 : vector<1x128xf32> to vector<16x128xf32>
    %394 = arith.mulf %393, %391 : vector<16x128xf32>
    %395 = arith.addf %388, %394 : vector<16x128xf32>
    %c27 = arith.constant 27 : index
    %c0_215 = arith.constant 0 : index
    %396 = vector.load %arg4[%c27, %c0_215] : memref<49x128xf32, #tpu.memory_space<vmem>>, vector<1x128xf32>
    %397 = vector.shape_cast %396 : vector<1x128xf32> to vector<128xf32>
    %c9_216 = arith.constant 9 : index
    %c18_217 = arith.constant 18 : index
    %398 = vector.load %arg16[%c9_216, %c18_217] : memref<34x146xf32, #tpu.memory_space<vmem>>, vector<16x128xf32>
    %399 = vector.shape_cast %397 : vector<128xf32> to vector<1x128xf32>
    %400 = vector.broadcast %399 : vector<1x128xf32> to vector<16x128xf32>
    %401 = arith.mulf %400, %398 : vector<16x128xf32>
    %402 = arith.addf %395, %401 : vector<16x128xf32>
    %c28 = arith.constant 28 : index
    %c0_218 = arith.constant 0 : index
    %403 = vector.load %arg4[%c28, %c0_218] : memref<49x128xf32, #tpu.memory_space<vmem>>, vector<1x128xf32>
    %404 = vector.shape_cast %403 : vector<1x128xf32> to vector<128xf32>
    %c12_219 = arith.constant 12 : index
    %c0_220 = arith.constant 0 : index
    %405 = vector.load %arg16[%c12_219, %c0_220] : memref<34x146xf32, #tpu.memory_space<vmem>>, vector<16x128xf32>
    %406 = vector.shape_cast %404 : vector<128xf32> to vector<1x128xf32>
    %407 = vector.broadcast %406 : vector<1x128xf32> to vector<16x128xf32>
    %408 = arith.mulf %407, %405 : vector<16x128xf32>
    %409 = arith.addf %402, %408 : vector<16x128xf32>
    %c29 = arith.constant 29 : index
    %c0_221 = arith.constant 0 : index
    %410 = vector.load %arg4[%c29, %c0_221] : memref<49x128xf32, #tpu.memory_space<vmem>>, vector<1x128xf32>
    %411 = vector.shape_cast %410 : vector<1x128xf32> to vector<128xf32>
    %c12_222 = arith.constant 12 : index
    %c3_223 = arith.constant 3 : index
    %412 = vector.load %arg16[%c12_222, %c3_223] : memref<34x146xf32, #tpu.memory_space<vmem>>, vector<16x128xf32>
    %413 = vector.shape_cast %411 : vector<128xf32> to vector<1x128xf32>
    %414 = vector.broadcast %413 : vector<1x128xf32> to vector<16x128xf32>
    %415 = arith.mulf %414, %412 : vector<16x128xf32>
    %416 = arith.addf %409, %415 : vector<16x128xf32>
    %c30 = arith.constant 30 : index
    %c0_224 = arith.constant 0 : index
    %417 = vector.load %arg4[%c30, %c0_224] : memref<49x128xf32, #tpu.memory_space<vmem>>, vector<1x128xf32>
    %418 = vector.shape_cast %417 : vector<1x128xf32> to vector<128xf32>
    %c12_225 = arith.constant 12 : index
    %c6_226 = arith.constant 6 : index
    %419 = vector.load %arg16[%c12_225, %c6_226] : memref<34x146xf32, #tpu.memory_space<vmem>>, vector<16x128xf32>
    %420 = vector.shape_cast %418 : vector<128xf32> to vector<1x128xf32>
    %421 = vector.broadcast %420 : vector<1x128xf32> to vector<16x128xf32>
    %422 = arith.mulf %421, %419 : vector<16x128xf32>
    %423 = arith.addf %416, %422 : vector<16x128xf32>
    %c31 = arith.constant 31 : index
    %c0_227 = arith.constant 0 : index
    %424 = vector.load %arg4[%c31, %c0_227] : memref<49x128xf32, #tpu.memory_space<vmem>>, vector<1x128xf32>
    %425 = vector.shape_cast %424 : vector<1x128xf32> to vector<128xf32>
    %c12_228 = arith.constant 12 : index
    %c9_229 = arith.constant 9 : index
    %426 = vector.load %arg16[%c12_228, %c9_229] : memref<34x146xf32, #tpu.memory_space<vmem>>, vector<16x128xf32>
    %427 = vector.shape_cast %425 : vector<128xf32> to vector<1x128xf32>
    %428 = vector.broadcast %427 : vector<1x128xf32> to vector<16x128xf32>
    %429 = arith.mulf %428, %426 : vector<16x128xf32>
    %430 = arith.addf %423, %429 : vector<16x128xf32>
    %c32 = arith.constant 32 : index
    %c0_230 = arith.constant 0 : index
    %431 = vector.load %arg4[%c32, %c0_230] : memref<49x128xf32, #tpu.memory_space<vmem>>, vector<1x128xf32>
    %432 = vector.shape_cast %431 : vector<1x128xf32> to vector<128xf32>
    %c12_231 = arith.constant 12 : index
    %c12_232 = arith.constant 12 : index
    %433 = vector.load %arg16[%c12_231, %c12_232] : memref<34x146xf32, #tpu.memory_space<vmem>>, vector<16x128xf32>
    %434 = vector.shape_cast %432 : vector<128xf32> to vector<1x128xf32>
    %435 = vector.broadcast %434 : vector<1x128xf32> to vector<16x128xf32>
    %436 = arith.mulf %435, %433 : vector<16x128xf32>
    %437 = arith.addf %430, %436 : vector<16x128xf32>
    %c33 = arith.constant 33 : index
    %c0_233 = arith.constant 0 : index
    %438 = vector.load %arg4[%c33, %c0_233] : memref<49x128xf32, #tpu.memory_space<vmem>>, vector<1x128xf32>
    %439 = vector.shape_cast %438 : vector<1x128xf32> to vector<128xf32>
    %c12_234 = arith.constant 12 : index
    %c15_235 = arith.constant 15 : index
    %440 = vector.load %arg16[%c12_234, %c15_235] : memref<34x146xf32, #tpu.memory_space<vmem>>, vector<16x128xf32>
    %441 = vector.shape_cast %439 : vector<128xf32> to vector<1x128xf32>
    %442 = vector.broadcast %441 : vector<1x128xf32> to vector<16x128xf32>
    %443 = arith.mulf %442, %440 : vector<16x128xf32>
    %444 = arith.addf %437, %443 : vector<16x128xf32>
    %c34 = arith.constant 34 : index
    %c0_236 = arith.constant 0 : index
    %445 = vector.load %arg4[%c34, %c0_236] : memref<49x128xf32, #tpu.memory_space<vmem>>, vector<1x128xf32>
    %446 = vector.shape_cast %445 : vector<1x128xf32> to vector<128xf32>
    %c12_237 = arith.constant 12 : index
    %c18_238 = arith.constant 18 : index
    %447 = vector.load %arg16[%c12_237, %c18_238] : memref<34x146xf32, #tpu.memory_space<vmem>>, vector<16x128xf32>
    %448 = vector.shape_cast %446 : vector<128xf32> to vector<1x128xf32>
    %449 = vector.broadcast %448 : vector<1x128xf32> to vector<16x128xf32>
    %450 = arith.mulf %449, %447 : vector<16x128xf32>
    %451 = arith.addf %444, %450 : vector<16x128xf32>
    %c35 = arith.constant 35 : index
    %c0_239 = arith.constant 0 : index
    %452 = vector.load %arg4[%c35, %c0_239] : memref<49x128xf32, #tpu.memory_space<vmem>>, vector<1x128xf32>
    %453 = vector.shape_cast %452 : vector<1x128xf32> to vector<128xf32>
    %c15_240 = arith.constant 15 : index
    %c0_241 = arith.constant 0 : index
    %454 = vector.load %arg16[%c15_240, %c0_241] : memref<34x146xf32, #tpu.memory_space<vmem>>, vector<16x128xf32>
    %455 = vector.shape_cast %453 : vector<128xf32> to vector<1x128xf32>
    %456 = vector.broadcast %455 : vector<1x128xf32> to vector<16x128xf32>
    %457 = arith.mulf %456, %454 : vector<16x128xf32>
    %458 = arith.addf %451, %457 : vector<16x128xf32>
    %c36 = arith.constant 36 : index
    %c0_242 = arith.constant 0 : index
    %459 = vector.load %arg4[%c36, %c0_242] : memref<49x128xf32, #tpu.memory_space<vmem>>, vector<1x128xf32>
    %460 = vector.shape_cast %459 : vector<1x128xf32> to vector<128xf32>
    %c15_243 = arith.constant 15 : index
    %c3_244 = arith.constant 3 : index
    %461 = vector.load %arg16[%c15_243, %c3_244] : memref<34x146xf32, #tpu.memory_space<vmem>>, vector<16x128xf32>
    %462 = vector.shape_cast %460 : vector<128xf32> to vector<1x128xf32>
    %463 = vector.broadcast %462 : vector<1x128xf32> to vector<16x128xf32>
    %464 = arith.mulf %463, %461 : vector<16x128xf32>
    %465 = arith.addf %458, %464 : vector<16x128xf32>
    %c37 = arith.constant 37 : index
    %c0_245 = arith.constant 0 : index
    %466 = vector.load %arg4[%c37, %c0_245] : memref<49x128xf32, #tpu.memory_space<vmem>>, vector<1x128xf32>
    %467 = vector.shape_cast %466 : vector<1x128xf32> to vector<128xf32>
    %c15_246 = arith.constant 15 : index
    %c6_247 = arith.constant 6 : index
    %468 = vector.load %arg16[%c15_246, %c6_247] : memref<34x146xf32, #tpu.memory_space<vmem>>, vector<16x128xf32>
    %469 = vector.shape_cast %467 : vector<128xf32> to vector<1x128xf32>
    %470 = vector.broadcast %469 : vector<1x128xf32> to vector<16x128xf32>
    %471 = arith.mulf %470, %468 : vector<16x128xf32>
    %472 = arith.addf %465, %471 : vector<16x128xf32>
    %c38 = arith.constant 38 : index
    %c0_248 = arith.constant 0 : index
    %473 = vector.load %arg4[%c38, %c0_248] : memref<49x128xf32, #tpu.memory_space<vmem>>, vector<1x128xf32>
    %474 = vector.shape_cast %473 : vector<1x128xf32> to vector<128xf32>
    %c15_249 = arith.constant 15 : index
    %c9_250 = arith.constant 9 : index
    %475 = vector.load %arg16[%c15_249, %c9_250] : memref<34x146xf32, #tpu.memory_space<vmem>>, vector<16x128xf32>
    %476 = vector.shape_cast %474 : vector<128xf32> to vector<1x128xf32>
    %477 = vector.broadcast %476 : vector<1x128xf32> to vector<16x128xf32>
    %478 = arith.mulf %477, %475 : vector<16x128xf32>
    %479 = arith.addf %472, %478 : vector<16x128xf32>
    %c39 = arith.constant 39 : index
    %c0_251 = arith.constant 0 : index
    %480 = vector.load %arg4[%c39, %c0_251] : memref<49x128xf32, #tpu.memory_space<vmem>>, vector<1x128xf32>
    %481 = vector.shape_cast %480 : vector<1x128xf32> to vector<128xf32>
    %c15_252 = arith.constant 15 : index
    %c12_253 = arith.constant 12 : index
    %482 = vector.load %arg16[%c15_252, %c12_253] : memref<34x146xf32, #tpu.memory_space<vmem>>, vector<16x128xf32>
    %483 = vector.shape_cast %481 : vector<128xf32> to vector<1x128xf32>
    %484 = vector.broadcast %483 : vector<1x128xf32> to vector<16x128xf32>
    %485 = arith.mulf %484, %482 : vector<16x128xf32>
    %486 = arith.addf %479, %485 : vector<16x128xf32>
    %c40 = arith.constant 40 : index
    %c0_254 = arith.constant 0 : index
    %487 = vector.load %arg4[%c40, %c0_254] : memref<49x128xf32, #tpu.memory_space<vmem>>, vector<1x128xf32>
    %488 = vector.shape_cast %487 : vector<1x128xf32> to vector<128xf32>
    %c15_255 = arith.constant 15 : index
    %c15_256 = arith.constant 15 : index
    %489 = vector.load %arg16[%c15_255, %c15_256] : memref<34x146xf32, #tpu.memory_space<vmem>>, vector<16x128xf32>
    %490 = vector.shape_cast %488 : vector<128xf32> to vector<1x128xf32>
    %491 = vector.broadcast %490 : vector<1x128xf32> to vector<16x128xf32>
    %492 = arith.mulf %491, %489 : vector<16x128xf32>
    %493 = arith.addf %486, %492 : vector<16x128xf32>
    %c41 = arith.constant 41 : index
    %c0_257 = arith.constant 0 : index
    %494 = vector.load %arg4[%c41, %c0_257] : memref<49x128xf32, #tpu.memory_space<vmem>>, vector<1x128xf32>
    %495 = vector.shape_cast %494 : vector<1x128xf32> to vector<128xf32>
    %c15_258 = arith.constant 15 : index
    %c18_259 = arith.constant 18 : index
    %496 = vector.load %arg16[%c15_258, %c18_259] : memref<34x146xf32, #tpu.memory_space<vmem>>, vector<16x128xf32>
    %497 = vector.shape_cast %495 : vector<128xf32> to vector<1x128xf32>
    %498 = vector.broadcast %497 : vector<1x128xf32> to vector<16x128xf32>
    %499 = arith.mulf %498, %496 : vector<16x128xf32>
    %500 = arith.addf %493, %499 : vector<16x128xf32>
    %c42 = arith.constant 42 : index
    %c0_260 = arith.constant 0 : index
    %501 = vector.load %arg4[%c42, %c0_260] : memref<49x128xf32, #tpu.memory_space<vmem>>, vector<1x128xf32>
    %502 = vector.shape_cast %501 : vector<1x128xf32> to vector<128xf32>
    %c18_261 = arith.constant 18 : index
    %c0_262 = arith.constant 0 : index
    %503 = vector.load %arg16[%c18_261, %c0_262] : memref<34x146xf32, #tpu.memory_space<vmem>>, vector<16x128xf32>
    %504 = vector.shape_cast %502 : vector<128xf32> to vector<1x128xf32>
    %505 = vector.broadcast %504 : vector<1x128xf32> to vector<16x128xf32>
    %506 = arith.mulf %505, %503 : vector<16x128xf32>
    %507 = arith.addf %500, %506 : vector<16x128xf32>
    %c43 = arith.constant 43 : index
    %c0_263 = arith.constant 0 : index
    %508 = vector.load %arg4[%c43, %c0_263] : memref<49x128xf32, #tpu.memory_space<vmem>>, vector<1x128xf32>
    %509 = vector.shape_cast %508 : vector<1x128xf32> to vector<128xf32>
    %c18_264 = arith.constant 18 : index
    %c3_265 = arith.constant 3 : index
    %510 = vector.load %arg16[%c18_264, %c3_265] : memref<34x146xf32, #tpu.memory_space<vmem>>, vector<16x128xf32>
    %511 = vector.shape_cast %509 : vector<128xf32> to vector<1x128xf32>
    %512 = vector.broadcast %511 : vector<1x128xf32> to vector<16x128xf32>
    %513 = arith.mulf %512, %510 : vector<16x128xf32>
    %514 = arith.addf %507, %513 : vector<16x128xf32>
    %c44 = arith.constant 44 : index
    %c0_266 = arith.constant 0 : index
    %515 = vector.load %arg4[%c44, %c0_266] : memref<49x128xf32, #tpu.memory_space<vmem>>, vector<1x128xf32>
    %516 = vector.shape_cast %515 : vector<1x128xf32> to vector<128xf32>
    %c18_267 = arith.constant 18 : index
    %c6_268 = arith.constant 6 : index
    %517 = vector.load %arg16[%c18_267, %c6_268] : memref<34x146xf32, #tpu.memory_space<vmem>>, vector<16x128xf32>
    %518 = vector.shape_cast %516 : vector<128xf32> to vector<1x128xf32>
    %519 = vector.broadcast %518 : vector<1x128xf32> to vector<16x128xf32>
    %520 = arith.mulf %519, %517 : vector<16x128xf32>
    %521 = arith.addf %514, %520 : vector<16x128xf32>
    %c45 = arith.constant 45 : index
    %c0_269 = arith.constant 0 : index
    %522 = vector.load %arg4[%c45, %c0_269] : memref<49x128xf32, #tpu.memory_space<vmem>>, vector<1x128xf32>
    %523 = vector.shape_cast %522 : vector<1x128xf32> to vector<128xf32>
    %c18_270 = arith.constant 18 : index
    %c9_271 = arith.constant 9 : index
    %524 = vector.load %arg16[%c18_270, %c9_271] : memref<34x146xf32, #tpu.memory_space<vmem>>, vector<16x128xf32>
    %525 = vector.shape_cast %523 : vector<128xf32> to vector<1x128xf32>
    %526 = vector.broadcast %525 : vector<1x128xf32> to vector<16x128xf32>
    %527 = arith.mulf %526, %524 : vector<16x128xf32>
    %528 = arith.addf %521, %527 : vector<16x128xf32>
    %c46 = arith.constant 46 : index
    %c0_272 = arith.constant 0 : index
    %529 = vector.load %arg4[%c46, %c0_272] : memref<49x128xf32, #tpu.memory_space<vmem>>, vector<1x128xf32>
    %530 = vector.shape_cast %529 : vector<1x128xf32> to vector<128xf32>
    %c18_273 = arith.constant 18 : index
    %c12_274 = arith.constant 12 : index
    %531 = vector.load %arg16[%c18_273, %c12_274] : memref<34x146xf32, #tpu.memory_space<vmem>>, vector<16x128xf32>
    %532 = vector.shape_cast %530 : vector<128xf32> to vector<1x128xf32>
    %533 = vector.broadcast %532 : vector<1x128xf32> to vector<16x128xf32>
    %534 = arith.mulf %533, %531 : vector<16x128xf32>
    %535 = arith.addf %528, %534 : vector<16x128xf32>
    %c47 = arith.constant 47 : index
    %c0_275 = arith.constant 0 : index
    %536 = vector.load %arg4[%c47, %c0_275] : memref<49x128xf32, #tpu.memory_space<vmem>>, vector<1x128xf32>
    %537 = vector.shape_cast %536 : vector<1x128xf32> to vector<128xf32>
    %c18_276 = arith.constant 18 : index
    %c15_277 = arith.constant 15 : index
    %538 = vector.load %arg16[%c18_276, %c15_277] : memref<34x146xf32, #tpu.memory_space<vmem>>, vector<16x128xf32>
    %539 = vector.shape_cast %537 : vector<128xf32> to vector<1x128xf32>
    %540 = vector.broadcast %539 : vector<1x128xf32> to vector<16x128xf32>
    %541 = arith.mulf %540, %538 : vector<16x128xf32>
    %542 = arith.addf %535, %541 : vector<16x128xf32>
    %c48 = arith.constant 48 : index
    %c0_278 = arith.constant 0 : index
    %543 = vector.load %arg4[%c48, %c0_278] : memref<49x128xf32, #tpu.memory_space<vmem>>, vector<1x128xf32>
    %544 = vector.shape_cast %543 : vector<1x128xf32> to vector<128xf32>
    %c18_279 = arith.constant 18 : index
    %c18_280 = arith.constant 18 : index
    %545 = vector.load %arg16[%c18_279, %c18_280] : memref<34x146xf32, #tpu.memory_space<vmem>>, vector<16x128xf32>
    %546 = vector.shape_cast %544 : vector<128xf32> to vector<1x128xf32>
    %547 = vector.broadcast %546 : vector<1x128xf32> to vector<16x128xf32>
    %548 = arith.mulf %547, %545 : vector<16x128xf32>
    %549 = arith.addf %542, %548 : vector<16x128xf32>
    %cst_281 = arith.constant 0.000000e+00 : f32
    %550 = vector.broadcast %cst_281 : f32 to vector<16x64xf32>
    %c0_282 = arith.constant 0 : index
    %c0_283 = arith.constant 0 : index
    %551 = vector.load %arg7[%c0_282, %c0_283] : memref<1x64xf32, #tpu.memory_space<vmem>>, vector<1x64xf32>
    %552 = vector.shape_cast %551 : vector<1x64xf32> to vector<64xf32>
    %553 = vector.shape_cast %552 : vector<64xf32> to vector<1x64xf32>
    %554 = vector.broadcast %553 : vector<1x64xf32> to vector<16x64xf32>
    %555 = arith.addf %550, %554 : vector<16x64xf32>
    %cst_284 = arith.constant 0.000000e+00 : f32
    %556 = vector.broadcast %cst_284 : f32 to vector<16x64xf32>
    %c0_285 = arith.constant 0 : index
    %c0_286 = arith.constant 0 : index
    %557 = vector.load %arg9[%c0_285, %c0_286] : memref<1x64xf32, #tpu.memory_space<vmem>>, vector<1x64xf32>
    %558 = vector.shape_cast %557 : vector<1x64xf32> to vector<64xf32>
    %559 = vector.shape_cast %558 : vector<64xf32> to vector<1x64xf32>
    %560 = vector.broadcast %559 : vector<1x64xf32> to vector<16x64xf32>
    %561 = arith.addf %556, %560 : vector<16x64xf32>
    %c0_287 = arith.constant 0 : index
    %c0_288 = arith.constant 0 : index
    %562 = vector.load %arg6[%c0_287, %c0_288] : memref<8x64xf32, #tpu.memory_space<vmem>>, vector<1x64xf32>
    %563 = vector.shape_cast %562 : vector<1x64xf32> to vector<64xf32>
    %564 = vector.extract_strided_slice %199 {offsets = [0, 0], sizes = [16, 16], strides = [1, 1]} : vector<16x128xf32> to vector<16x16xf32>
    %565 = tpu.concatenate %564, %564, %564, %564 in 1 : vector<16x16xf32>, vector<16x16xf32>, vector<16x16xf32>, vector<16x16xf32> -> vector<16x64xf32>
    %566 = vector.shape_cast %563 : vector<64xf32> to vector<1x64xf32>
    %567 = vector.broadcast %566 : vector<1x64xf32> to vector<16x64xf32>
    %568 = arith.mulf %567, %565 : vector<16x64xf32>
    %569 = arith.addf %555, %568 : vector<16x64xf32>
    %c0_289 = arith.constant 0 : index
    %c0_290 = arith.constant 0 : index
    %570 = vector.load %arg8[%c0_289, %c0_290] : memref<8x64xf32, #tpu.memory_space<vmem>>, vector<1x64xf32>
    %571 = vector.shape_cast %570 : vector<1x64xf32> to vector<64xf32>
    %572 = vector.extract_strided_slice %549 {offsets = [0, 0], sizes = [16, 16], strides = [1, 1]} : vector<16x128xf32> to vector<16x16xf32>
    %573 = tpu.concatenate %572, %572, %572, %572 in 1 : vector<16x16xf32>, vector<16x16xf32>, vector<16x16xf32>, vector<16x16xf32> -> vector<16x64xf32>
    %574 = vector.shape_cast %571 : vector<64xf32> to vector<1x64xf32>
    %575 = vector.broadcast %574 : vector<1x64xf32> to vector<16x64xf32>
    %576 = arith.mulf %575, %573 : vector<16x64xf32>
    %577 = arith.addf %561, %576 : vector<16x64xf32>
    %c1_291 = arith.constant 1 : index
    %c0_292 = arith.constant 0 : index
    %578 = vector.load %arg6[%c1_291, %c0_292] : memref<8x64xf32, #tpu.memory_space<vmem>>, vector<1x64xf32>
    %579 = vector.shape_cast %578 : vector<1x64xf32> to vector<64xf32>
    %580 = vector.extract_strided_slice %199 {offsets = [0, 16], sizes = [16, 16], strides = [1, 1]} : vector<16x128xf32> to vector<16x16xf32>
    %581 = tpu.concatenate %580, %580, %580, %580 in 1 : vector<16x16xf32>, vector<16x16xf32>, vector<16x16xf32>, vector<16x16xf32> -> vector<16x64xf32>
    %582 = vector.shape_cast %579 : vector<64xf32> to vector<1x64xf32>
    %583 = vector.broadcast %582 : vector<1x64xf32> to vector<16x64xf32>
    %584 = arith.mulf %583, %581 : vector<16x64xf32>
    %585 = arith.addf %569, %584 : vector<16x64xf32>
    %c1_293 = arith.constant 1 : index
    %c0_294 = arith.constant 0 : index
    %586 = vector.load %arg8[%c1_293, %c0_294] : memref<8x64xf32, #tpu.memory_space<vmem>>, vector<1x64xf32>
    %587 = vector.shape_cast %586 : vector<1x64xf32> to vector<64xf32>
    %588 = vector.extract_strided_slice %549 {offsets = [0, 16], sizes = [16, 16], strides = [1, 1]} : vector<16x128xf32> to vector<16x16xf32>
    %589 = tpu.concatenate %588, %588, %588, %588 in 1 : vector<16x16xf32>, vector<16x16xf32>, vector<16x16xf32>, vector<16x16xf32> -> vector<16x64xf32>
    %590 = vector.shape_cast %587 : vector<64xf32> to vector<1x64xf32>
    %591 = vector.broadcast %590 : vector<1x64xf32> to vector<16x64xf32>
    %592 = arith.mulf %591, %589 : vector<16x64xf32>
    %593 = arith.addf %577, %592 : vector<16x64xf32>
    %c2_295 = arith.constant 2 : index
    %c0_296 = arith.constant 0 : index
    %594 = vector.load %arg6[%c2_295, %c0_296] : memref<8x64xf32, #tpu.memory_space<vmem>>, vector<1x64xf32>
    %595 = vector.shape_cast %594 : vector<1x64xf32> to vector<64xf32>
    %596 = vector.extract_strided_slice %199 {offsets = [0, 32], sizes = [16, 16], strides = [1, 1]} : vector<16x128xf32> to vector<16x16xf32>
    %597 = tpu.concatenate %596, %596, %596, %596 in 1 : vector<16x16xf32>, vector<16x16xf32>, vector<16x16xf32>, vector<16x16xf32> -> vector<16x64xf32>
    %598 = vector.shape_cast %595 : vector<64xf32> to vector<1x64xf32>
    %599 = vector.broadcast %598 : vector<1x64xf32> to vector<16x64xf32>
    %600 = arith.mulf %599, %597 : vector<16x64xf32>
    %601 = arith.addf %585, %600 : vector<16x64xf32>
    %c2_297 = arith.constant 2 : index
    %c0_298 = arith.constant 0 : index
    %602 = vector.load %arg8[%c2_297, %c0_298] : memref<8x64xf32, #tpu.memory_space<vmem>>, vector<1x64xf32>
    %603 = vector.shape_cast %602 : vector<1x64xf32> to vector<64xf32>
    %604 = vector.extract_strided_slice %549 {offsets = [0, 32], sizes = [16, 16], strides = [1, 1]} : vector<16x128xf32> to vector<16x16xf32>
    %605 = tpu.concatenate %604, %604, %604, %604 in 1 : vector<16x16xf32>, vector<16x16xf32>, vector<16x16xf32>, vector<16x16xf32> -> vector<16x64xf32>
    %606 = vector.shape_cast %603 : vector<64xf32> to vector<1x64xf32>
    %607 = vector.broadcast %606 : vector<1x64xf32> to vector<16x64xf32>
    %608 = arith.mulf %607, %605 : vector<16x64xf32>
    %609 = arith.addf %593, %608 : vector<16x64xf32>
    %c3_299 = arith.constant 3 : index
    %c0_300 = arith.constant 0 : index
    %610 = vector.load %arg6[%c3_299, %c0_300] : memref<8x64xf32, #tpu.memory_space<vmem>>, vector<1x64xf32>
    %611 = vector.shape_cast %610 : vector<1x64xf32> to vector<64xf32>
    %612 = vector.extract_strided_slice %199 {offsets = [0, 48], sizes = [16, 16], strides = [1, 1]} : vector<16x128xf32> to vector<16x16xf32>
    %613 = tpu.concatenate %612, %612, %612, %612 in 1 : vector<16x16xf32>, vector<16x16xf32>, vector<16x16xf32>, vector<16x16xf32> -> vector<16x64xf32>
    %614 = vector.shape_cast %611 : vector<64xf32> to vector<1x64xf32>
    %615 = vector.broadcast %614 : vector<1x64xf32> to vector<16x64xf32>
    %616 = arith.mulf %615, %613 : vector<16x64xf32>
    %617 = arith.addf %601, %616 : vector<16x64xf32>
    %c3_301 = arith.constant 3 : index
    %c0_302 = arith.constant 0 : index
    %618 = vector.load %arg8[%c3_301, %c0_302] : memref<8x64xf32, #tpu.memory_space<vmem>>, vector<1x64xf32>
    %619 = vector.shape_cast %618 : vector<1x64xf32> to vector<64xf32>
    %620 = vector.extract_strided_slice %549 {offsets = [0, 48], sizes = [16, 16], strides = [1, 1]} : vector<16x128xf32> to vector<16x16xf32>
    %621 = tpu.concatenate %620, %620, %620, %620 in 1 : vector<16x16xf32>, vector<16x16xf32>, vector<16x16xf32>, vector<16x16xf32> -> vector<16x64xf32>
    %622 = vector.shape_cast %619 : vector<64xf32> to vector<1x64xf32>
    %623 = vector.broadcast %622 : vector<1x64xf32> to vector<16x64xf32>
    %624 = arith.mulf %623, %621 : vector<16x64xf32>
    %625 = arith.addf %609, %624 : vector<16x64xf32>
    %c4_303 = arith.constant 4 : index
    %c0_304 = arith.constant 0 : index
    %626 = vector.load %arg6[%c4_303, %c0_304] : memref<8x64xf32, #tpu.memory_space<vmem>>, vector<1x64xf32>
    %627 = vector.shape_cast %626 : vector<1x64xf32> to vector<64xf32>
    %628 = vector.extract_strided_slice %199 {offsets = [0, 64], sizes = [16, 16], strides = [1, 1]} : vector<16x128xf32> to vector<16x16xf32>
    %629 = tpu.concatenate %628, %628, %628, %628 in 1 : vector<16x16xf32>, vector<16x16xf32>, vector<16x16xf32>, vector<16x16xf32> -> vector<16x64xf32>
    %630 = vector.shape_cast %627 : vector<64xf32> to vector<1x64xf32>
    %631 = vector.broadcast %630 : vector<1x64xf32> to vector<16x64xf32>
    %632 = arith.mulf %631, %629 : vector<16x64xf32>
    %633 = arith.addf %617, %632 : vector<16x64xf32>
    %c4_305 = arith.constant 4 : index
    %c0_306 = arith.constant 0 : index
    %634 = vector.load %arg8[%c4_305, %c0_306] : memref<8x64xf32, #tpu.memory_space<vmem>>, vector<1x64xf32>
    %635 = vector.shape_cast %634 : vector<1x64xf32> to vector<64xf32>
    %636 = vector.extract_strided_slice %549 {offsets = [0, 64], sizes = [16, 16], strides = [1, 1]} : vector<16x128xf32> to vector<16x16xf32>
    %637 = tpu.concatenate %636, %636, %636, %636 in 1 : vector<16x16xf32>, vector<16x16xf32>, vector<16x16xf32>, vector<16x16xf32> -> vector<16x64xf32>
    %638 = vector.shape_cast %635 : vector<64xf32> to vector<1x64xf32>
    %639 = vector.broadcast %638 : vector<1x64xf32> to vector<16x64xf32>
    %640 = arith.mulf %639, %637 : vector<16x64xf32>
    %641 = arith.addf %625, %640 : vector<16x64xf32>
    %c5_307 = arith.constant 5 : index
    %c0_308 = arith.constant 0 : index
    %642 = vector.load %arg6[%c5_307, %c0_308] : memref<8x64xf32, #tpu.memory_space<vmem>>, vector<1x64xf32>
    %643 = vector.shape_cast %642 : vector<1x64xf32> to vector<64xf32>
    %644 = vector.extract_strided_slice %199 {offsets = [0, 80], sizes = [16, 16], strides = [1, 1]} : vector<16x128xf32> to vector<16x16xf32>
    %645 = tpu.concatenate %644, %644, %644, %644 in 1 : vector<16x16xf32>, vector<16x16xf32>, vector<16x16xf32>, vector<16x16xf32> -> vector<16x64xf32>
    %646 = vector.shape_cast %643 : vector<64xf32> to vector<1x64xf32>
    %647 = vector.broadcast %646 : vector<1x64xf32> to vector<16x64xf32>
    %648 = arith.mulf %647, %645 : vector<16x64xf32>
    %649 = arith.addf %633, %648 : vector<16x64xf32>
    %c5_309 = arith.constant 5 : index
    %c0_310 = arith.constant 0 : index
    %650 = vector.load %arg8[%c5_309, %c0_310] : memref<8x64xf32, #tpu.memory_space<vmem>>, vector<1x64xf32>
    %651 = vector.shape_cast %650 : vector<1x64xf32> to vector<64xf32>
    %652 = vector.extract_strided_slice %549 {offsets = [0, 80], sizes = [16, 16], strides = [1, 1]} : vector<16x128xf32> to vector<16x16xf32>
    %653 = tpu.concatenate %652, %652, %652, %652 in 1 : vector<16x16xf32>, vector<16x16xf32>, vector<16x16xf32>, vector<16x16xf32> -> vector<16x64xf32>
    %654 = vector.shape_cast %651 : vector<64xf32> to vector<1x64xf32>
    %655 = vector.broadcast %654 : vector<1x64xf32> to vector<16x64xf32>
    %656 = arith.mulf %655, %653 : vector<16x64xf32>
    %657 = arith.addf %641, %656 : vector<16x64xf32>
    %c6_311 = arith.constant 6 : index
    %c0_312 = arith.constant 0 : index
    %658 = vector.load %arg6[%c6_311, %c0_312] : memref<8x64xf32, #tpu.memory_space<vmem>>, vector<1x64xf32>
    %659 = vector.shape_cast %658 : vector<1x64xf32> to vector<64xf32>
    %660 = vector.extract_strided_slice %199 {offsets = [0, 96], sizes = [16, 16], strides = [1, 1]} : vector<16x128xf32> to vector<16x16xf32>
    %661 = tpu.concatenate %660, %660, %660, %660 in 1 : vector<16x16xf32>, vector<16x16xf32>, vector<16x16xf32>, vector<16x16xf32> -> vector<16x64xf32>
    %662 = vector.shape_cast %659 : vector<64xf32> to vector<1x64xf32>
    %663 = vector.broadcast %662 : vector<1x64xf32> to vector<16x64xf32>
    %664 = arith.mulf %663, %661 : vector<16x64xf32>
    %665 = arith.addf %649, %664 : vector<16x64xf32>
    %c6_313 = arith.constant 6 : index
    %c0_314 = arith.constant 0 : index
    %666 = vector.load %arg8[%c6_313, %c0_314] : memref<8x64xf32, #tpu.memory_space<vmem>>, vector<1x64xf32>
    %667 = vector.shape_cast %666 : vector<1x64xf32> to vector<64xf32>
    %668 = vector.extract_strided_slice %549 {offsets = [0, 96], sizes = [16, 16], strides = [1, 1]} : vector<16x128xf32> to vector<16x16xf32>
    %669 = tpu.concatenate %668, %668, %668, %668 in 1 : vector<16x16xf32>, vector<16x16xf32>, vector<16x16xf32>, vector<16x16xf32> -> vector<16x64xf32>
    %670 = vector.shape_cast %667 : vector<64xf32> to vector<1x64xf32>
    %671 = vector.broadcast %670 : vector<1x64xf32> to vector<16x64xf32>
    %672 = arith.mulf %671, %669 : vector<16x64xf32>
    %673 = arith.addf %657, %672 : vector<16x64xf32>
    %c7_315 = arith.constant 7 : index
    %c0_316 = arith.constant 0 : index
    %674 = vector.load %arg6[%c7_315, %c0_316] : memref<8x64xf32, #tpu.memory_space<vmem>>, vector<1x64xf32>
    %675 = vector.shape_cast %674 : vector<1x64xf32> to vector<64xf32>
    %676 = vector.extract_strided_slice %199 {offsets = [0, 112], sizes = [16, 16], strides = [1, 1]} : vector<16x128xf32> to vector<16x16xf32>
    %677 = tpu.concatenate %676, %676, %676, %676 in 1 : vector<16x16xf32>, vector<16x16xf32>, vector<16x16xf32>, vector<16x16xf32> -> vector<16x64xf32>
    %678 = vector.shape_cast %675 : vector<64xf32> to vector<1x64xf32>
    %679 = vector.broadcast %678 : vector<1x64xf32> to vector<16x64xf32>
    %680 = arith.mulf %679, %677 : vector<16x64xf32>
    %681 = arith.addf %665, %680 : vector<16x64xf32>
    %c7_317 = arith.constant 7 : index
    %c0_318 = arith.constant 0 : index
    %682 = vector.load %arg8[%c7_317, %c0_318] : memref<8x64xf32, #tpu.memory_space<vmem>>, vector<1x64xf32>
    %683 = vector.shape_cast %682 : vector<1x64xf32> to vector<64xf32>
    %684 = vector.extract_strided_slice %549 {offsets = [0, 112], sizes = [16, 16], strides = [1, 1]} : vector<16x128xf32> to vector<16x16xf32>
    %685 = tpu.concatenate %684, %684, %684, %684 in 1 : vector<16x16xf32>, vector<16x16xf32>, vector<16x16xf32>, vector<16x16xf32> -> vector<16x64xf32>
    %686 = vector.shape_cast %683 : vector<64xf32> to vector<1x64xf32>
    %687 = vector.broadcast %686 : vector<1x64xf32> to vector<16x64xf32>
    %688 = arith.mulf %687, %685 : vector<16x64xf32>
    %689 = arith.addf %673, %688 : vector<16x64xf32>
    %690 = arith.addf %681, %689 : vector<16x64xf32>
    %691 = arith.maximumf %681, %689 : vector<16x64xf32>
    %692 = vector.extract_strided_slice %690 {offsets = [0, 0], sizes = [16, 16], strides = [1, 1]} : vector<16x64xf32> to vector<16x16xf32>
    %693 = vector.extract_strided_slice %691 {offsets = [0, 0], sizes = [16, 16], strides = [1, 1]} : vector<16x64xf32> to vector<16x16xf32>
    %694 = vector.extract_strided_slice %690 {offsets = [0, 16], sizes = [16, 16], strides = [1, 1]} : vector<16x64xf32> to vector<16x16xf32>
    %695 = arith.addf %692, %694 : vector<16x16xf32>
    %696 = vector.extract_strided_slice %691 {offsets = [0, 16], sizes = [16, 16], strides = [1, 1]} : vector<16x64xf32> to vector<16x16xf32>
    %697 = arith.maximumf %693, %696 : vector<16x16xf32>
    %698 = vector.extract_strided_slice %690 {offsets = [0, 32], sizes = [16, 16], strides = [1, 1]} : vector<16x64xf32> to vector<16x16xf32>
    %699 = arith.addf %695, %698 : vector<16x16xf32>
    %700 = vector.extract_strided_slice %691 {offsets = [0, 32], sizes = [16, 16], strides = [1, 1]} : vector<16x64xf32> to vector<16x16xf32>
    %701 = arith.maximumf %697, %700 : vector<16x16xf32>
    %702 = vector.extract_strided_slice %690 {offsets = [0, 48], sizes = [16, 16], strides = [1, 1]} : vector<16x64xf32> to vector<16x16xf32>
    %703 = arith.addf %699, %702 : vector<16x16xf32>
    %704 = vector.extract_strided_slice %691 {offsets = [0, 48], sizes = [16, 16], strides = [1, 1]} : vector<16x64xf32> to vector<16x16xf32>
    %705 = arith.maximumf %701, %704 : vector<16x16xf32>
    %cst_319 = arith.constant 1.250000e-01 : f32
    %706 = vector.broadcast %cst_319 : f32 to vector<16x16xf32>
    %707 = arith.mulf %703, %706 : vector<16x16xf32>
    %cst_320 = arith.constant 0.000000e+00 : f32
    %708 = vector.broadcast %cst_320 : f32 to vector<22x96xf32>
    %c0_321 = arith.constant 0 : index
    %c0_322 = arith.constant 0 : index
    %709 = vector.load %arg17[%c0_321, %c0_322] : memref<22x96xf32, #tpu.memory_space<vmem>>, vector<22x96xf32>
    tpu.vector_store %arg17[%c0_321, %c0_322], %708 {strides = array<i32>} : memref<22x96xf32, #tpu.memory_space<vmem>>, vector<22x96xf32>,
    %c3_323 = arith.constant 3 : index
    %c3_324 = arith.constant 3 : index
    %710 = vector.load %arg17[%c3_323, %c3_324] : memref<22x96xf32, #tpu.memory_space<vmem>>, vector<16x16xf32>
    tpu.vector_store %arg17[%c3_323, %c3_324], %707 {strides = array<i32>} : memref<22x96xf32, #tpu.memory_space<vmem>>, vector<16x16xf32>,
    %c3_325 = arith.constant 3 : index
    %c25_326 = arith.constant 25 : index
    %711 = vector.load %arg17[%c3_325, %c25_326] : memref<22x96xf32, #tpu.memory_space<vmem>>, vector<16x16xf32>
    tpu.vector_store %arg17[%c3_325, %c25_326], %705 {strides = array<i32>} : memref<22x96xf32, #tpu.memory_space<vmem>>, vector<16x16xf32>,
    %c3_327 = arith.constant 3 : index
    %c47_328 = arith.constant 47 : index
    %712 = vector.load %arg17[%c3_327, %c47_328] : memref<22x96xf32, #tpu.memory_space<vmem>>, vector<16x16xf32>
    tpu.vector_store %arg17[%c3_327, %c47_328], %707 {strides = array<i32>} : memref<22x96xf32, #tpu.memory_space<vmem>>, vector<16x16xf32>,
    %c3_329 = arith.constant 3 : index
    %c69 = arith.constant 69 : index
    %713 = vector.load %arg17[%c3_329, %c69] : memref<22x96xf32, #tpu.memory_space<vmem>>, vector<16x16xf32>
    tpu.vector_store %arg17[%c3_329, %c69], %705 {strides = array<i32>} : memref<22x96xf32, #tpu.memory_space<vmem>>, vector<16x16xf32>,
    %cst_330 = arith.constant 0.000000e+00 : f32
    %714 = vector.broadcast %cst_330 : f32 to vector<16x88xf32>
    %c0_331 = arith.constant 0 : index
    %c0_332 = arith.constant 0 : index
    %715 = vector.load %arg11[%c0_331, %c0_332] : memref<1x88xf32, #tpu.memory_space<vmem>>, vector<1x88xf32>
    %716 = vector.shape_cast %715 : vector<1x88xf32> to vector<88xf32>
    %717 = vector.shape_cast %716 : vector<88xf32> to vector<1x88xf32>
    %718 = vector.broadcast %717 : vector<1x88xf32> to vector<16x88xf32>
    %719 = arith.addf %714, %718 : vector<16x88xf32>
    %c0_333 = arith.constant 0 : index
    %c0_334 = arith.constant 0 : index
    %720 = vector.load %arg10[%c0_333, %c0_334] : memref<49x88xf32, #tpu.memory_space<vmem>>, vector<1x88xf32>
    %721 = vector.shape_cast %720 : vector<1x88xf32> to vector<88xf32>
    %c0_335 = arith.constant 0 : index
    %c0_336 = arith.constant 0 : index
    %722 = vector.load %arg17[%c0_335, %c0_336] : memref<22x96xf32, #tpu.memory_space<vmem>>, vector<16x88xf32>
    %723 = vector.shape_cast %721 : vector<88xf32> to vector<1x88xf32>
    %724 = vector.broadcast %723 : vector<1x88xf32> to vector<16x88xf32>
    %725 = arith.mulf %724, %722 : vector<16x88xf32>
    %726 = arith.addf %719, %725 : vector<16x88xf32>
    %c1_337 = arith.constant 1 : index
    %c0_338 = arith.constant 0 : index
    %727 = vector.load %arg10[%c1_337, %c0_338] : memref<49x88xf32, #tpu.memory_space<vmem>>, vector<1x88xf32>
    %728 = vector.shape_cast %727 : vector<1x88xf32> to vector<88xf32>
    %c0_339 = arith.constant 0 : index
    %c1_340 = arith.constant 1 : index
    %729 = vector.load %arg17[%c0_339, %c1_340] : memref<22x96xf32, #tpu.memory_space<vmem>>, vector<16x88xf32>
    %730 = vector.shape_cast %728 : vector<88xf32> to vector<1x88xf32>
    %731 = vector.broadcast %730 : vector<1x88xf32> to vector<16x88xf32>
    %732 = arith.mulf %731, %729 : vector<16x88xf32>
    %733 = arith.addf %726, %732 : vector<16x88xf32>
    %c2_341 = arith.constant 2 : index
    %c0_342 = arith.constant 0 : index
    %734 = vector.load %arg10[%c2_341, %c0_342] : memref<49x88xf32, #tpu.memory_space<vmem>>, vector<1x88xf32>
    %735 = vector.shape_cast %734 : vector<1x88xf32> to vector<88xf32>
    %c0_343 = arith.constant 0 : index
    %c2_344 = arith.constant 2 : index
    %736 = vector.load %arg17[%c0_343, %c2_344] : memref<22x96xf32, #tpu.memory_space<vmem>>, vector<16x88xf32>
    %737 = vector.shape_cast %735 : vector<88xf32> to vector<1x88xf32>
    %738 = vector.broadcast %737 : vector<1x88xf32> to vector<16x88xf32>
    %739 = arith.mulf %738, %736 : vector<16x88xf32>
    %740 = arith.addf %733, %739 : vector<16x88xf32>
    %c3_345 = arith.constant 3 : index
    %c0_346 = arith.constant 0 : index
    %741 = vector.load %arg10[%c3_345, %c0_346] : memref<49x88xf32, #tpu.memory_space<vmem>>, vector<1x88xf32>
    %742 = vector.shape_cast %741 : vector<1x88xf32> to vector<88xf32>
    %c0_347 = arith.constant 0 : index
    %c3_348 = arith.constant 3 : index
    %743 = vector.load %arg17[%c0_347, %c3_348] : memref<22x96xf32, #tpu.memory_space<vmem>>, vector<16x88xf32>
    %744 = vector.shape_cast %742 : vector<88xf32> to vector<1x88xf32>
    %745 = vector.broadcast %744 : vector<1x88xf32> to vector<16x88xf32>
    %746 = arith.mulf %745, %743 : vector<16x88xf32>
    %747 = arith.addf %740, %746 : vector<16x88xf32>
    %c4_349 = arith.constant 4 : index
    %c0_350 = arith.constant 0 : index
    %748 = vector.load %arg10[%c4_349, %c0_350] : memref<49x88xf32, #tpu.memory_space<vmem>>, vector<1x88xf32>
    %749 = vector.shape_cast %748 : vector<1x88xf32> to vector<88xf32>
    %c0_351 = arith.constant 0 : index
    %c4_352 = arith.constant 4 : index
    %750 = vector.load %arg17[%c0_351, %c4_352] : memref<22x96xf32, #tpu.memory_space<vmem>>, vector<16x88xf32>
    %751 = vector.shape_cast %749 : vector<88xf32> to vector<1x88xf32>
    %752 = vector.broadcast %751 : vector<1x88xf32> to vector<16x88xf32>
    %753 = arith.mulf %752, %750 : vector<16x88xf32>
    %754 = arith.addf %747, %753 : vector<16x88xf32>
    %c5_353 = arith.constant 5 : index
    %c0_354 = arith.constant 0 : index
    %755 = vector.load %arg10[%c5_353, %c0_354] : memref<49x88xf32, #tpu.memory_space<vmem>>, vector<1x88xf32>
    %756 = vector.shape_cast %755 : vector<1x88xf32> to vector<88xf32>
    %c0_355 = arith.constant 0 : index
    %c5_356 = arith.constant 5 : index
    %757 = vector.load %arg17[%c0_355, %c5_356] : memref<22x96xf32, #tpu.memory_space<vmem>>, vector<16x88xf32>
    %758 = vector.shape_cast %756 : vector<88xf32> to vector<1x88xf32>
    %759 = vector.broadcast %758 : vector<1x88xf32> to vector<16x88xf32>
    %760 = arith.mulf %759, %757 : vector<16x88xf32>
    %761 = arith.addf %754, %760 : vector<16x88xf32>
    %c6_357 = arith.constant 6 : index
    %c0_358 = arith.constant 0 : index
    %762 = vector.load %arg10[%c6_357, %c0_358] : memref<49x88xf32, #tpu.memory_space<vmem>>, vector<1x88xf32>
    %763 = vector.shape_cast %762 : vector<1x88xf32> to vector<88xf32>
    %c0_359 = arith.constant 0 : index
    %c6_360 = arith.constant 6 : index
    %764 = vector.load %arg17[%c0_359, %c6_360] : memref<22x96xf32, #tpu.memory_space<vmem>>, vector<16x88xf32>
    %765 = vector.shape_cast %763 : vector<88xf32> to vector<1x88xf32>
    %766 = vector.broadcast %765 : vector<1x88xf32> to vector<16x88xf32>
    %767 = arith.mulf %766, %764 : vector<16x88xf32>
    %768 = arith.addf %761, %767 : vector<16x88xf32>
    %c7_361 = arith.constant 7 : index
    %c0_362 = arith.constant 0 : index
    %769 = vector.load %arg10[%c7_361, %c0_362] : memref<49x88xf32, #tpu.memory_space<vmem>>, vector<1x88xf32>
    %770 = vector.shape_cast %769 : vector<1x88xf32> to vector<88xf32>
    %c1_363 = arith.constant 1 : index
    %c0_364 = arith.constant 0 : index
    %771 = vector.load %arg17[%c1_363, %c0_364] : memref<22x96xf32, #tpu.memory_space<vmem>>, vector<16x88xf32>
    %772 = vector.shape_cast %770 : vector<88xf32> to vector<1x88xf32>
    %773 = vector.broadcast %772 : vector<1x88xf32> to vector<16x88xf32>
    %774 = arith.mulf %773, %771 : vector<16x88xf32>
    %775 = arith.addf %768, %774 : vector<16x88xf32>
    %c8_365 = arith.constant 8 : index
    %c0_366 = arith.constant 0 : index
    %776 = vector.load %arg10[%c8_365, %c0_366] : memref<49x88xf32, #tpu.memory_space<vmem>>, vector<1x88xf32>
    %777 = vector.shape_cast %776 : vector<1x88xf32> to vector<88xf32>
    %c1_367 = arith.constant 1 : index
    %c1_368 = arith.constant 1 : index
    %778 = vector.load %arg17[%c1_367, %c1_368] : memref<22x96xf32, #tpu.memory_space<vmem>>, vector<16x88xf32>
    %779 = vector.shape_cast %777 : vector<88xf32> to vector<1x88xf32>
    %780 = vector.broadcast %779 : vector<1x88xf32> to vector<16x88xf32>
    %781 = arith.mulf %780, %778 : vector<16x88xf32>
    %782 = arith.addf %775, %781 : vector<16x88xf32>
    %c9_369 = arith.constant 9 : index
    %c0_370 = arith.constant 0 : index
    %783 = vector.load %arg10[%c9_369, %c0_370] : memref<49x88xf32, #tpu.memory_space<vmem>>, vector<1x88xf32>
    %784 = vector.shape_cast %783 : vector<1x88xf32> to vector<88xf32>
    %c1_371 = arith.constant 1 : index
    %c2_372 = arith.constant 2 : index
    %785 = vector.load %arg17[%c1_371, %c2_372] : memref<22x96xf32, #tpu.memory_space<vmem>>, vector<16x88xf32>
    %786 = vector.shape_cast %784 : vector<88xf32> to vector<1x88xf32>
    %787 = vector.broadcast %786 : vector<1x88xf32> to vector<16x88xf32>
    %788 = arith.mulf %787, %785 : vector<16x88xf32>
    %789 = arith.addf %782, %788 : vector<16x88xf32>
    %c10_373 = arith.constant 10 : index
    %c0_374 = arith.constant 0 : index
    %790 = vector.load %arg10[%c10_373, %c0_374] : memref<49x88xf32, #tpu.memory_space<vmem>>, vector<1x88xf32>
    %791 = vector.shape_cast %790 : vector<1x88xf32> to vector<88xf32>
    %c1_375 = arith.constant 1 : index
    %c3_376 = arith.constant 3 : index
    %792 = vector.load %arg17[%c1_375, %c3_376] : memref<22x96xf32, #tpu.memory_space<vmem>>, vector<16x88xf32>
    %793 = vector.shape_cast %791 : vector<88xf32> to vector<1x88xf32>
    %794 = vector.broadcast %793 : vector<1x88xf32> to vector<16x88xf32>
    %795 = arith.mulf %794, %792 : vector<16x88xf32>
    %796 = arith.addf %789, %795 : vector<16x88xf32>
    %c11_377 = arith.constant 11 : index
    %c0_378 = arith.constant 0 : index
    %797 = vector.load %arg10[%c11_377, %c0_378] : memref<49x88xf32, #tpu.memory_space<vmem>>, vector<1x88xf32>
    %798 = vector.shape_cast %797 : vector<1x88xf32> to vector<88xf32>
    %c1_379 = arith.constant 1 : index
    %c4_380 = arith.constant 4 : index
    %799 = vector.load %arg17[%c1_379, %c4_380] : memref<22x96xf32, #tpu.memory_space<vmem>>, vector<16x88xf32>
    %800 = vector.shape_cast %798 : vector<88xf32> to vector<1x88xf32>
    %801 = vector.broadcast %800 : vector<1x88xf32> to vector<16x88xf32>
    %802 = arith.mulf %801, %799 : vector<16x88xf32>
    %803 = arith.addf %796, %802 : vector<16x88xf32>
    %c12_381 = arith.constant 12 : index
    %c0_382 = arith.constant 0 : index
    %804 = vector.load %arg10[%c12_381, %c0_382] : memref<49x88xf32, #tpu.memory_space<vmem>>, vector<1x88xf32>
    %805 = vector.shape_cast %804 : vector<1x88xf32> to vector<88xf32>
    %c1_383 = arith.constant 1 : index
    %c5_384 = arith.constant 5 : index
    %806 = vector.load %arg17[%c1_383, %c5_384] : memref<22x96xf32, #tpu.memory_space<vmem>>, vector<16x88xf32>
    %807 = vector.shape_cast %805 : vector<88xf32> to vector<1x88xf32>
    %808 = vector.broadcast %807 : vector<1x88xf32> to vector<16x88xf32>
    %809 = arith.mulf %808, %806 : vector<16x88xf32>
    %810 = arith.addf %803, %809 : vector<16x88xf32>
    %c13_385 = arith.constant 13 : index
    %c0_386 = arith.constant 0 : index
    %811 = vector.load %arg10[%c13_385, %c0_386] : memref<49x88xf32, #tpu.memory_space<vmem>>, vector<1x88xf32>
    %812 = vector.shape_cast %811 : vector<1x88xf32> to vector<88xf32>
    %c1_387 = arith.constant 1 : index
    %c6_388 = arith.constant 6 : index
    %813 = vector.load %arg17[%c1_387, %c6_388] : memref<22x96xf32, #tpu.memory_space<vmem>>, vector<16x88xf32>
    %814 = vector.shape_cast %812 : vector<88xf32> to vector<1x88xf32>
    %815 = vector.broadcast %814 : vector<1x88xf32> to vector<16x88xf32>
    %816 = arith.mulf %815, %813 : vector<16x88xf32>
    %817 = arith.addf %810, %816 : vector<16x88xf32>
    %c14_389 = arith.constant 14 : index
    %c0_390 = arith.constant 0 : index
    %818 = vector.load %arg10[%c14_389, %c0_390] : memref<49x88xf32, #tpu.memory_space<vmem>>, vector<1x88xf32>
    %819 = vector.shape_cast %818 : vector<1x88xf32> to vector<88xf32>
    %c2_391 = arith.constant 2 : index
    %c0_392 = arith.constant 0 : index
    %820 = vector.load %arg17[%c2_391, %c0_392] : memref<22x96xf32, #tpu.memory_space<vmem>>, vector<16x88xf32>
    %821 = vector.shape_cast %819 : vector<88xf32> to vector<1x88xf32>
    %822 = vector.broadcast %821 : vector<1x88xf32> to vector<16x88xf32>
    %823 = arith.mulf %822, %820 : vector<16x88xf32>
    %824 = arith.addf %817, %823 : vector<16x88xf32>
    %c15_393 = arith.constant 15 : index
    %c0_394 = arith.constant 0 : index
    %825 = vector.load %arg10[%c15_393, %c0_394] : memref<49x88xf32, #tpu.memory_space<vmem>>, vector<1x88xf32>
    %826 = vector.shape_cast %825 : vector<1x88xf32> to vector<88xf32>
    %c2_395 = arith.constant 2 : index
    %c1_396 = arith.constant 1 : index
    %827 = vector.load %arg17[%c2_395, %c1_396] : memref<22x96xf32, #tpu.memory_space<vmem>>, vector<16x88xf32>
    %828 = vector.shape_cast %826 : vector<88xf32> to vector<1x88xf32>
    %829 = vector.broadcast %828 : vector<1x88xf32> to vector<16x88xf32>
    %830 = arith.mulf %829, %827 : vector<16x88xf32>
    %831 = arith.addf %824, %830 : vector<16x88xf32>
    %c16_397 = arith.constant 16 : index
    %c0_398 = arith.constant 0 : index
    %832 = vector.load %arg10[%c16_397, %c0_398] : memref<49x88xf32, #tpu.memory_space<vmem>>, vector<1x88xf32>
    %833 = vector.shape_cast %832 : vector<1x88xf32> to vector<88xf32>
    %c2_399 = arith.constant 2 : index
    %c2_400 = arith.constant 2 : index
    %834 = vector.load %arg17[%c2_399, %c2_400] : memref<22x96xf32, #tpu.memory_space<vmem>>, vector<16x88xf32>
    %835 = vector.shape_cast %833 : vector<88xf32> to vector<1x88xf32>
    %836 = vector.broadcast %835 : vector<1x88xf32> to vector<16x88xf32>
    %837 = arith.mulf %836, %834 : vector<16x88xf32>
    %838 = arith.addf %831, %837 : vector<16x88xf32>
    %c17_401 = arith.constant 17 : index
    %c0_402 = arith.constant 0 : index
    %839 = vector.load %arg10[%c17_401, %c0_402] : memref<49x88xf32, #tpu.memory_space<vmem>>, vector<1x88xf32>
    %840 = vector.shape_cast %839 : vector<1x88xf32> to vector<88xf32>
    %c2_403 = arith.constant 2 : index
    %c3_404 = arith.constant 3 : index
    %841 = vector.load %arg17[%c2_403, %c3_404] : memref<22x96xf32, #tpu.memory_space<vmem>>, vector<16x88xf32>
    %842 = vector.shape_cast %840 : vector<88xf32> to vector<1x88xf32>
    %843 = vector.broadcast %842 : vector<1x88xf32> to vector<16x88xf32>
    %844 = arith.mulf %843, %841 : vector<16x88xf32>
    %845 = arith.addf %838, %844 : vector<16x88xf32>
    %c18_405 = arith.constant 18 : index
    %c0_406 = arith.constant 0 : index
    %846 = vector.load %arg10[%c18_405, %c0_406] : memref<49x88xf32, #tpu.memory_space<vmem>>, vector<1x88xf32>
    %847 = vector.shape_cast %846 : vector<1x88xf32> to vector<88xf32>
    %c2_407 = arith.constant 2 : index
    %c4_408 = arith.constant 4 : index
    %848 = vector.load %arg17[%c2_407, %c4_408] : memref<22x96xf32, #tpu.memory_space<vmem>>, vector<16x88xf32>
    %849 = vector.shape_cast %847 : vector<88xf32> to vector<1x88xf32>
    %850 = vector.broadcast %849 : vector<1x88xf32> to vector<16x88xf32>
    %851 = arith.mulf %850, %848 : vector<16x88xf32>
    %852 = arith.addf %845, %851 : vector<16x88xf32>
    %c19_409 = arith.constant 19 : index
    %c0_410 = arith.constant 0 : index
    %853 = vector.load %arg10[%c19_409, %c0_410] : memref<49x88xf32, #tpu.memory_space<vmem>>, vector<1x88xf32>
    %854 = vector.shape_cast %853 : vector<1x88xf32> to vector<88xf32>
    %c2_411 = arith.constant 2 : index
    %c5_412 = arith.constant 5 : index
    %855 = vector.load %arg17[%c2_411, %c5_412] : memref<22x96xf32, #tpu.memory_space<vmem>>, vector<16x88xf32>
    %856 = vector.shape_cast %854 : vector<88xf32> to vector<1x88xf32>
    %857 = vector.broadcast %856 : vector<1x88xf32> to vector<16x88xf32>
    %858 = arith.mulf %857, %855 : vector<16x88xf32>
    %859 = arith.addf %852, %858 : vector<16x88xf32>
    %c20_413 = arith.constant 20 : index
    %c0_414 = arith.constant 0 : index
    %860 = vector.load %arg10[%c20_413, %c0_414] : memref<49x88xf32, #tpu.memory_space<vmem>>, vector<1x88xf32>
    %861 = vector.shape_cast %860 : vector<1x88xf32> to vector<88xf32>
    %c2_415 = arith.constant 2 : index
    %c6_416 = arith.constant 6 : index
    %862 = vector.load %arg17[%c2_415, %c6_416] : memref<22x96xf32, #tpu.memory_space<vmem>>, vector<16x88xf32>
    %863 = vector.shape_cast %861 : vector<88xf32> to vector<1x88xf32>
    %864 = vector.broadcast %863 : vector<1x88xf32> to vector<16x88xf32>
    %865 = arith.mulf %864, %862 : vector<16x88xf32>
    %866 = arith.addf %859, %865 : vector<16x88xf32>
    %c21_417 = arith.constant 21 : index
    %c0_418 = arith.constant 0 : index
    %867 = vector.load %arg10[%c21_417, %c0_418] : memref<49x88xf32, #tpu.memory_space<vmem>>, vector<1x88xf32>
    %868 = vector.shape_cast %867 : vector<1x88xf32> to vector<88xf32>
    %c3_419 = arith.constant 3 : index
    %c0_420 = arith.constant 0 : index
    %869 = vector.load %arg17[%c3_419, %c0_420] : memref<22x96xf32, #tpu.memory_space<vmem>>, vector<16x88xf32>
    %870 = vector.shape_cast %868 : vector<88xf32> to vector<1x88xf32>
    %871 = vector.broadcast %870 : vector<1x88xf32> to vector<16x88xf32>
    %872 = arith.mulf %871, %869 : vector<16x88xf32>
    %873 = arith.addf %866, %872 : vector<16x88xf32>
    %c22_421 = arith.constant 22 : index
    %c0_422 = arith.constant 0 : index
    %874 = vector.load %arg10[%c22_421, %c0_422] : memref<49x88xf32, #tpu.memory_space<vmem>>, vector<1x88xf32>
    %875 = vector.shape_cast %874 : vector<1x88xf32> to vector<88xf32>
    %c3_423 = arith.constant 3 : index
    %c1_424 = arith.constant 1 : index
    %876 = vector.load %arg17[%c3_423, %c1_424] : memref<22x96xf32, #tpu.memory_space<vmem>>, vector<16x88xf32>
    %877 = vector.shape_cast %875 : vector<88xf32> to vector<1x88xf32>
    %878 = vector.broadcast %877 : vector<1x88xf32> to vector<16x88xf32>
    %879 = arith.mulf %878, %876 : vector<16x88xf32>
    %880 = arith.addf %873, %879 : vector<16x88xf32>
    %c23_425 = arith.constant 23 : index
    %c0_426 = arith.constant 0 : index
    %881 = vector.load %arg10[%c23_425, %c0_426] : memref<49x88xf32, #tpu.memory_space<vmem>>, vector<1x88xf32>
    %882 = vector.shape_cast %881 : vector<1x88xf32> to vector<88xf32>
    %c3_427 = arith.constant 3 : index
    %c2_428 = arith.constant 2 : index
    %883 = vector.load %arg17[%c3_427, %c2_428] : memref<22x96xf32, #tpu.memory_space<vmem>>, vector<16x88xf32>
    %884 = vector.shape_cast %882 : vector<88xf32> to vector<1x88xf32>
    %885 = vector.broadcast %884 : vector<1x88xf32> to vector<16x88xf32>
    %886 = arith.mulf %885, %883 : vector<16x88xf32>
    %887 = arith.addf %880, %886 : vector<16x88xf32>
    %c24_429 = arith.constant 24 : index
    %c0_430 = arith.constant 0 : index
    %888 = vector.load %arg10[%c24_429, %c0_430] : memref<49x88xf32, #tpu.memory_space<vmem>>, vector<1x88xf32>
    %889 = vector.shape_cast %888 : vector<1x88xf32> to vector<88xf32>
    %c3_431 = arith.constant 3 : index
    %c3_432 = arith.constant 3 : index
    %890 = vector.load %arg17[%c3_431, %c3_432] : memref<22x96xf32, #tpu.memory_space<vmem>>, vector<16x88xf32>
    %891 = vector.shape_cast %889 : vector<88xf32> to vector<1x88xf32>
    %892 = vector.broadcast %891 : vector<1x88xf32> to vector<16x88xf32>
    %893 = arith.mulf %892, %890 : vector<16x88xf32>
    %894 = arith.addf %887, %893 : vector<16x88xf32>
    %c25_433 = arith.constant 25 : index
    %c0_434 = arith.constant 0 : index
    %895 = vector.load %arg10[%c25_433, %c0_434] : memref<49x88xf32, #tpu.memory_space<vmem>>, vector<1x88xf32>
    %896 = vector.shape_cast %895 : vector<1x88xf32> to vector<88xf32>
    %c3_435 = arith.constant 3 : index
    %c4_436 = arith.constant 4 : index
    %897 = vector.load %arg17[%c3_435, %c4_436] : memref<22x96xf32, #tpu.memory_space<vmem>>, vector<16x88xf32>
    %898 = vector.shape_cast %896 : vector<88xf32> to vector<1x88xf32>
    %899 = vector.broadcast %898 : vector<1x88xf32> to vector<16x88xf32>
    %900 = arith.mulf %899, %897 : vector<16x88xf32>
    %901 = arith.addf %894, %900 : vector<16x88xf32>
    %c26_437 = arith.constant 26 : index
    %c0_438 = arith.constant 0 : index
    %902 = vector.load %arg10[%c26_437, %c0_438] : memref<49x88xf32, #tpu.memory_space<vmem>>, vector<1x88xf32>
    %903 = vector.shape_cast %902 : vector<1x88xf32> to vector<88xf32>
    %c3_439 = arith.constant 3 : index
    %c5_440 = arith.constant 5 : index
    %904 = vector.load %arg17[%c3_439, %c5_440] : memref<22x96xf32, #tpu.memory_space<vmem>>, vector<16x88xf32>
    %905 = vector.shape_cast %903 : vector<88xf32> to vector<1x88xf32>
    %906 = vector.broadcast %905 : vector<1x88xf32> to vector<16x88xf32>
    %907 = arith.mulf %906, %904 : vector<16x88xf32>
    %908 = arith.addf %901, %907 : vector<16x88xf32>
    %c27_441 = arith.constant 27 : index
    %c0_442 = arith.constant 0 : index
    %909 = vector.load %arg10[%c27_441, %c0_442] : memref<49x88xf32, #tpu.memory_space<vmem>>, vector<1x88xf32>
    %910 = vector.shape_cast %909 : vector<1x88xf32> to vector<88xf32>
    %c3_443 = arith.constant 3 : index
    %c6_444 = arith.constant 6 : index
    %911 = vector.load %arg17[%c3_443, %c6_444] : memref<22x96xf32, #tpu.memory_space<vmem>>, vector<16x88xf32>
    %912 = vector.shape_cast %910 : vector<88xf32> to vector<1x88xf32>
    %913 = vector.broadcast %912 : vector<1x88xf32> to vector<16x88xf32>
    %914 = arith.mulf %913, %911 : vector<16x88xf32>
    %915 = arith.addf %908, %914 : vector<16x88xf32>
    %c28_445 = arith.constant 28 : index
    %c0_446 = arith.constant 0 : index
    %916 = vector.load %arg10[%c28_445, %c0_446] : memref<49x88xf32, #tpu.memory_space<vmem>>, vector<1x88xf32>
    %917 = vector.shape_cast %916 : vector<1x88xf32> to vector<88xf32>
    %c4_447 = arith.constant 4 : index
    %c0_448 = arith.constant 0 : index
    %918 = vector.load %arg17[%c4_447, %c0_448] : memref<22x96xf32, #tpu.memory_space<vmem>>, vector<16x88xf32>
    %919 = vector.shape_cast %917 : vector<88xf32> to vector<1x88xf32>
    %920 = vector.broadcast %919 : vector<1x88xf32> to vector<16x88xf32>
    %921 = arith.mulf %920, %918 : vector<16x88xf32>
    %922 = arith.addf %915, %921 : vector<16x88xf32>
    %c29_449 = arith.constant 29 : index
    %c0_450 = arith.constant 0 : index
    %923 = vector.load %arg10[%c29_449, %c0_450] : memref<49x88xf32, #tpu.memory_space<vmem>>, vector<1x88xf32>
    %924 = vector.shape_cast %923 : vector<1x88xf32> to vector<88xf32>
    %c4_451 = arith.constant 4 : index
    %c1_452 = arith.constant 1 : index
    %925 = vector.load %arg17[%c4_451, %c1_452] : memref<22x96xf32, #tpu.memory_space<vmem>>, vector<16x88xf32>
    %926 = vector.shape_cast %924 : vector<88xf32> to vector<1x88xf32>
    %927 = vector.broadcast %926 : vector<1x88xf32> to vector<16x88xf32>
    %928 = arith.mulf %927, %925 : vector<16x88xf32>
    %929 = arith.addf %922, %928 : vector<16x88xf32>
    %c30_453 = arith.constant 30 : index
    %c0_454 = arith.constant 0 : index
    %930 = vector.load %arg10[%c30_453, %c0_454] : memref<49x88xf32, #tpu.memory_space<vmem>>, vector<1x88xf32>
    %931 = vector.shape_cast %930 : vector<1x88xf32> to vector<88xf32>
    %c4_455 = arith.constant 4 : index
    %c2_456 = arith.constant 2 : index
    %932 = vector.load %arg17[%c4_455, %c2_456] : memref<22x96xf32, #tpu.memory_space<vmem>>, vector<16x88xf32>
    %933 = vector.shape_cast %931 : vector<88xf32> to vector<1x88xf32>
    %934 = vector.broadcast %933 : vector<1x88xf32> to vector<16x88xf32>
    %935 = arith.mulf %934, %932 : vector<16x88xf32>
    %936 = arith.addf %929, %935 : vector<16x88xf32>
    %c31_457 = arith.constant 31 : index
    %c0_458 = arith.constant 0 : index
    %937 = vector.load %arg10[%c31_457, %c0_458] : memref<49x88xf32, #tpu.memory_space<vmem>>, vector<1x88xf32>
    %938 = vector.shape_cast %937 : vector<1x88xf32> to vector<88xf32>
    %c4_459 = arith.constant 4 : index
    %c3_460 = arith.constant 3 : index
    %939 = vector.load %arg17[%c4_459, %c3_460] : memref<22x96xf32, #tpu.memory_space<vmem>>, vector<16x88xf32>
    %940 = vector.shape_cast %938 : vector<88xf32> to vector<1x88xf32>
    %941 = vector.broadcast %940 : vector<1x88xf32> to vector<16x88xf32>
    %942 = arith.mulf %941, %939 : vector<16x88xf32>
    %943 = arith.addf %936, %942 : vector<16x88xf32>
    %c32_461 = arith.constant 32 : index
    %c0_462 = arith.constant 0 : index
    %944 = vector.load %arg10[%c32_461, %c0_462] : memref<49x88xf32, #tpu.memory_space<vmem>>, vector<1x88xf32>
    %945 = vector.shape_cast %944 : vector<1x88xf32> to vector<88xf32>
    %c4_463 = arith.constant 4 : index
    %c4_464 = arith.constant 4 : index
    %946 = vector.load %arg17[%c4_463, %c4_464] : memref<22x96xf32, #tpu.memory_space<vmem>>, vector<16x88xf32>
    %947 = vector.shape_cast %945 : vector<88xf32> to vector<1x88xf32>
    %948 = vector.broadcast %947 : vector<1x88xf32> to vector<16x88xf32>
    %949 = arith.mulf %948, %946 : vector<16x88xf32>
    %950 = arith.addf %943, %949 : vector<16x88xf32>
    %c33_465 = arith.constant 33 : index
    %c0_466 = arith.constant 0 : index
    %951 = vector.load %arg10[%c33_465, %c0_466] : memref<49x88xf32, #tpu.memory_space<vmem>>, vector<1x88xf32>
    %952 = vector.shape_cast %951 : vector<1x88xf32> to vector<88xf32>
    %c4_467 = arith.constant 4 : index
    %c5_468 = arith.constant 5 : index
    %953 = vector.load %arg17[%c4_467, %c5_468] : memref<22x96xf32, #tpu.memory_space<vmem>>, vector<16x88xf32>
    %954 = vector.shape_cast %952 : vector<88xf32> to vector<1x88xf32>
    %955 = vector.broadcast %954 : vector<1x88xf32> to vector<16x88xf32>
    %956 = arith.mulf %955, %953 : vector<16x88xf32>
    %957 = arith.addf %950, %956 : vector<16x88xf32>
    %c34_469 = arith.constant 34 : index
    %c0_470 = arith.constant 0 : index
    %958 = vector.load %arg10[%c34_469, %c0_470] : memref<49x88xf32, #tpu.memory_space<vmem>>, vector<1x88xf32>
    %959 = vector.shape_cast %958 : vector<1x88xf32> to vector<88xf32>
    %c4_471 = arith.constant 4 : index
    %c6_472 = arith.constant 6 : index
    %960 = vector.load %arg17[%c4_471, %c6_472] : memref<22x96xf32, #tpu.memory_space<vmem>>, vector<16x88xf32>
    %961 = vector.shape_cast %959 : vector<88xf32> to vector<1x88xf32>
    %962 = vector.broadcast %961 : vector<1x88xf32> to vector<16x88xf32>
    %963 = arith.mulf %962, %960 : vector<16x88xf32>
    %964 = arith.addf %957, %963 : vector<16x88xf32>
    %c35_473 = arith.constant 35 : index
    %c0_474 = arith.constant 0 : index
    %965 = vector.load %arg10[%c35_473, %c0_474] : memref<49x88xf32, #tpu.memory_space<vmem>>, vector<1x88xf32>
    %966 = vector.shape_cast %965 : vector<1x88xf32> to vector<88xf32>
    %c5_475 = arith.constant 5 : index
    %c0_476 = arith.constant 0 : index
    %967 = vector.load %arg17[%c5_475, %c0_476] : memref<22x96xf32, #tpu.memory_space<vmem>>, vector<16x88xf32>
    %968 = vector.shape_cast %966 : vector<88xf32> to vector<1x88xf32>
    %969 = vector.broadcast %968 : vector<1x88xf32> to vector<16x88xf32>
    %970 = arith.mulf %969, %967 : vector<16x88xf32>
    %971 = arith.addf %964, %970 : vector<16x88xf32>
    %c36_477 = arith.constant 36 : index
    %c0_478 = arith.constant 0 : index
    %972 = vector.load %arg10[%c36_477, %c0_478] : memref<49x88xf32, #tpu.memory_space<vmem>>, vector<1x88xf32>
    %973 = vector.shape_cast %972 : vector<1x88xf32> to vector<88xf32>
    %c5_479 = arith.constant 5 : index
    %c1_480 = arith.constant 1 : index
    %974 = vector.load %arg17[%c5_479, %c1_480] : memref<22x96xf32, #tpu.memory_space<vmem>>, vector<16x88xf32>
    %975 = vector.shape_cast %973 : vector<88xf32> to vector<1x88xf32>
    %976 = vector.broadcast %975 : vector<1x88xf32> to vector<16x88xf32>
    %977 = arith.mulf %976, %974 : vector<16x88xf32>
    %978 = arith.addf %971, %977 : vector<16x88xf32>
    %c37_481 = arith.constant 37 : index
    %c0_482 = arith.constant 0 : index
    %979 = vector.load %arg10[%c37_481, %c0_482] : memref<49x88xf32, #tpu.memory_space<vmem>>, vector<1x88xf32>
    %980 = vector.shape_cast %979 : vector<1x88xf32> to vector<88xf32>
    %c5_483 = arith.constant 5 : index
    %c2_484 = arith.constant 2 : index
    %981 = vector.load %arg17[%c5_483, %c2_484] : memref<22x96xf32, #tpu.memory_space<vmem>>, vector<16x88xf32>
    %982 = vector.shape_cast %980 : vector<88xf32> to vector<1x88xf32>
    %983 = vector.broadcast %982 : vector<1x88xf32> to vector<16x88xf32>
    %984 = arith.mulf %983, %981 : vector<16x88xf32>
    %985 = arith.addf %978, %984 : vector<16x88xf32>
    %c38_485 = arith.constant 38 : index
    %c0_486 = arith.constant 0 : index
    %986 = vector.load %arg10[%c38_485, %c0_486] : memref<49x88xf32, #tpu.memory_space<vmem>>, vector<1x88xf32>
    %987 = vector.shape_cast %986 : vector<1x88xf32> to vector<88xf32>
    %c5_487 = arith.constant 5 : index
    %c3_488 = arith.constant 3 : index
    %988 = vector.load %arg17[%c5_487, %c3_488] : memref<22x96xf32, #tpu.memory_space<vmem>>, vector<16x88xf32>
    %989 = vector.shape_cast %987 : vector<88xf32> to vector<1x88xf32>
    %990 = vector.broadcast %989 : vector<1x88xf32> to vector<16x88xf32>
    %991 = arith.mulf %990, %988 : vector<16x88xf32>
    %992 = arith.addf %985, %991 : vector<16x88xf32>
    %c39_489 = arith.constant 39 : index
    %c0_490 = arith.constant 0 : index
    %993 = vector.load %arg10[%c39_489, %c0_490] : memref<49x88xf32, #tpu.memory_space<vmem>>, vector<1x88xf32>
    %994 = vector.shape_cast %993 : vector<1x88xf32> to vector<88xf32>
    %c5_491 = arith.constant 5 : index
    %c4_492 = arith.constant 4 : index
    %995 = vector.load %arg17[%c5_491, %c4_492] : memref<22x96xf32, #tpu.memory_space<vmem>>, vector<16x88xf32>
    %996 = vector.shape_cast %994 : vector<88xf32> to vector<1x88xf32>
    %997 = vector.broadcast %996 : vector<1x88xf32> to vector<16x88xf32>
    %998 = arith.mulf %997, %995 : vector<16x88xf32>
    %999 = arith.addf %992, %998 : vector<16x88xf32>
    %c40_493 = arith.constant 40 : index
    %c0_494 = arith.constant 0 : index
    %1000 = vector.load %arg10[%c40_493, %c0_494] : memref<49x88xf32, #tpu.memory_space<vmem>>, vector<1x88xf32>
    %1001 = vector.shape_cast %1000 : vector<1x88xf32> to vector<88xf32>
    %c5_495 = arith.constant 5 : index
    %c5_496 = arith.constant 5 : index
    %1002 = vector.load %arg17[%c5_495, %c5_496] : memref<22x96xf32, #tpu.memory_space<vmem>>, vector<16x88xf32>
    %1003 = vector.shape_cast %1001 : vector<88xf32> to vector<1x88xf32>
    %1004 = vector.broadcast %1003 : vector<1x88xf32> to vector<16x88xf32>
    %1005 = arith.mulf %1004, %1002 : vector<16x88xf32>
    %1006 = arith.addf %999, %1005 : vector<16x88xf32>
    %c41_497 = arith.constant 41 : index
    %c0_498 = arith.constant 0 : index
    %1007 = vector.load %arg10[%c41_497, %c0_498] : memref<49x88xf32, #tpu.memory_space<vmem>>, vector<1x88xf32>
    %1008 = vector.shape_cast %1007 : vector<1x88xf32> to vector<88xf32>
    %c5_499 = arith.constant 5 : index
    %c6_500 = arith.constant 6 : index
    %1009 = vector.load %arg17[%c5_499, %c6_500] : memref<22x96xf32, #tpu.memory_space<vmem>>, vector<16x88xf32>
    %1010 = vector.shape_cast %1008 : vector<88xf32> to vector<1x88xf32>
    %1011 = vector.broadcast %1010 : vector<1x88xf32> to vector<16x88xf32>
    %1012 = arith.mulf %1011, %1009 : vector<16x88xf32>
    %1013 = arith.addf %1006, %1012 : vector<16x88xf32>
    %c42_501 = arith.constant 42 : index
    %c0_502 = arith.constant 0 : index
    %1014 = vector.load %arg10[%c42_501, %c0_502] : memref<49x88xf32, #tpu.memory_space<vmem>>, vector<1x88xf32>
    %1015 = vector.shape_cast %1014 : vector<1x88xf32> to vector<88xf32>
    %c6_503 = arith.constant 6 : index
    %c0_504 = arith.constant 0 : index
    %1016 = vector.load %arg17[%c6_503, %c0_504] : memref<22x96xf32, #tpu.memory_space<vmem>>, vector<16x88xf32>
    %1017 = vector.shape_cast %1015 : vector<88xf32> to vector<1x88xf32>
    %1018 = vector.broadcast %1017 : vector<1x88xf32> to vector<16x88xf32>
    %1019 = arith.mulf %1018, %1016 : vector<16x88xf32>
    %1020 = arith.addf %1013, %1019 : vector<16x88xf32>
    %c43_505 = arith.constant 43 : index
    %c0_506 = arith.constant 0 : index
    %1021 = vector.load %arg10[%c43_505, %c0_506] : memref<49x88xf32, #tpu.memory_space<vmem>>, vector<1x88xf32>
    %1022 = vector.shape_cast %1021 : vector<1x88xf32> to vector<88xf32>
    %c6_507 = arith.constant 6 : index
    %c1_508 = arith.constant 1 : index
    %1023 = vector.load %arg17[%c6_507, %c1_508] : memref<22x96xf32, #tpu.memory_space<vmem>>, vector<16x88xf32>
    %1024 = vector.shape_cast %1022 : vector<88xf32> to vector<1x88xf32>
    %1025 = vector.broadcast %1024 : vector<1x88xf32> to vector<16x88xf32>
    %1026 = arith.mulf %1025, %1023 : vector<16x88xf32>
    %1027 = arith.addf %1020, %1026 : vector<16x88xf32>
    %c44_509 = arith.constant 44 : index
    %c0_510 = arith.constant 0 : index
    %1028 = vector.load %arg10[%c44_509, %c0_510] : memref<49x88xf32, #tpu.memory_space<vmem>>, vector<1x88xf32>
    %1029 = vector.shape_cast %1028 : vector<1x88xf32> to vector<88xf32>
    %c6_511 = arith.constant 6 : index
    %c2_512 = arith.constant 2 : index
    %1030 = vector.load %arg17[%c6_511, %c2_512] : memref<22x96xf32, #tpu.memory_space<vmem>>, vector<16x88xf32>
    %1031 = vector.shape_cast %1029 : vector<88xf32> to vector<1x88xf32>
    %1032 = vector.broadcast %1031 : vector<1x88xf32> to vector<16x88xf32>
    %1033 = arith.mulf %1032, %1030 : vector<16x88xf32>
    %1034 = arith.addf %1027, %1033 : vector<16x88xf32>
    %c45_513 = arith.constant 45 : index
    %c0_514 = arith.constant 0 : index
    %1035 = vector.load %arg10[%c45_513, %c0_514] : memref<49x88xf32, #tpu.memory_space<vmem>>, vector<1x88xf32>
    %1036 = vector.shape_cast %1035 : vector<1x88xf32> to vector<88xf32>
    %c6_515 = arith.constant 6 : index
    %c3_516 = arith.constant 3 : index
    %1037 = vector.load %arg17[%c6_515, %c3_516] : memref<22x96xf32, #tpu.memory_space<vmem>>, vector<16x88xf32>
    %1038 = vector.shape_cast %1036 : vector<88xf32> to vector<1x88xf32>
    %1039 = vector.broadcast %1038 : vector<1x88xf32> to vector<16x88xf32>
    %1040 = arith.mulf %1039, %1037 : vector<16x88xf32>
    %1041 = arith.addf %1034, %1040 : vector<16x88xf32>
    %c46_517 = arith.constant 46 : index
    %c0_518 = arith.constant 0 : index
    %1042 = vector.load %arg10[%c46_517, %c0_518] : memref<49x88xf32, #tpu.memory_space<vmem>>, vector<1x88xf32>
    %1043 = vector.shape_cast %1042 : vector<1x88xf32> to vector<88xf32>
    %c6_519 = arith.constant 6 : index
    %c4_520 = arith.constant 4 : index
    %1044 = vector.load %arg17[%c6_519, %c4_520] : memref<22x96xf32, #tpu.memory_space<vmem>>, vector<16x88xf32>
    %1045 = vector.shape_cast %1043 : vector<88xf32> to vector<1x88xf32>
    %1046 = vector.broadcast %1045 : vector<1x88xf32> to vector<16x88xf32>
    %1047 = arith.mulf %1046, %1044 : vector<16x88xf32>
    %1048 = arith.addf %1041, %1047 : vector<16x88xf32>
    %c47_521 = arith.constant 47 : index
    %c0_522 = arith.constant 0 : index
    %1049 = vector.load %arg10[%c47_521, %c0_522] : memref<49x88xf32, #tpu.memory_space<vmem>>, vector<1x88xf32>
    %1050 = vector.shape_cast %1049 : vector<1x88xf32> to vector<88xf32>
    %c6_523 = arith.constant 6 : index
    %c5_524 = arith.constant 5 : index
    %1051 = vector.load %arg17[%c6_523, %c5_524] : memref<22x96xf32, #tpu.memory_space<vmem>>, vector<16x88xf32>
    %1052 = vector.shape_cast %1050 : vector<88xf32> to vector<1x88xf32>
    %1053 = vector.broadcast %1052 : vector<1x88xf32> to vector<16x88xf32>
    %1054 = arith.mulf %1053, %1051 : vector<16x88xf32>
    %1055 = arith.addf %1048, %1054 : vector<16x88xf32>
    %c48_525 = arith.constant 48 : index
    %c0_526 = arith.constant 0 : index
    %1056 = vector.load %arg10[%c48_525, %c0_526] : memref<49x88xf32, #tpu.memory_space<vmem>>, vector<1x88xf32>
    %1057 = vector.shape_cast %1056 : vector<1x88xf32> to vector<88xf32>
    %c6_527 = arith.constant 6 : index
    %c6_528 = arith.constant 6 : index
    %1058 = vector.load %arg17[%c6_527, %c6_528] : memref<22x96xf32, #tpu.memory_space<vmem>>, vector<16x88xf32>
    %1059 = vector.shape_cast %1057 : vector<88xf32> to vector<1x88xf32>
    %1060 = vector.broadcast %1059 : vector<1x88xf32> to vector<16x88xf32>
    %1061 = arith.mulf %1060, %1058 : vector<16x88xf32>
    %1062 = arith.addf %1055, %1061 : vector<16x88xf32>
    %1063 = vector.extract_strided_slice %1062 {offsets = [0, 0], sizes = [16, 16], strides = [1, 1]} : vector<16x88xf32> to vector<16x16xf32>
    %1064 = vector.extract_strided_slice %1062 {offsets = [0, 22], sizes = [16, 16], strides = [1, 1]} : vector<16x88xf32> to vector<16x16xf32>
    %1065 = arith.addf %1063, %1064 : vector<16x16xf32>
    %1066 = arith.negf %1065 : vector<16x16xf32>
    %1067 = math.exp %1066 : vector<16x16xf32>
    %cst_529 = arith.constant 1.000000e+00 : f32
    %1068 = vector.broadcast %cst_529 : f32 to vector<16x16xf32>
    %1069 = arith.addf %1068, %1067 : vector<16x16xf32>
    %1070 = arith.divf %1068, %1069 : vector<16x16xf32>
    %1071 = vector.extract_strided_slice %1062 {offsets = [0, 44], sizes = [16, 16], strides = [1, 1]} : vector<16x88xf32> to vector<16x16xf32>
    %1072 = vector.extract_strided_slice %1062 {offsets = [0, 66], sizes = [16, 16], strides = [1, 1]} : vector<16x88xf32> to vector<16x16xf32>
    %1073 = arith.addf %1071, %1072 : vector<16x16xf32>
    %1074 = arith.negf %1073 : vector<16x16xf32>
    %1075 = math.exp %1074 : vector<16x16xf32>
    %cst_530 = arith.constant 1.000000e+00 : f32
    %1076 = vector.broadcast %cst_530 : f32 to vector<16x16xf32>
    %1077 = arith.addf %1076, %1075 : vector<16x16xf32>
    %1078 = arith.divf %1076, %1077 : vector<16x16xf32>
    %1079 = tpu.concatenate %1070, %1070, %1070, %1070 in 1 : vector<16x16xf32>, vector<16x16xf32>, vector<16x16xf32>, vector<16x16xf32> -> vector<16x64xf32>
    %1080 = arith.mulf %681, %1079 : vector<16x64xf32>
    %1081 = tpu.concatenate %1078, %1078, %1078, %1078 in 1 : vector<16x16xf32>, vector<16x16xf32>, vector<16x16xf32>, vector<16x16xf32> -> vector<16x64xf32>
    %1082 = arith.mulf %689, %1081 : vector<16x64xf32>
    %1083 = arith.addf %1080, %1082 : vector<16x64xf32>
    %cst_531 = arith.constant 0.000000e+00 : f32
    %1084 = vector.broadcast %cst_531 : f32 to vector<16x128xf32>
    %c0_532 = arith.constant 0 : index
    %c0_533 = arith.constant 0 : index
    %1085 = vector.load %arg13[%c0_532, %c0_533] : memref<1x128xf32, #tpu.memory_space<vmem>>, vector<1x128xf32>
    %1086 = vector.shape_cast %1085 : vector<1x128xf32> to vector<128xf32>
    %1087 = vector.shape_cast %1086 : vector<128xf32> to vector<1x128xf32>
    %1088 = vector.broadcast %1087 : vector<1x128xf32> to vector<16x128xf32>
    %1089 = arith.addf %1084, %1088 : vector<16x128xf32>
    %c0_534 = arith.constant 0 : index
    %c0_535 = arith.constant 0 : index
    %1090 = vector.load %arg12[%c0_534, %c0_535] : memref<4x128xf32, #tpu.memory_space<vmem>>, vector<1x128xf32>
    %1091 = vector.shape_cast %1090 : vector<1x128xf32> to vector<128xf32>
    %1092 = vector.extract_strided_slice %1083 {offsets = [0, 0], sizes = [16, 16], strides = [1, 1]} : vector<16x64xf32> to vector<16x16xf32>
    %1093 = tpu.concatenate %1092, %1092, %1092, %1092, %1092, %1092, %1092, %1092 in 1 : vector<16x16xf32>, vector<16x16xf32>, vector<16x16xf32>, vector<16x16xf32>, vector<16x16xf32>, vector<16x16xf32>, vector<16x16xf32>, vector<16x16xf32> -> vector<16x128xf32>
    %1094 = vector.shape_cast %1091 : vector<128xf32> to vector<1x128xf32>
    %1095 = vector.broadcast %1094 : vector<1x128xf32> to vector<16x128xf32>
    %1096 = arith.mulf %1095, %1093 : vector<16x128xf32>
    %1097 = arith.addf %1089, %1096 : vector<16x128xf32>
    %c1_536 = arith.constant 1 : index
    %c0_537 = arith.constant 0 : index
    %1098 = vector.load %arg12[%c1_536, %c0_537] : memref<4x128xf32, #tpu.memory_space<vmem>>, vector<1x128xf32>
    %1099 = vector.shape_cast %1098 : vector<1x128xf32> to vector<128xf32>
    %1100 = vector.extract_strided_slice %1083 {offsets = [0, 16], sizes = [16, 16], strides = [1, 1]} : vector<16x64xf32> to vector<16x16xf32>
    %1101 = tpu.concatenate %1100, %1100, %1100, %1100, %1100, %1100, %1100, %1100 in 1 : vector<16x16xf32>, vector<16x16xf32>, vector<16x16xf32>, vector<16x16xf32>, vector<16x16xf32>, vector<16x16xf32>, vector<16x16xf32>, vector<16x16xf32> -> vector<16x128xf32>
    %1102 = vector.shape_cast %1099 : vector<128xf32> to vector<1x128xf32>
    %1103 = vector.broadcast %1102 : vector<1x128xf32> to vector<16x128xf32>
    %1104 = arith.mulf %1103, %1101 : vector<16x128xf32>
    %1105 = arith.addf %1097, %1104 : vector<16x128xf32>
    %c2_538 = arith.constant 2 : index
    %c0_539 = arith.constant 0 : index
    %1106 = vector.load %arg12[%c2_538, %c0_539] : memref<4x128xf32, #tpu.memory_space<vmem>>, vector<1x128xf32>
    %1107 = vector.shape_cast %1106 : vector<1x128xf32> to vector<128xf32>
    %1108 = vector.extract_strided_slice %1083 {offsets = [0, 32], sizes = [16, 16], strides = [1, 1]} : vector<16x64xf32> to vector<16x16xf32>
    %1109 = tpu.concatenate %1108, %1108, %1108, %1108, %1108, %1108, %1108, %1108 in 1 : vector<16x16xf32>, vector<16x16xf32>, vector<16x16xf32>, vector<16x16xf32>, vector<16x16xf32>, vector<16x16xf32>, vector<16x16xf32>, vector<16x16xf32> -> vector<16x128xf32>
    %1110 = vector.shape_cast %1107 : vector<128xf32> to vector<1x128xf32>
    %1111 = vector.broadcast %1110 : vector<1x128xf32> to vector<16x128xf32>
    %1112 = arith.mulf %1111, %1109 : vector<16x128xf32>
    %1113 = arith.addf %1105, %1112 : vector<16x128xf32>
    %c3_540 = arith.constant 3 : index
    %c0_541 = arith.constant 0 : index
    %1114 = vector.load %arg12[%c3_540, %c0_541] : memref<4x128xf32, #tpu.memory_space<vmem>>, vector<1x128xf32>
    %1115 = vector.shape_cast %1114 : vector<1x128xf32> to vector<128xf32>
    %1116 = vector.extract_strided_slice %1083 {offsets = [0, 48], sizes = [16, 16], strides = [1, 1]} : vector<16x64xf32> to vector<16x16xf32>
    %1117 = tpu.concatenate %1116, %1116, %1116, %1116, %1116, %1116, %1116, %1116 in 1 : vector<16x16xf32>, vector<16x16xf32>, vector<16x16xf32>, vector<16x16xf32>, vector<16x16xf32>, vector<16x16xf32>, vector<16x16xf32>, vector<16x16xf32> -> vector<16x128xf32>
    %1118 = vector.shape_cast %1115 : vector<128xf32> to vector<1x128xf32>
    %1119 = vector.broadcast %1118 : vector<1x128xf32> to vector<16x128xf32>
    %1120 = arith.mulf %1119, %1117 : vector<16x128xf32>
    %1121 = arith.addf %1113, %1120 : vector<16x128xf32>
    %c0_542 = arith.constant 0 : index
    %c0_543 = arith.constant 0 : index
    %c0_544 = arith.constant 0 : index
    %1122 = vector.load %arg1[%c0_542, %c0_543, %c0_544] : memref<1x16x128xf32, #tpu.memory_space<vmem>>, vector<1x16x128xf32>
    %1123 = vector.shape_cast %1122 : vector<1x16x128xf32> to vector<16x128xf32>
    %1124 = arith.mulf %1123, %1121 : vector<16x128xf32>
    %c0_545 = arith.constant 0 : index
    %c0_546 = arith.constant 0 : index
    %c0_547 = arith.constant 0 : index
    %1125 = vector.load %arg14[%c0_545, %c0_546, %c0_547] : memref<1x16x128xf32, #tpu.memory_space<vmem>>, vector<1x16x128xf32>
    %1126 = vector.shape_cast %1125 : vector<1x16x128xf32> to vector<16x128xf32>
    %1127 = vector.shape_cast %1124 : vector<16x128xf32> to vector<1x16x128xf32>
    tpu.vector_store %arg14[%c0_545, %c0_546, %c0_547], %1127 {strides = array<i32>} : memref<1x16x128xf32, #tpu.memory_space<vmem>>, vector<1x16x128xf32>,
    return
  }
  func.func @transform_0(%arg0: i32) -> (i32, i32, i32) {
    %c0_i32 = arith.constant 0 : i32
    %c0_i32_0 = arith.constant 0 : i32
    %c0_i32_1 = arith.constant 0 : i32
    return %arg0, %c0_i32, %c0_i32_0 : i32, i32, i32
  }
  func.func @transform_1(%arg0: i32) -> (i32, i32) {
    %c0_i32 = arith.constant 0 : i32
    %c0_i32_0 = arith.constant 0 : i32
    %c0_i32_1 = arith.constant 0 : i32
    return %c0_i32, %c0_i32_0 : i32, i32
  }
  func.func @transform_2(%arg0: i32) -> (i32, i32) {
    %c0_i32 = arith.constant 0 : i32
    %c0_i32_0 = arith.constant 0 : i32
    %c0_i32_1 = arith.constant 0 : i32
    return %c0_i32, %c0_i32_0 : i32, i32
  }
  func.func @transform_3(%arg0: i32) -> (i32, i32) {
    %c0_i32 = arith.constant 0 : i32
    %c0_i32_0 = arith.constant 0 : i32
    %c0_i32_1 = arith.constant 0 : i32
    return %c0_i32, %c0_i32_0 : i32, i32
  }
  func.func @transform_4(%arg0: i32) -> (i32, i32) {
    %c0_i32 = arith.constant 0 : i32
    %c0_i32_0 = arith.constant 0 : i32
    %c0_i32_1 = arith.constant 0 : i32
    return %c0_i32, %c0_i32_0 : i32, i32
  }
  func.func @transform_5(%arg0: i32) -> (i32, i32) {
    %c0_i32 = arith.constant 0 : i32
    %c0_i32_0 = arith.constant 0 : i32
    %c0_i32_1 = arith.constant 0 : i32
    return %c0_i32, %c0_i32_0 : i32, i32
  }
  func.func @transform_6(%arg0: i32) -> (i32, i32) {
    %c0_i32 = arith.constant 0 : i32
    %c0_i32_0 = arith.constant 0 : i32
    %c0_i32_1 = arith.constant 0 : i32
    return %c0_i32, %c0_i32_0 : i32, i32
  }
  func.func @transform_7(%arg0: i32) -> (i32, i32) {
    %c0_i32 = arith.constant 0 : i32
    %c0_i32_0 = arith.constant 0 : i32
    %c0_i32_1 = arith.constant 0 : i32
    return %c0_i32, %c0_i32_0 : i32, i32
  }
  func.func @transform_8(%arg0: i32) -> (i32, i32) {
    %c0_i32 = arith.constant 0 : i32
    %c0_i32_0 = arith.constant 0 : i32
    %c0_i32_1 = arith.constant 0 : i32
    return %c0_i32, %c0_i32_0 : i32, i32
  }
  func.func @transform_9(%arg0: i32) -> (i32, i32) {
    %c0_i32 = arith.constant 0 : i32
    %c0_i32_0 = arith.constant 0 : i32
    %c0_i32_1 = arith.constant 0 : i32
    return %c0_i32, %c0_i32_0 : i32, i32
  }
  func.func @transform_10(%arg0: i32) -> (i32, i32) {
    %c0_i32 = arith.constant 0 : i32
    %c0_i32_0 = arith.constant 0 : i32
    %c0_i32_1 = arith.constant 0 : i32
    return %c0_i32, %c0_i32_0 : i32, i32
  }
  func.func @transform_11(%arg0: i32) -> (i32, i32) {
    %c0_i32 = arith.constant 0 : i32
    %c0_i32_0 = arith.constant 0 : i32
    %c0_i32_1 = arith.constant 0 : i32
    return %c0_i32, %c0_i32_0 : i32, i32
  }
  func.func @transform_12(%arg0: i32) -> (i32, i32) {
    %c0_i32 = arith.constant 0 : i32
    %c0_i32_0 = arith.constant 0 : i32
    %c0_i32_1 = arith.constant 0 : i32
    return %c0_i32, %c0_i32_0 : i32, i32
  }
  func.func @transform_13(%arg0: i32) -> (i32, i32, i32) {
    %c0_i32 = arith.constant 0 : i32
    %c0_i32_0 = arith.constant 0 : i32
    %c0_i32_1 = arith.constant 0 : i32
    return %arg0, %c0_i32, %c0_i32_0 : i32, i32, i32
  }
}

</mosaic_0001>

<llo_original>
// kernel: tile.14
$region0: #{tile.14}
  %s0 = inlined_call_operand.vmem [shape: f32[25,8,16], index: 0, kind: input, shape index: {}]
  %s1 = inlined_call_operand.vmem [shape: f32[25,128], index: 1, kind: output, shape index: {}]
  %v2 = vld [vmem:[%s0] ss:$8 sm:$0xf]
  %v3 = vld [vmem:[%s0] ss:$8 sm:$0xf0]
  %vm4 = vcmask 1047556
  %v5 = vsel %vm4, %v3, %v2
  %vm6 = vcmask 130048
  %7 = vst.msk [vmem:[%s1] sm:$0xff] %vm6, %v5
  %s8 = scalar_lea.vmem %s0, 64
  %v9 = vld [vmem:[%s8] ss:$8 sm:$0xf]
  %s10 = scalar_lea.vmem %s0, 64
  %v11 = vld [vmem:[%s10] ss:$8 sm:$0xf0]
  %vm12 = vcmask 1047556
  %v13 = vsel %vm12, %v11, %v9
  %vm14 = vcmask 130048
  %s15 = scalar_lea.vmem %s1, 8
  %16 = vst.msk [vmem:[%s15] sm:$0xff] %vm14, %v13
  %s17 = scalar_lea.vmem %s0, 128
  %v18 = vld [vmem:[%s17] ss:$8 sm:$0xf]
  %s19 = scalar_lea.vmem %s0, 128
  %v20 = vld [vmem:[%s19] ss:$8 sm:$0xf0]
  %vm21 = vcmask 1047556
  %v22 = vsel %vm21, %v20, %v18
  %vm23 = vcmask 130048
  %s24 = scalar_lea.vmem %s1, 16
  %25 = vst.msk [vmem:[%s24] sm:$0xff] %vm23, %v22
  %s26 = scalar_lea.vmem %s0, 192
  %v27 = vld [vmem:[%s26] sm:$0x1]
  %vm28 = vcmask 130048
  %s29 = scalar_lea.vmem %s1, 24
  %30 = vst.msk [vmem:[%s29] sm:$0x1] %vm28, %v27
  %s31 = scalar_lea.vmem %s0, 7
  %v32 = vld [vmem:[%s31] ss:$8 sm:$0xf]
  %s33 = scalar_lea.vmem %s0, 7
  %v34 = vld [vmem:[%s33] ss:$8 sm:$0xf0]
  %vm35 = vcmask 1047556
  %v36 = vsel %vm35, %v34, %v32
  %37 = vrot.lane.b32.xlu0 %v36, 112
  %v38 = vpop.permute.xlu0 %37
  %vm39 = vcmask 1048448
  %40 = vst.msk [vmem:[%s1] sm:$0xff] %vm39, %v38
  %s41 = scalar_lea.vmem %s0, 71
  %v42 = vld [vmem:[%s41] ss:$8 sm:$0xf]
  %s43 = scalar_lea.vmem %s0, 71
  %v44 = vld [vmem:[%s43] ss:$8 sm:$0xf0]
  %vm45 = vcmask 1047556
  %v46 = vsel %vm45, %v44, %v42
  %47 = vrot.lane.b32.xlu0 %v46, 112
  %v48 = vpop.permute.xlu0 %47
  %vm49 = vcmask 1048448
  %s50 = scalar_lea.vmem %s1, 8
  %51 = vst.msk [vmem:[%s50] sm:$0xff] %vm49, %v48
  %s52 = scalar_lea.vmem %s0, 135
  %v53 = vld [vmem:[%s52] ss:$8 sm:$0xf]
  %s54 = scalar_lea.vmem %s0, 135
  %v55 = vld [vmem:[%s54] ss:$8 sm:$0xf0]
  %vm56 = vcmask 1047556
  %v57 = vsel %vm56, %v55, %v53
  %58 = vrot.lane.b32.xlu0 %v57, 112
  %v59 = vpop.permute.xlu0 %58
  %vm60 = vcmask 1048448
  %s61 = scalar_lea.vmem %s1, 16
  %62 = vst.msk [vmem:[%s61] sm:$0xff] %vm60, %v59
  %s63 = scalar_lea.vmem %s0, 199
  %v64 = vld [vmem:[%s63] sm:$0x1]
  %65 = vrot.lane.b32.xlu0 %v64, 112
  %v66 = vpop.permute.xlu0 %65
  %vm67 = vcmask 1048448
  %s68 = scalar_lea.vmem %s1, 24
  %69 = vst.msk [vmem:[%s68] sm:$0x1] %vm67, %v66
  %s70 = scalar_lea.vmem %s0, 6
  %v71 = vld [vmem:[%s70] ss:$8 sm:$0xf]
  %s72 = scalar_lea.vmem %s0, 6
  %v73 = vld [vmem:[%s72] ss:$8 sm:$0xf0]
  %vm74 = vcmask 1047556
  %v75 = vsel %vm74, %v73, %v71
  %76 = vrot.lane.b32.xlu0 %v75, 96
  %v77 = vpop.permute.xlu0 %76
  %vm78 = vcmask 917248
  %79 = vst.msk [vmem:[%s1] sm:$0xff] %vm78, %v77
  %s80 = scalar_lea.vmem %s0, 70
  %v81 = vld [vmem:[%s80] ss:$8 sm:$0xf]
  %s82 = scalar_lea.vmem %s0, 70
  %v83 = vld [vmem:[%s82] ss:$8 sm:$0xf0]
  %vm84 = vcmask 1047556
  %v85 = vsel %vm84, %v83, %v81
  %86 = vrot.lane.b32.xlu0 %v85, 96
  %v87 = vpop.permute.xlu0 %86
  %vm88 = vcmask 917248
  %s89 = scalar_lea.vmem %s1, 8
  %90 = vst.msk [vmem:[%s89] sm:$0xff] %vm88, %v87
  %s91 = scalar_lea.vmem %s0, 134
  %v92 = vld [vmem:[%s91] ss:$8 sm:$0xf]
  %s93 = scalar_lea.vmem %s0, 134
  %v94 = vld [vmem:[%s93] ss:$8 sm:$0xf0]
  %vm95 = vcmask 1047556
  %v96 = vsel %vm95, %v94, %v92
  %97 = vrot.lane.b32.xlu0 %v96, 96
  %v98 = vpop.permute.xlu0 %97
  %vm99 = vcmask 917248
  %s100 = scalar_lea.vmem %s1, 16
  %101 = vst.msk [vmem:[%s100] sm:$0xff] %vm99, %v98
  %s102 = scalar_lea.vmem %s0, 198
  %v103 = vld [vmem:[%s102] sm:$0x1]
  %104 = vrot.lane.b32.xlu0 %v103, 96
  %v105 = vpop.permute.xlu0 %104
  %vm106 = vcmask 917248
  %s107 = scalar_lea.vmem %s1, 24
  %108 = vst.msk [vmem:[%s107] sm:$0x1] %vm106, %v105
  %s109 = scalar_lea.vmem %s0, 5
  %v110 = vld [vmem:[%s109] ss:$8 sm:$0xf]
  %s111 = scalar_lea.vmem %s0, 5
  %v112 = vld [vmem:[%s111] ss:$8 sm:$0xf0]
  %vm113 = vcmask 1047556
  %v114 = vsel %vm113, %v112, %v110
  %115 = vrot.lane.b32.xlu0 %v114, 80
  %v116 = vpop.permute.xlu0 %115
  %vm117 = vcmask 786048
  %118 = vst.msk [vmem:[%s1] sm:$0xff] %vm117, %v116
  %s119 = scalar_lea.vmem %s0, 69
  %v120 = vld [vmem:[%s119] ss:$8 sm:$0xf]
  %s121 = scalar_lea.vmem %s0, 69
  %v122 = vld [vmem:[%s121] ss:$8 sm:$0xf0]
  %vm123 = vcmask 1047556
  %v124 = vsel %vm123, %v122, %v120
  %125 = vrot.lane.b32.xlu0 %v124, 80
  %v126 = vpop.permute.xlu0 %125
  %vm127 = vcmask 786048
  %s128 = scalar_lea.vmem %s1, 8
  %129 = vst.msk [vmem:[%s128] sm:$0xff] %vm127, %v126
  %s130 = scalar_lea.vmem %s0, 133
  %v131 = vld [vmem:[%s130] ss:$8 sm:$0xf]
  %s132 = scalar_lea.vmem %s0, 133
  %v133 = vld [vmem:[%s132] ss:$8 sm:$0xf0]
  %vm134 = vcmask 1047556
  %v135 = vsel %vm134, %v133, %v131
  %136 = vrot.lane.b32.xlu0 %v135, 80
  %v137 = vpop.permute.xlu0 %136
  %vm138 = vcmask 786048
  %s139 = scalar_lea.vmem %s1, 16
  %140 = vst.msk [vmem:[%s139] sm:$0xff] %vm138, %v137
  %s141 = scalar_lea.vmem %s0, 197
  %v142 = vld [vmem:[%s141] sm:$0x1]
  %143 = vrot.lane.b32.xlu0 %v142, 80
  %v144 = vpop.permute.xlu0 %143
  %vm145 = vcmask 786048
  %s146 = scalar_lea.vmem %s1, 24
  %147 = vst.msk [vmem:[%s146] sm:$0x1] %vm145, %v144
  %s148 = scalar_lea.vmem %s0, 4
  %v149 = vld [vmem:[%s148] ss:$8 sm:$0xf]
  %s150 = scalar_lea.vmem %s0, 4
  %v151 = vld [vmem:[%s150] ss:$8 sm:$0xf0]
  %vm152 = vcmask 1047556
  %v153 = vsel %vm152, %v151, %v149
  %154 = vrot.lane.b32.xlu0 %v153, 64
  %v155 = vpop.permute.xlu0 %154
  %vm156 = vcmask 654848
  %157 = vst.msk [vmem:[%s1] sm:$0xff] %vm156, %v155
  %s158 = scalar_lea.vmem %s0, 68
  %v159 = vld [vmem:[%s158] ss:$8 sm:$0xf]
  %s160 = scalar_lea.vmem %s0, 68
  %v161 = vld [vmem:[%s160] ss:$8 sm:$0xf0]
  %vm162 = vcmask 1047556
  %v163 = vsel %vm162, %v161, %v159
  %164 = vrot.lane.b32.xlu0 %v163, 64
  %v165 = vpop.permute.xlu0 %164
  %vm166 = vcmask 654848
  %s167 = scalar_lea.vmem %s1, 8
  %168 = vst.msk [vmem:[%s167] sm:$0xff] %vm166, %v165
  %s169 = scalar_lea.vmem %s0, 132
  %v170 = vld [vmem:[%s169] ss:$8 sm:$0xf]
  %s171 = scalar_lea.vmem %s0, 132
  %v172 = vld [vmem:[%s171] ss:$8 sm:$0xf0]
  %vm173 = vcmask 1047556
  %v174 = vsel %vm173, %v172, %v170
  %175 = vrot.lane.b32.xlu0 %v174, 64
  %v176 = vpop.permute.xlu0 %175
  %vm177 = vcmask 654848
  %s178 = scalar_lea.vmem %s1, 16
  %179 = vst.msk [vmem:[%s178] sm:$0xff] %vm177, %v176
  %s180 = scalar_lea.vmem %s0, 196
  %v181 = vld [vmem:[%s180] sm:$0x1]
  %182 = vrot.lane.b32.xlu0 %v181, 64
  %v183 = vpop.permute.xlu0 %182
  %vm184 = vcmask 654848
  %s185 = scalar_lea.vmem %s1, 24
  %186 = vst.msk [vmem:[%s185] sm:$0x1] %vm184, %v183
  %s187 = scalar_lea.vmem %s0, 3
  %v188 = vld [vmem:[%s187] ss:$8 sm:$0xf]
  %s189 = scalar_lea.vmem %s0, 3
  %v190 = vld [vmem:[%s189] ss:$8 sm:$0xf0]
  %vm191 = vcmask 1047556
  %v192 = vsel %vm191, %v190, %v188
  %193 = vrot.lane.b32.xlu0 %v192, 48
  %v194 = vpop.permute.xlu0 %193
  %vm195 = vcmask 523648
  %196 = vst.msk [vmem:[%s1] sm:$0xff] %vm195, %v194
  %s197 = scalar_lea.vmem %s0, 67
  %v198 = vld [vmem:[%s197] ss:$8 sm:$0xf]
  %s199 = scalar_lea.vmem %s0, 67
  %v200 = vld [vmem:[%s199] ss:$8 sm:$0xf0]
  %vm201 = vcmask 1047556
  %v202 = vsel %vm201, %v200, %v198
  %203 = vrot.lane.b32.xlu0 %v202, 48
  %v204 = vpop.permute.xlu0 %203
  %vm205 = vcmask 523648
  %s206 = scalar_lea.vmem %s1, 8
  %207 = vst.msk [vmem:[%s206] sm:$0xff] %vm205, %v204
  %s208 = scalar_lea.vmem %s0, 131
  %v209 = vld [vmem:[%s208] ss:$8 sm:$0xf]
  %s210 = scalar_lea.vmem %s0, 131
  %v211 = vld [vmem:[%s210] ss:$8 sm:$0xf0]
  %vm212 = vcmask 1047556
  %v213 = vsel %vm212, %v211, %v209
  %214 = vrot.lane.b32.xlu0 %v213, 48
  %v215 = vpop.permute.xlu0 %214
  %vm216 = vcmask 523648
  %s217 = scalar_lea.vmem %s1, 16
  %218 = vst.msk [vmem:[%s217] sm:$0xff] %vm216, %v215
  %s219 = scalar_lea.vmem %s0, 195
  %v220 = vld [vmem:[%s219] sm:$0x1]
  %221 = vrot.lane.b32.xlu0 %v220, 48
  %v222 = vpop.permute.xlu0 %221
  %vm223 = vcmask 523648
  %s224 = scalar_lea.vmem %s1, 24
  %225 = vst.msk [vmem:[%s224] sm:$0x1] %vm223, %v222
  %s226 = scalar_lea.vmem %s0, 2
  %v227 = vld [vmem:[%s226] ss:$8 sm:$0xf]
  %s228 = scalar_lea.vmem %s0, 2
  %v229 = vld [vmem:[%s228] ss:$8 sm:$0xf0]
  %vm230 = vcmask 1047556
  %v231 = vsel %vm230, %v229, %v227
  %232 = vrot.lane.b32.xlu0 %v231, 32
  %v233 = vpop.permute.xlu0 %232
  %vm234 = vcmask 392448
  %235 = vst.msk [vmem:[%s1] sm:$0xff] %vm234, %v233
  %s236 = scalar_lea.vmem %s0, 66
  %v237 = vld [vmem:[%s236] ss:$8 sm:$0xf]
  %s238 = scalar_lea.vmem %s0, 66
  %v239 = vld [vmem:[%s238] ss:$8 sm:$0xf0]
  %vm240 = vcmask 1047556
  %v241 = vsel %vm240, %v239, %v237
  %242 = vrot.lane.b32.xlu0 %v241, 32
  %v243 = vpop.permute.xlu0 %242
  %vm244 = vcmask 392448
  %s245 = scalar_lea.vmem %s1, 8
  %246 = vst.msk [vmem:[%s245] sm:$0xff] %vm244, %v243
  %s247 = scalar_lea.vmem %s0, 130
  %v248 = vld [vmem:[%s247] ss:$8 sm:$0xf]
  %s249 = scalar_lea.vmem %s0, 130
  %v250 = vld [vmem:[%s249] ss:$8 sm:$0xf0]
  %vm251 = vcmask 1047556
  %v252 = vsel %vm251, %v250, %v248
  %253 = vrot.lane.b32.xlu0 %v252, 32
  %v254 = vpop.permute.xlu0 %253
  %vm255 = vcmask 392448
  %s256 = scalar_lea.vmem %s1, 16
  %257 = vst.msk [vmem:[%s256] sm:$0xff] %vm255, %v254
  %s258 = scalar_lea.vmem %s0, 194
  %v259 = vld [vmem:[%s258] sm:$0x1]
  %260 = vrot.lane.b32.xlu0 %v259, 32
  %v261 = vpop.permute.xlu0 %260
  %vm262 = vcmask 392448
  %s263 = scalar_lea.vmem %s1, 24
  %264 = vst.msk [vmem:[%s263] sm:$0x1] %vm262, %v261
  %s265 = scalar_lea.vmem %s0, 1
  %v266 = vld [vmem:[%s265] ss:$8 sm:$0xf]
  %s267 = scalar_lea.vmem %s0, 1
  %v268 = vld [vmem:[%s267] ss:$8 sm:$0xf0]
  %vm269 = vcmask 1047556
  %v270 = vsel %vm269, %v268, %v266
  %271 = vrot.lane.b32.xlu0 %v270, 16
  %v272 = vpop.permute.xlu0 %271
  %vm273 = vcmask 261248
  %274 = vst.msk [vmem:[%s1] sm:$0xff] %vm273, %v272
  %s275 = scalar_lea.vmem %s0, 65
  %v276 = vld [vmem:[%s275] ss:$8 sm:$0xf]
  %s277 = scalar_lea.vmem %s0, 65
  %v278 = vld [vmem:[%s277] ss:$8 sm:$0xf0]
  %vm279 = vcmask 1047556
  %v280 = vsel %vm279, %v278, %v276
  %281 = vrot.lane.b32.xlu0 %v280, 16
  %v282 = vpop.permute.xlu0 %281
  %vm283 = vcmask 261248
  %s284 = scalar_lea.vmem %s1, 8
  %285 = vst.msk [vmem:[%s284] sm:$0xff] %vm283, %v282
  %s286 = scalar_lea.vmem %s0, 129
  %v287 = vld [vmem:[%s286] ss:$8 sm:$0xf]
  %s288 = scalar_lea.vmem %s0, 129
  %v289 = vld [vmem:[%s288] ss:$8 sm:$0xf0]
  %vm290 = vcmask 1047556
  %v291 = vsel %vm290, %v289, %v287
  %292 = vrot.lane.b32.xlu0 %v291, 16
  %v293 = vpop.permute.xlu0 %292
  %vm294 = vcmask 261248
  %s295 = scalar_lea.vmem %s1, 16
  %296 = vst.msk [vmem:[%s295] sm:$0xff] %vm294, %v293
  %s297 = scalar_lea.vmem %s0, 193
  %v298 = vld [vmem:[%s297] sm:$0x1]
  %299 = vrot.lane.b32.xlu0 %v298, 16
  %v300 = vpop.permute.xlu0 %299
  %vm301 = vcmask 261248
  %s302 = scalar_lea.vmem %s1, 24
  %303 = vst.msk [vmem:[%s302] sm:$0x1] %vm301, %v300

// kernel: lsk_block.1
$region0: #{lsk_block.1}
  #allocation0 [shape = 'u32[]', space=smem, size = 0x4, offset = 0x4, fixed_abs, tag = 'smem constant byte address 0x4 - core index']
  #allocation1 [shape = 'u32[144,128]{1,0:T(1,128)}', space=vmem, size = 0x12000, scoped, tag = 'internal scratch']
  #allocation2 [shape = 'f32[20,132]{1,0:T(8,128)}', space=vmem, size = 0x6000, scoped, tag = 'scratch operand']
  #allocation3 [shape = 'f32[34,146]{1,0:T(8,128)}', space=vmem, size = 0xa000, scoped, tag = 'scratch operand']
  #allocation4 [shape = 'f32[22,96]{1,0:T(8,128)}', space=vmem, size = 0x3000, scoped, tag = 'scratch operand']
  %s0 = inlined_call_operand.vmem [shape: f32[2,16,128], index: 0, kind: input, shape index: {}]
  %s1 = inlined_call_operand.vmem [shape: f32[25,128], index: 1, kind: input, shape index: {}]
  %s2 = inlined_call_operand.vmem [shape: f32[1,128], index: 2, kind: input, shape index: {}]
  %s3 = inlined_call_operand.vmem [shape: f32[49,128], index: 3, kind: input, shape index: {}]
  %s4 = inlined_call_operand.vmem [shape: f32[1,128], index: 4, kind: input, shape index: {}]
  %s5 = inlined_call_operand.vmem [shape: f32[8,64], index: 5, kind: input, shape index: {}]
  %s6 = inlined_call_operand.vmem [shape: f32[1,64], index: 6, kind: input, shape index: {}]
  %s7 = inlined_call_operand.vmem [shape: f32[8,64], index: 7, kind: input, shape index: {}]
  %s8 = inlined_call_operand.vmem [shape: f32[1,64], index: 8, kind: input, shape index: {}]
  %s9 = inlined_call_operand.vmem [shape: f32[49,88], index: 9, kind: input, shape index: {}]
  %s10 = inlined_call_operand.vmem [shape: f32[1,88], index: 10, kind: input, shape index: {}]
  %s11 = inlined_call_operand.vmem [shape: f32[4,128], index: 11, kind: input, shape index: {}]
  %s12 = inlined_call_operand.vmem [shape: f32[1,128], index: 12, kind: input, shape index: {}]
  %s13 = inlined_call_operand.vmem [shape: f32[2,16,128], index: 13, kind: output, shape index: {}]
  %s14 = sld [smem:[#allocation0]]
  $region85: #{lsk_block.1} parent=0
    _
  %s16 = ssub.s32 1, %s14
  %s17 = scalar_select 0, %s16, %s14
  loop: start=0, step=1, limit=4
  $region2: #{lsk_block.1} parent=0 // loop_pre_header
    _
  $region3: #{lsk_block.1} parent=0 // loop_header
    %s19 = sphi 0, %s23
    %p20 = scmp.ge.s32.totalorder %s19, 4
    %s29 = sphi 0, %s31
    %s32 = sphi 0, %s29
    %s33 = sphi 0, %s32
    %s49 = sphi 0, %s33
    %s53 = sphi 0, %s53
    %s55 = sphi 0, %s53
    %s56 = sphi 0, %s55
    %s70 = sphi 0, %s56
    %s74 = sphi 0, %s74
    %s76 = sphi 0, %s74
    %s77 = sphi 0, %s76
    %s91 = sphi 0, %s77
    %s95 = sphi 0, %s95
    %s97 = sphi 0, %s95
    %s98 = sphi 0, %s97
    %s112 = sphi 0, %s98
    %s116 = sphi 0, %s116
    %s118 = sphi 0, %s116
    %s119 = sphi 0, %s118
    %s133 = sphi 0, %s119
    %s137 = sphi 0, %s137
    %s139 = sphi 0, %s137
    %s140 = sphi 0, %s139
    %s154 = sphi 0, %s140
    %s158 = sphi 0, %s158
    %s160 = sphi 0, %s158
    %s161 = sphi 0, %s160
    %s175 = sphi 0, %s161
    %s179 = sphi 0, %s179
    %s181 = sphi 0, %s179
    %s182 = sphi 0, %s181
    %s196 = sphi 0, %s182
    %s200 = sphi 0, %s200
    %s202 = sphi 0, %s200
    %s203 = sphi 0, %s202
    %s217 = sphi 0, %s203
    %s221 = sphi 0, %s221
    %s223 = sphi 0, %s221
    %s224 = sphi 0, %s223
    %s238 = sphi 0, %s224
    %s242 = sphi 0, %s242
    %s244 = sphi 0, %s242
    %s245 = sphi 0, %s244
    %s259 = sphi 0, %s245
    %s263 = sphi 0, %s263
    %s265 = sphi 0, %s263
    %s266 = sphi 0, %s265
    %s280 = sphi 0, %s266
    %s284 = sphi 0, %s284
    %s286 = sphi 0, %s284
    %s287 = sphi 0, %s286
    %s301 = sphi 0, %s287
    %s307 = sphi 0, %s309
    %s310 = sphi 0, %s307
    %s311 = sphi 0, %s310
    %s327 = sphi 0, %s311
  $region4: #{lsk_block.1} parent=0 // loop_header_branch
    %22 = sbr.rel (%p20) target = $region8
  $region5: #{lsk_block.1} parent=0 // loop_body
    %s24 = ssub.s32 %s19, 1
    %s25 = ssub.s32 %s19, 2
    %s26 = sadd.s32 %s19, 1
    %s27 = ssub.s32 %s19, %s26
    %p28 = scmp.eq.s32.totalorder %s27, 0
    %s30 = sadd.s32 %s29, 1
    %s31 = scalar_select %p28, %s29, %s30
    %p34 = pneg %p28
    %p35 = scmp.eq.s32.totalorder %s19, 1
    %p36 = por %p34, %p35
    %p37 = scmp.ne.s32.totalorder %s29, %s32
    %p38 = scmp.eq.s32.totalorder %s19, 0
    %p39 = por %p37, %p38
    %p40 = scmp.ne.s32.totalorder %s29, %s32
    %p41 = scmp.eq.s32.totalorder %s24, 1
    %p42 = por %p40, %p41
    %p43 = scmp.ne.s32.totalorder %s32, %s33
    %p44 = scmp.eq.s32.totalorder %s24, 0
    %p45 = por %p43, %p44
    %p46 = scmp.ne.s32.totalorder %s32, %s33
    %p47 = scmp.eq.s32.totalorder %s25, 1
    %p48 = por %p46, %p47
    %p50 = scmp.ne.s32.totalorder %s33, %s49
    %p51 = scmp.eq.s32.totalorder %s25, 0
    %p52 = por %p50, %p51
    %s54 = sadd.s32 %s53, 1
    %p57 = scmp.eq.s32.totalorder %s19, 1
    %p58 = scmp.ne.s32.totalorder %s53, %s55
    %p59 = scmp.eq.s32.totalorder %s19, 0
    %p60 = por %p58, %p59
    %p61 = scmp.ne.s32.totalorder %s53, %s55
    %p62 = scmp.eq.s32.totalorder %s24, 1
    %p63 = por %p61, %p62
    %p64 = scmp.ne.s32.totalorder %s55, %s56
    %p65 = scmp.eq.s32.totalorder %s24, 0
    %p66 = por %p64, %p65
    %p67 = scmp.ne.s32.totalorder %s55, %s56
    %p68 = scmp.eq.s32.totalorder %s25, 1
    %p69 = por %p67, %p68
    %p71 = scmp.ne.s32.totalorder %s56, %s70
    %p72 = scmp.eq.s32.totalorder %s25, 0
    %p73 = por %p71, %p72
    %s75 = sadd.s32 %s74, 1
    %p78 = scmp.eq.s32.totalorder %s19, 1
    %p79 = scmp.ne.s32.totalorder %s74, %s76
    %p80 = scmp.eq.s32.totalorder %s19, 0
    %p81 = por %p79, %p80
    %p82 = scmp.ne.s32.totalorder %s74, %s76
    %p83 = scmp.eq.s32.totalorder %s24, 1
    %p84 = por %p82, %p83
    %p85 = scmp.ne.s32.totalorder %s76, %s77
    %p86 = scmp.eq.s32.totalorder %s24, 0
    %p87 = por %p85, %p86
    %p88 = scmp.ne.s32.totalorder %s76, %s77
    %p89 = scmp.eq.s32.totalorder %s25, 1
    %p90 = por %p88, %p89
    %p92 = scmp.ne.s32.totalorder %s77, %s91
    %p93 = scmp.eq.s32.totalorder %s25, 0
    %p94 = por %p92, %p93
    %s96 = sadd.s32 %s95, 1
    %p99 = scmp.eq.s32.totalorder %s19, 1
    %p100 = scmp.ne.s32.totalorder %s95, %s97
    %p101 = scmp.eq.s32.totalorder %s19, 0
    %p102 = por %p100, %p101
    %p103 = scmp.ne.s32.totalorder %s95, %s97
    %p104 = scmp.eq.s32.totalorder %s24, 1
    %p105 = por %p103, %p104
    %p106 = scmp.ne.s32.totalorder %s97, %s98
    %p107 = scmp.eq.s32.totalorder %s24, 0
    %p108 = por %p106, %p107
    %p109 = scmp.ne.s32.totalorder %s97, %s98
    %p110 = scmp.eq.s32.totalorder %s25, 1
    %p111 = por %p109, %p110
    %p113 = scmp.ne.s32.totalorder %s98, %s112
    %p114 = scmp.eq.s32.totalorder %s25, 0
    %p115 = por %p113, %p114
    %s117 = sadd.s32 %s116, 1
    %p120 = scmp.eq.s32.totalorder %s19, 1
    %p121 = scmp.ne.s32.totalorder %s116, %s118
    %p122 = scmp.eq.s32.totalorder %s19, 0
    %p123 = por %p121, %p122
    %p124 = scmp.ne.s32.totalorder %s116, %s118
    %p125 = scmp.eq.s32.totalorder %s24, 1
    %p126 = por %p124, %p125
    %p127 = scmp.ne.s32.totalorder %s118, %s119
    %p128 = scmp.eq.s32.totalorder %s24, 0
    %p129 = por %p127, %p128
    %p130 = scmp.ne.s32.totalorder %s118, %s119
    %p131 = scmp.eq.s32.totalorder %s25, 1
    %p132 = por %p130, %p131
    %p134 = scmp.ne.s32.totalorder %s119, %s133
    %p135 = scmp.eq.s32.totalorder %s25, 0
    %p136 = por %p134, %p135
    %s138 = sadd.s32 %s137, 1
    %p141 = scmp.eq.s32.totalorder %s19, 1
    %p142 = scmp.ne.s32.totalorder %s137, %s139
    %p143 = scmp.eq.s32.totalorder %s19, 0
    %p144 = por %p142, %p143
    %p145 = scmp.ne.s32.totalorder %s137, %s139
    %p146 = scmp.eq.s32.totalorder %s24, 1
    %p147 = por %p145, %p146
    %p148 = scmp.ne.s32.totalorder %s139, %s140
    %p149 = scmp.eq.s32.totalorder %s24, 0
    %p150 = por %p148, %p149
    %p151 = scmp.ne.s32.totalorder %s139, %s140
    %p152 = scmp.eq.s32.totalorder %s25, 1
    %p153 = por %p151, %p152
    %p155 = scmp.ne.s32.totalorder %s140, %s154
    %p156 = scmp.eq.s32.totalorder %s25, 0
    %p157 = por %p155, %p156
    %s159 = sadd.s32 %s158, 1
    %p162 = scmp.eq.s32.totalorder %s19, 1
    %p163 = scmp.ne.s32.totalorder %s158, %s160
    %p164 = scmp.eq.s32.totalorder %s19, 0
    %p165 = por %p163, %p164
    %p166 = scmp.ne.s32.totalorder %s158, %s160
    %p167 = scmp.eq.s32.totalorder %s24, 1
    %p168 = por %p166, %p167
    %p169 = scmp.ne.s32.totalorder %s160, %s161
    %p170 = scmp.eq.s32.totalorder %s24, 0
    %p171 = por %p169, %p170
    %p172 = scmp.ne.s32.totalorder %s160, %s161
    %p173 = scmp.eq.s32.totalorder %s25, 1
    %p174 = por %p172, %p173
    %p176 = scmp.ne.s32.totalorder %s161, %s175
    %p177 = scmp.eq.s32.totalorder %s25, 0
    %p178 = por %p176, %p177
    %s180 = sadd.s32 %s179, 1
    %p183 = scmp.eq.s32.totalorder %s19, 1
    %p184 = scmp.ne.s32.totalorder %s179, %s181
    %p185 = scmp.eq.s32.totalorder %s19, 0
    %p186 = por %p184, %p185
    %p187 = scmp.ne.s32.totalorder %s179, %s181
    %p188 = scmp.eq.s32.totalorder %s24, 1
    %p189 = por %p187, %p188
    %p190 = scmp.ne.s32.totalorder %s181, %s182
    %p191 = scmp.eq.s32.totalorder %s24, 0
    %p192 = por %p190, %p191
    %p193 = scmp.ne.s32.totalorder %s181, %s182
    %p194 = scmp.eq.s32.totalorder %s25, 1
    %p195 = por %p193, %p194
    %p197 = scmp.ne.s32.totalorder %s182, %s196
    %p198 = scmp.eq.s32.totalorder %s25, 0
    %p199 = por %p197, %p198
    %s201 = sadd.s32 %s200, 1
    %p204 = scmp.eq.s32.totalorder %s19, 1
    %p205 = scmp.ne.s32.totalorder %s200, %s202
    %p206 = scmp.eq.s32.totalorder %s19, 0
    %p207 = por %p205, %p206
    %p208 = scmp.ne.s32.totalorder %s200, %s202
    %p209 = scmp.eq.s32.totalorder %s24, 1
    %p210 = por %p208, %p209
    %p211 = scmp.ne.s32.totalorder %s202, %s203
    %p212 = scmp.eq.s32.totalorder %s24, 0
    %p213 = por %p211, %p212
    %p214 = scmp.ne.s32.totalorder %s202, %s203
    %p215 = scmp.eq.s32.totalorder %s25, 1
    %p216 = por %p214, %p215
    %p218 = scmp.ne.s32.totalorder %s203, %s217
    %p219 = scmp.eq.s32.totalorder %s25, 0
    %p220 = por %p218, %p219
    %s222 = sadd.s32 %s221, 1
    %p225 = scmp.eq.s32.totalorder %s19, 1
    %p226 = scmp.ne.s32.totalorder %s221, %s223
    %p227 = scmp.eq.s32.totalorder %s19, 0
    %p228 = por %p226, %p227
    %p229 = scmp.ne.s32.totalorder %s221, %s223
    %p230 = scmp.eq.s32.totalorder %s24, 1
    %p231 = por %p229, %p230
    %p232 = scmp.ne.s32.totalorder %s223, %s224
    %p233 = scmp.eq.s32.totalorder %s24, 0
    %p234 = por %p232, %p233
    %p235 = scmp.ne.s32.totalorder %s223, %s224
    %p236 = scmp.eq.s32.totalorder %s25, 1
    %p237 = por %p235, %p236
    %p239 = scmp.ne.s32.totalorder %s224, %s238
    %p240 = scmp.eq.s32.totalorder %s25, 0
    %p241 = por %p239, %p240
    %s243 = sadd.s32 %s242, 1
    %p246 = scmp.eq.s32.totalorder %s19, 1
    %p247 = scmp.ne.s32.totalorder %s242, %s244
    %p248 = scmp.eq.s32.totalorder %s19, 0
    %p249 = por %p247, %p248
    %p250 = scmp.ne.s32.totalorder %s242, %s244
    %p251 = scmp.eq.s32.totalorder %s24, 1
    %p252 = por %p250, %p251
    %p253 = scmp.ne.s32.totalorder %s244, %s245
    %p254 = scmp.eq.s32.totalorder %s24, 0
    %p255 = por %p253, %p254
    %p256 = scmp.ne.s32.totalorder %s244, %s245
    %p257 = scmp.eq.s32.totalorder %s25, 1
    %p258 = por %p256, %p257
    %p260 = scmp.ne.s32.totalorder %s245, %s259
    %p261 = scmp.eq.s32.totalorder %s25, 0
    %p262 = por %p260, %p261
    %s264 = sadd.s32 %s263, 1
    %p267 = scmp.eq.s32.totalorder %s19, 1
    %p268 = scmp.ne.s32.totalorder %s263, %s265
    %p269 = scmp.eq.s32.totalorder %s19, 0
    %p270 = por %p268, %p269
    %p271 = scmp.ne.s32.totalorder %s263, %s265
    %p272 = scmp.eq.s32.totalorder %s24, 1
    %p273 = por %p271, %p272
    %p274 = scmp.ne.s32.totalorder %s265, %s266
    %p275 = scmp.eq.s32.totalorder %s24, 0
    %p276 = por %p274, %p275
    %p277 = scmp.ne.s32.totalorder %s265, %s266
    %p278 = scmp.eq.s32.totalorder %s25, 1
    %p279 = por %p277, %p278
    %p281 = scmp.ne.s32.totalorder %s266, %s280
    %p282 = scmp.eq.s32.totalorder %s25, 0
    %p283 = por %p281, %p282
    %s285 = sadd.s32 %s284, 1
    %p288 = scmp.eq.s32.totalorder %s19, 1
    %p289 = scmp.ne.s32.totalorder %s284, %s286
    %p290 = scmp.eq.s32.totalorder %s19, 0
    %p291 = por %p289, %p290
    %p292 = scmp.ne.s32.totalorder %s284, %s286
    %p293 = scmp.eq.s32.totalorder %s24, 1
    %p294 = por %p292, %p293
    %p295 = scmp.ne.s32.totalorder %s286, %s287
    %p296 = scmp.eq.s32.totalorder %s24, 0
    %p297 = por %p295, %p296
    %p298 = scmp.ne.s32.totalorder %s286, %s287
    %p299 = scmp.eq.s32.totalorder %s25, 1
    %p300 = por %p298, %p299
    %p302 = scmp.ne.s32.totalorder %s287, %s301
    %p303 = scmp.eq.s32.totalorder %s25, 0
    %p304 = por %p302, %p303
    %s305 = ssub.s32 %s19, %s26
    %p306 = scmp.eq.s32.totalorder %s305, 0
    %s308 = sadd.s32 %s307, 1
    %s309 = scalar_select %p306, %s307, %s308
    %p312 = pneg %p306
    %p313 = scmp.eq.s32.totalorder %s19, 1
    %p314 = por %p312, %p313
    %p315 = scmp.ne.s32.totalorder %s307, %s310
    %p316 = scmp.eq.s32.totalorder %s19, 0
    %p317 = por %p315, %p316
    %p318 = scmp.ne.s32.totalorder %s307, %s310
    %p319 = scmp.eq.s32.totalorder %s24, 1
    %p320 = por %p318, %p319
    %p321 = scmp.ne.s32.totalorder %s310, %s311
    %p322 = scmp.eq.s32.totalorder %s24, 0
    %p323 = por %p321, %p322
    %p324 = scmp.ne.s32.totalorder %s310, %s311
    %p325 = scmp.eq.s32.totalorder %s25, 1
    %p326 = por %p324, %p325
    %p328 = scmp.ne.s32.totalorder %s311, %s327
    %p329 = scmp.eq.s32.totalorder %s25, 0
    %p330 = por %p328, %p329
    %p331 = scmp.le.s32.totalorder 1, %s19
    %p332 = scmp.lt.s32.totalorder %s19, 3
    %p333 = pnand %p331, %p332
    %p334 = pneg %p333
    // Predicated region
    $region9: #{lsk_block.1} parent=5 // pred_check
      _
    $region10: #{lsk_block.1} parent=5 // pred_check_branch
      %336 = sbr.rel (%p333) target = $region12
    $region11: #{lsk_block.1} parent=5 // pred_region
      %s337 = ssub.s32 %s19, 1
      // Predicated region
      $region13: #{lsk_block.1} parent=11 // pred_check
        %p338 = pneg %p66
      $region14: #{lsk_block.1} parent=11 // pred_check_branch
        %340 = sbr.rel (%p338) target = $region16
      $region15: #{lsk_block.1} parent=11 // pred_region
        _
      $region16: #{lsk_block.1} parent=11 // pred_fallthru
        _
      // Predicated region
      $region17: #{lsk_block.1} parent=11 // pred_check
        %p341 = pneg %p87
      $region18: #{lsk_block.1} parent=11 // pred_check_branch
        %343 = sbr.rel (%p341) target = $region20
      $region19: #{lsk_block.1} parent=11 // pred_region
        _
      $region20: #{lsk_block.1} parent=11 // pred_fallthru
        _
      // Predicated region
      $region21: #{lsk_block.1} parent=11 // pred_check
        %p344 = pneg %p108
      $region22: #{lsk_block.1} parent=11 // pred_check_branch
        %346 = sbr.rel (%p344) target = $region24
      $region23: #{lsk_block.1} parent=11 // pred_region
        _
      $region24: #{lsk_block.1} parent=11 // pred_fallthru
        _
      // Predicated region
      $region25: #{lsk_block.1} parent=11 // pred_check
        %p347 = pneg %p129
      $region26: #{lsk_block.1} parent=11 // pred_check_branch
        %349 = sbr.rel (%p347) target = $region28
      $region27: #{lsk_block.1} parent=11 // pred_region
        _
      $region28: #{lsk_block.1} parent=11 // pred_fallthru
        _
      // Predicated region
      $region29: #{lsk_block.1} parent=11 // pred_check
        %p350 = pneg %p150
      $region30: #{lsk_block.1} parent=11 // pred_check_branch
        %352 = sbr.rel (%p350) target = $region32
      $region31: #{lsk_block.1} parent=11 // pred_region
        _
      $region32: #{lsk_block.1} parent=11 // pred_fallthru
        _
      // Predicated region
      $region33: #{lsk_block.1} parent=11 // pred_check
        %p353 = pneg %p171
      $region34: #{lsk_block.1} parent=11 // pred_check_branch
        %355 = sbr.rel (%p353) target = $region36
      $region35: #{lsk_block.1} parent=11 // pred_region
        _
      $region36: #{lsk_block.1} parent=11 // pred_fallthru
        _
      // Predicated region
      $region37: #{lsk_block.1} parent=11 // pred_check
        %p356 = pneg %p192
      $region38: #{lsk_block.1} parent=11 // pred_check_branch
        %358 = sbr.rel (%p356) target = $region40
      $region39: #{lsk_block.1} parent=11 // pred_region
        _
      $region40: #{lsk_block.1} parent=11 // pred_fallthru
        _
      // Predicated region
      $region41: #{lsk_block.1} parent=11 // pred_check
        %p359 = pneg %p213
      $region42: #{lsk_block.1} parent=11 // pred_check_branch
        %361 = sbr.rel (%p359) target = $region44
      $region43: #{lsk_block.1} parent=11 // pred_region
        _
      $region44: #{lsk_block.1} parent=11 // pred_fallthru
        _
      // Predicated region
      $region45: #{lsk_block.1} parent=11 // pred_check
        %p362 = pneg %p234
      $region46: #{lsk_block.1} parent=11 // pred_check_branch
        %364 = sbr.rel (%p362) target = $region48
      $region47: #{lsk_block.1} parent=11 // pred_region
        _
      $region48: #{lsk_block.1} parent=11 // pred_fallthru
        _
      // Predicated region
      $region49: #{lsk_block.1} parent=11 // pred_check
        %p365 = pneg %p255
      $region50: #{lsk_block.1} parent=11 // pred_check_branch
        %367 = sbr.rel (%p365) target = $region52
      $region51: #{lsk_block.1} parent=11 // pred_region
        _
      $region52: #{lsk_block.1} parent=11 // pred_fallthru
        _
      // Predicated region
      $region53: #{lsk_block.1} parent=11 // pred_check
        %p368 = pneg %p276
      $region54: #{lsk_block.1} parent=11 // pred_check_branch
        %370 = sbr.rel (%p368) target = $region56
      $region55: #{lsk_block.1} parent=11 // pred_region
        _
      $region56: #{lsk_block.1} parent=11 // pred_fallthru
        _
      // Predicated region
      $region57: #{lsk_block.1} parent=11 // pred_check
        %p371 = pneg %p297
      $region58: #{lsk_block.1} parent=11 // pred_check_branch
        %373 = sbr.rel (%p371) target = $region60
      $region59: #{lsk_block.1} parent=11 // pred_region
        _
      $region60: #{lsk_block.1} parent=11 // pred_fallthru
        _
    $region12: #{lsk_block.1} parent=5 // pred_fallthru
      _
    %p374 = scmp.lt.s32.totalorder %s19, 2
    // Predicated region
    $region61: #{lsk_block.1} parent=5 // pred_check
      %p375 = pneg %p374
    $region62: #{lsk_block.1} parent=5 // pred_check_branch
      %377 = sbr.rel (%p375) target = $region64
    $region63: #{lsk_block.1} parent=5 // pred_region
      // Predicated region
      $region65: #{lsk_block.1} parent=63 // pred_check
        %p378 = pneg %p39
      $region66: #{lsk_block.1} parent=63 // pred_check_branch
        %380 = sbr.rel (%p378) target = $region68
      $region67: #{lsk_block.1} parent=63 // pred_region
        %p381 = scmp.lt.s32.totalorder %s19, 1
        %s382 = scalar_select %p381, %s19, 1
        %s383 = smul.addr %s382, 2
        %s384 = smul.addr %s383, 8
        %s385 = scalar_lea.vmem %s0, %s384
      $region68: #{lsk_block.1} parent=63 // pred_fallthru
        _
    $region64: #{lsk_block.1} parent=5 // pred_fallthru
      _
    %p386 = scmp.le.s32.totalorder 1, %s19
    %p387 = scmp.lt.s32.totalorder %s19, 3
    %p388 = pnand %p386, %p387
    %p389 = pneg %p388
    // Predicated region
    $region69: #{lsk_block.1} parent=5 // pred_check
      _
    $region70: #{lsk_block.1} parent=5 // pred_check_branch
      %391 = sbr.rel (%p388) target = $region72
    $region71: #{lsk_block.1} parent=5 // pred_region
      %s392 = ssub.s32 %s19, 1
      %p393 = scmp.lt.s32.totalorder %s24, 1
      %s394 = scalar_select %p393, %s24, 1
      %s395 = smul.addr %s394, 2
      %s396 = smul.addr %s395, 8
      %s397 = scalar_lea.vmem %s0, %s396
      %p398 = pneg %p45
      %p399 = pneg %p42
      %p400 = pneg %p66
      %p401 = pneg %p63
      %p402 = pneg %p87
      %p403 = pneg %p84
      %p404 = pneg %p108
      %p405 = pneg %p105
      %p406 = pneg %p129
      %p407 = pneg %p126
      %p408 = pneg %p150
      %p409 = pneg %p147
      %p410 = pneg %p171
      %p411 = pneg %p168
      %p412 = pneg %p192
      %p413 = pneg %p189
      %p414 = pneg %p213
      %p415 = pneg %p210
      %p416 = pneg %p234
      %p417 = pneg %p231
      %p418 = pneg %p255
      %p419 = pneg %p252
      %p420 = pneg %p276
      %p421 = pneg %p273
      %p422 = pneg %p297
      %p423 = pneg %p294
      %p424 = pneg %p323
      %p425 = pneg %p320
      %p426 = scmp.lt.s32.totalorder %s24, 1
      %s427 = scalar_select %p426, %s24, 1
      %s428 = smul.addr %s427, 2
      %s429 = smul.addr %s428, 8
      %s430 = scalar_lea.vmem %s13, %s429
      %p431 = scmp.lt.s32.totalorder %s24, 1
      %s432 = scalar_select %p431, %s24, 1
      %s433 = smul.addr %s432, 2
      %s434 = smul.addr %s433, 8
      %s435 = scalar_lea.vmem %s0, %s434
      %p436 = scmp.lt.s32.totalorder %s24, 1
      %s437 = scalar_select %p436, %s24, 1
      %s438 = smul.addr %s437, 2
      %s439 = smul.addr %s438, 8
      %s440 = scalar_lea.vmem %s13, %s439
      %441 = vst [vmem:[#allocation2] sm:$0x3] 0.0
      %vm442 = vcmask 25600
      %443 = vst.msk [vmem:[#allocation2 + $0x8] sm:$0x3] %vm442, 0.0
      %444 = vst [vmem:[#allocation2 + $0x20] sm:$0xc] 0.0
      %vm445 = vcmask 27650
      %446 = vst.msk [vmem:[#allocation2 + $0x28] sm:$0xc] %vm445, 0.0
      %vm447 = vcmask 15360
      %448 = vst.msk [vmem:[#allocation2] sm:$0xff] %vm447, 0.0
      %449 = vst.msk [vmem:[#allocation2 + $0x10] sm:$0xff] %vm447, 0.0
      %vm450 = vcmask 11264
      %451 = vst.msk [vmem:[#allocation2 + $0x20] sm:$0xf] %vm450, 0.0
      %vm452 = vcmask 31760
      %453 = vst.msk [vmem:[#allocation2 + $0x8] sm:$0xff] %vm452, 0.0
      %454 = vst.msk [vmem:[#allocation2 + $0x18] sm:$0xff] %vm452, 0.0
      %vm455 = vcmask 27664
      %456 = vst.msk [vmem:[#allocation2 + $0x28] sm:$0xf] %vm455, 0.0
      %457 = vst [vmem:[#allocation3] sm:$0xff] 0.0
      %vm458 = vcmask 146432
      %459 = vst.msk [vmem:[#allocation3 + $0x8] sm:$0xff] %vm458, 0.0
      %460 = vst [vmem:[#allocation3 + $0x10] sm:$0x1] 0.0
      %vm461 = vcmask 139264
      %462 = vst.msk [vmem:[#allocation3 + $0x18] sm:$0x1] %vm461, 0.0
      %463 = vst [vmem:[#allocation3 + $0x30] sm:$0xfe] 0.0
      %vm464 = vcmask 146433
      %465 = vst.msk [vmem:[#allocation3 + $0x38] sm:$0xfe] %vm464, 0.0
      %466 = vst [vmem:[#allocation3 + $0x40] sm:$0x3] 0.0
      %vm467 = vcmask 140288
      %468 = vst.msk [vmem:[#allocation3 + $0x48] sm:$0x3] %vm467, 0.0
      %vm469 = vcmask 72704
      %470 = vst.msk [vmem:[#allocation3] sm:$0xff] %vm469, 0.0
      %471 = vst.msk [vmem:[#allocation3 + $0x10] sm:$0xff] %vm469, 0.0
      %472 = vst.msk [vmem:[#allocation3 + $0x20] sm:$0xff] %vm469, 0.0
      %473 = vst.msk [vmem:[#allocation3 + $0x30] sm:$0xff] %vm469, 0.0
      %vm474 = vcmask 66560
      %475 = vst.msk [vmem:[#allocation3 + $0x40] sm:$0x3] %vm474, 0.0
      %vm476 = vcmask 146504
      %477 = vst.msk [vmem:[#allocation3 + $0x8] sm:$0xff] %vm476, 0.0
      %478 = vst.msk [vmem:[#allocation3 + $0x18] sm:$0xff] %vm476, 0.0
      %479 = vst.msk [vmem:[#allocation3 + $0x28] sm:$0xff] %vm476, 0.0
      %480 = vst.msk [vmem:[#allocation3 + $0x38] sm:$0xff] %vm476, 0.0
      %vm481 = vcmask 140360
      %482 = vst.msk [vmem:[#allocation3 + $0x48] sm:$0x3] %vm481, 0.0
      %v483 = vld [vmem:[%s435] sm:$0xff]
      %v484 = vld [vmem:[%s435 + $0x8] sm:$0xff]
      %vm487 = vcmask 1041408
      %v488 = vrot.slane %v483, 6
      %v489 = vrot.slane %v484, 6
      %v490 = vsel %vm487, %v488, %v489
      %491 = vrot.lane.b32.xlu0 %v488, 2
      %v492 = vpop.permute.xlu0 %491
      %493 = vrot.lane.b32.xlu0 %v490, 2
      %v494 = vpop.permute.xlu0 %493
      %495 = vrot.lane.b32.xlu0 %v489, 2
      %v496 = vpop.permute.xlu0 %495
      %vm500 = vcmask 1047570
      %501 = vst.msk [vmem:[#allocation2] sm:$0xfc] %vm500, %v492
      %vm502 = vcmask 15362
      %503 = vst.msk [vmem:[#allocation2 + $0x8] sm:$0xfc] %vm502, %v492
      %vm504 = vcmask 1047568
      %505 = vst.msk [vmem:[#allocation2 + $0x10] sm:$0xff] %vm504, %v494
      %506 = vst.msk [vmem:[#allocation2 + $0x18] sm:$0xff] %vm447, %v494
      %vm507 = vcmask 1041424
      %508 = vst.msk [vmem:[#allocation2 + $0x20] sm:$0x3] %vm507, %v496
      %vm509 = vcmask 9216
      %510 = vst.msk [vmem:[#allocation2 + $0x28] sm:$0x3] %vm509, %v496
      %v511 = vld [vmem:[%s2] sm:$0x1]
      %v513 = vlaneseq
      %v514 = vshrl.u32 %v513, 7
      %v515 = vsub.s32 0, %v514
      %v516 = vrot.slane %v511, %v515
      %v518 = vadd.f32 %v516, 0.0
      %v519 = vld [vmem:[%s1] sm:$0x1]
      %v520 = vld [vmem:[#allocation2] sm:$0xff]
      %v521 = vld [vmem:[#allocation2 + $0x10] sm:$0xff]
      %v522 = vlaneseq
      %v523 = vshrl.u32 %v522, 7
      %v524 = vsub.s32 0, %v523
      %v525 = vrot.slane %v519, %v524
      %v526 = vmul.f32 %v525, %v520
      %v527 = vmul.f32 %v525, %v521
      %v528 = vadd.f32 %v518, %v526
      %v529 = vadd.f32 %v518, %v527
      %v530 = vld [vmem:[%s1 + $0x1] sm:$0x1]
      %v531 = vld [vmem:[#allocation2 + $0x8] sm:$0xff]
      %v532 = vld [vmem:[#allocation2 + $0x18] sm:$0xff]
      %v533 = vlaneseq
      %v534 = vshrl.u32 %v533, 7
      %v535 = vsub.s32 0, %v534
      %v536 = vrot.slane %v530, %v535
      %541 = vrot.lane.b32.xlu0 %v520, 127
      %v542 = vpop.permute.xlu0 %541
      %543 = vrot.lane.b32.xlu0 %v531, 127
      %v544 = vpop.permute.xlu0 %543
      %545 = vrot.lane.b32.xlu0 %v521, 127
      %v546 = vpop.permute.xlu0 %545
      %547 = vrot.lane.b32.xlu0 %v532, 127
      %v548 = vpop.permute.xlu0 %547
      %vm549 = vcmask 1039360
      %v550 = vsel %vm549, %v542, %v544
      %v551 = vsel %vm549, %v546, %v548
      %v554 = vmul.f32 %v536, %v550
      %v555 = vmul.f32 %v536, %v551
      %v556 = vadd.f32 %v528, %v554
      %v557 = vadd.f32 %v529, %v555
      %v558 = vld [vmem:[%s1 + $0x2] sm:$0x1]
      %v559 = vlaneseq
      %v560 = vshrl.u32 %v559, 7
      %v561 = vsub.s32 0, %v560
      %v562 = vrot.slane %v558, %v561
      %563 = vrot.lane.b32.xlu0 %v520, 126
      %v564 = vpop.permute.xlu0 %563
      %565 = vrot.lane.b32.xlu0 %v531, 126
      %v566 = vpop.permute.xlu0 %565
      %567 = vrot.lane.b32.xlu0 %v521, 126
      %v568 = vpop.permute.xlu0 %567
      %569 = vrot.lane.b32.xlu0 %v532, 126
      %v570 = vpop.permute.xlu0 %569
      %vm571 = vcmask 1031168
      %v572 = vsel %vm571, %v564, %v566
      %v573 = vsel %vm571, %v568, %v570
      %v576 = vmul.f32 %v562, %v572
      %v577 = vmul.f32 %v562, %v573
      %v578 = vadd.f32 %v556, %v576
      %v579 = vadd.f32 %v557, %v577
      %v580 = vld [vmem:[%s1 + $0x3] sm:$0x1]
      %v581 = vlaneseq
      %v582 = vshrl.u32 %v581, 7
      %v583 = vsub.s32 0, %v582
      %v584 = vrot.slane %v580, %v583
      %585 = vrot.lane.b32.xlu0 %v520, 125
      %v586 = vpop.permute.xlu0 %585
      %587 = vrot.lane.b32.xlu0 %v531, 125
      %v588 = vpop.permute.xlu0 %587
      %589 = vrot.lane.b32.xlu0 %v521, 125
      %v590 = vpop.permute.xlu0 %589
      %591 = vrot.lane.b32.xlu0 %v532, 125
      %v592 = vpop.permute.xlu0 %591
      %vm593 = vcmask 1022976
      %v594 = vsel %vm593, %v586, %v588
      %v595 = vsel %vm593, %v590, %v592
      %v598 = vmul.f32 %v584, %v594
      %v599 = vmul.f32 %v584, %v595
      %v600 = vadd.f32 %v578, %v598
      %v601 = vadd.f32 %v579, %v599
      %v602 = vld [vmem:[%s1 + $0x4] sm:$0x1]
      %v603 = vlaneseq
      %v604 = vshrl.u32 %v603, 7
      %v605 = vsub.s32 0, %v604
      %v606 = vrot.slane %v602, %v605
      %607 = vrot.lane.b32.xlu0 %v520, 124
      %v608 = vpop.permute.xlu0 %607
      %609 = vrot.lane.b32.xlu0 %v531, 124
      %v610 = vpop.permute.xlu0 %609
      %611 = vrot.lane.b32.xlu0 %v521, 124
      %v612 = vpop.permute.xlu0 %611
      %613 = vrot.lane.b32.xlu0 %v532, 124
      %v614 = vpop.permute.xlu0 %613
      %vm615 = vcmask 1014784
      %v616 = vsel %vm615, %v608, %v610
      %v617 = vsel %vm615, %v612, %v614
      %v620 = vmul.f32 %v606, %v616
      %v621 = vmul.f32 %v606, %v617
      %v622 = vadd.f32 %v600, %v620
      %v623 = vadd.f32 %v601, %v621
      %v624 = vld [vmem:[%s1 + $0x5] sm:$0x1]
      %v625 = vld [vmem:[#allocation2] sm:$0xfe]
      %v626 = vld [vmem:[#allocation2 + $0x20] sm:$0x1]
      %v627 = vlaneseq
      %v628 = vshrl.u32 %v627, 7
      %v629 = vsub.s32 0, %v628
      %v630 = vrot.slane %v624, %v629
      %v631 = vmul.f32 %v630, %v625
      %v632 = vmul.f32 %v630, %v521
      %v633 = vmul.f32 %v630, %v626
      %vm637 = vcmask 1046528
      %v638 = vrot.slane %v631, 1
      %v639 = vrot.slane %v632, 1
      %v640 = vsel %vm637, %v638, %v639
      %v641 = vrot.slane %v633, 1
      %v642 = vsel %vm637, %v639, %v641
      %v645 = vadd.f32 %v622, %v640
      %v646 = vadd.f32 %v623, %v642
      %v647 = vld [vmem:[%s1 + $0x6] sm:$0x1]
      %v648 = vld [vmem:[#allocation2 + $0x8] sm:$0xfe]
      %v649 = vld [vmem:[#allocation2 + $0x28] sm:$0x1]
      %v650 = vlaneseq
      %v651 = vshrl.u32 %v650, 7
      %v652 = vsub.s32 0, %v651
      %v653 = vrot.slane %v647, %v652
      %v658 = vrot.slane %v625, 1
      %v659 = vrot.slane %v521, 1
      %v660 = vsel %vm637, %v658, %v659
      %v661 = vrot.slane %v648, 1
      %v662 = vrot.slane %v532, 1
      %v663 = vsel %vm637, %v661, %v662
      %v664 = vrot.slane %v626, 1
      %v665 = vsel %vm637, %v659, %v664
      %v666 = vrot.slane %v649, 1
      %v667 = vsel %vm637, %v662, %v666
      %668 = vrot.lane.b32.xlu0 %v660, 127
      %v669 = vpop.permute.xlu0 %668
      %670 = vrot.lane.b32.xlu0 %v663, 127
      %v671 = vpop.permute.xlu0 %670
      %672 = vrot.lane.b32.xlu0 %v665, 127
      %v673 = vpop.permute.xlu0 %672
      %674 = vrot.lane.b32.xlu0 %v667, 127
      %v675 = vpop.permute.xlu0 %674
      %v676 = vsel %vm549, %v669, %v671
      %v677 = vsel %vm549, %v673, %v675
      %v680 = vmul.f32 %v653, %v676
      %v681 = vmul.f32 %v653, %v677
      %v682 = vadd.f32 %v645, %v680
      %v683 = vadd.f32 %v646, %v681
      %v684 = vld [vmem:[%s1 + $0x7] sm:$0x1]
      %v685 = vlaneseq
      %v686 = vshrl.u32 %v685, 7
      %v687 = vsub.s32 0, %v686
      %v688 = vrot.slane %v684, %v687
      %689 = vrot.lane.b32.xlu0 %v660, 126
      %v690 = vpop.permute.xlu0 %689
      %691 = vrot.lane.b32.xlu0 %v663, 126
      %v692 = vpop.permute.xlu0 %691
      %693 = vrot.lane.b32.xlu0 %v665, 126
      %v694 = vpop.permute.xlu0 %693
      %695 = vrot.lane.b32.xlu0 %v667, 126
      %v696 = vpop.permute.xlu0 %695
      %v697 = vsel %vm571, %v690, %v692
      %v698 = vsel %vm571, %v694, %v696
      %v701 = vmul.f32 %v688, %v697
      %v702 = vmul.f32 %v688, %v698
      %v703 = vadd.f32 %v682, %v701
      %v704 = vadd.f32 %v683, %v702
      %v705 = vld [vmem:[%s1 + $0x8] sm:$0x1]
      %v706 = vlaneseq
      %v707 = vshrl.u32 %v706, 7
      %v708 = vsub.s32 0, %v707
      %v709 = vrot.slane %v705, %v708
      %710 = vrot.lane.b32.xlu0 %v660, 125
      %v711 = vpop.permute.xlu0 %710
      %712 = vrot.lane.b32.xlu0 %v663, 125
      %v713 = vpop.permute.xlu0 %712
      %714 = vrot.lane.b32.xlu0 %v665, 125
      %v715 = vpop.permute.xlu0 %714
      %716 = vrot.lane.b32.xlu0 %v667, 125
      %v717 = vpop.permute.xlu0 %716
      %v718 = vsel %vm593, %v711, %v713
      %v719 = vsel %vm593, %v715, %v717
      %v722 = vmul.f32 %v709, %v718
      %v723 = vmul.f32 %v709, %v719
      %v724 = vadd.f32 %v703, %v722
      %v725 = vadd.f32 %v704, %v723
      %v726 = vld [vmem:[%s1 + $0x9] sm:$0x1]
      %v727 = vlaneseq
      %v728 = vshrl.u32 %v727, 7
      %v729 = vsub.s32 0, %v728
      %v730 = vrot.slane %v726, %v729
      %731 = vrot.lane.b32.xlu0 %v660, 124
      %v732 = vpop.permute.xlu0 %731
      %733 = vrot.lane.b32.xlu0 %v663, 124
      %v734 = vpop.permute.xlu0 %733
      %735 = vrot.lane.b32.xlu0 %v665, 124
      %v736 = vpop.permute.xlu0 %735
      %737 = vrot.lane.b32.xlu0 %v667, 124
      %v738 = vpop.permute.xlu0 %737
      %v739 = vsel %vm615, %v732, %v734
      %v740 = vsel %vm615, %v736, %v738
      %v743 = vmul.f32 %v730, %v739
      %v744 = vmul.f32 %v730, %v740
      %v745 = vadd.f32 %v724, %v743
      %v746 = vadd.f32 %v725, %v744
      %v747 = vld [vmem:[%s1 + $0xa] sm:$0x1]
      %v748 = vld [vmem:[#allocation2] sm:$0xfc]
      %v749 = vld [vmem:[#allocation2 + $0x20] sm:$0x3]
      %v750 = vlaneseq
      %v751 = vshrl.u32 %v750, 7
      %v752 = vsub.s32 0, %v751
      %v753 = vrot.slane %v747, %v752
      %v754 = vmul.f32 %v753, %v748
      %v755 = vmul.f32 %v753, %v521
      %v756 = vmul.f32 %v753, %v749
      %vm760 = vcmask 1045504
      %v761 = vrot.slane %v754, 2
      %v762 = vrot.slane %v755, 2
      %v763 = vsel %vm760, %v761, %v762
      %v764 = vrot.slane %v756, 2
      %v765 = vsel %vm760, %v762, %v764
      %v768 = vadd.f32 %v745, %v763
      %v769 = vadd.f32 %v746, %v765
      %v770 = vld [vmem:[%s1 + $0xb] sm:$0x1]
      %v771 = vld [vmem:[#allocation2 + $0x8] sm:$0xfc]
      %v772 = vld [vmem:[#allocation2 + $0x28] sm:$0x3]
      %v773 = vlaneseq
      %v774 = vshrl.u32 %v773, 7
      %v775 = vsub.s32 0, %v774
      %v776 = vrot.slane %v770, %v775
      %v781 = vrot.slane %v748, 2
      %v782 = vrot.slane %v521, 2
      %v783 = vsel %vm760, %v781, %v782
      %v784 = vrot.slane %v771, 2
      %v785 = vrot.slane %v532, 2
      %v786 = vsel %vm760, %v784, %v785
      %v787 = vrot.slane %v749, 2
      %v788 = vsel %vm760, %v782, %v787
      %v789 = vrot.slane %v772, 2
      %v790 = vsel %vm760, %v785, %v789
      %791 = vrot.lane.b32.xlu0 %v783, 127
      %v792 = vpop.permute.xlu0 %791
      %793 = vrot.lane.b32.xlu0 %v786, 127
      %v794 = vpop.permute.xlu0 %793
      %795 = vrot.lane.b32.xlu0 %v788, 127
      %v796 = vpop.permute.xlu0 %795
      %797 = vrot.lane.b32.xlu0 %v790, 127
      %v798 = vpop.permute.xlu0 %797
      %v799 = vsel %vm549, %v792, %v794
      %v800 = vsel %vm549, %v796, %v798
      %v803 = vmul.f32 %v776, %v799
      %v804 = vmul.f32 %v776, %v800
      %v805 = vadd.f32 %v768, %v803
      %v806 = vadd.f32 %v769, %v804
      %v807 = vld [vmem:[%s1 + $0xc] sm:$0x1]
      %v808 = vlaneseq
      %v809 = vshrl.u32 %v808, 7
      %v810 = vsub.s32 0, %v809
      %v811 = vrot.slane %v807, %v810
      %812 = vrot.lane.b32.xlu0 %v783, 126
      %v813 = vpop.permute.xlu0 %812
      %814 = vrot.lane.b32.xlu0 %v786, 126
      %v815 = vpop.permute.xlu0 %814
      %816 = vrot.lane.b32.xlu0 %v788, 126
      %v817 = vpop.permute.xlu0 %816
      %818 = vrot.lane.b32.xlu0 %v790, 126
      %v819 = vpop.permute.xlu0 %818
      %v820 = vsel %vm571, %v813, %v815
      %v821 = vsel %vm571, %v817, %v819
      %v824 = vmul.f32 %v811, %v820
      %v825 = vmul.f32 %v811, %v821
      %v826 = vadd.f32 %v805, %v824
      %v827 = vadd.f32 %v806, %v825
      %v828 = vld [vmem:[%s1 + $0xd] sm:$0x1]
      %v829 = vlaneseq
      %v830 = vshrl.u32 %v829, 7
      %v831 = vsub.s32 0, %v830
      %v832 = vrot.slane %v828, %v831
      %833 = vrot.lane.b32.xlu0 %v783, 125
      %v834 = vpop.permute.xlu0 %833
      %835 = vrot.lane.b32.xlu0 %v786, 125
      %v836 = vpop.permute.xlu0 %835
      %837 = vrot.lane.b32.xlu0 %v788, 125
      %v838 = vpop.permute.xlu0 %837
      %839 = vrot.lane.b32.xlu0 %v790, 125
      %v840 = vpop.permute.xlu0 %839
      %v841 = vsel %vm593, %v834, %v836
      %v842 = vsel %vm593, %v838, %v840
      %v845 = vmul.f32 %v832, %v841
      %v846 = vmul.f32 %v832, %v842
      %v847 = vadd.f32 %v826, %v845
      %v848 = vadd.f32 %v827, %v846
      %v849 = vld [vmem:[%s1 + $0xe] sm:$0x1]
      %v850 = vlaneseq
      %v851 = vshrl.u32 %v850, 7
      %v852 = vsub.s32 0, %v851
      %v853 = vrot.slane %v849, %v852
      %854 = vrot.lane.b32.xlu0 %v783, 124
      %v855 = vpop.permute.xlu0 %854
      %856 = vrot.lane.b32.xlu0 %v786, 124
      %v857 = vpop.permute.xlu0 %856
      %858 = vrot.lane.b32.xlu0 %v788, 124
      %v859 = vpop.permute.xlu0 %858
      %860 = vrot.lane.b32.xlu0 %v790, 124
      %v861 = vpop.permute.xlu0 %860
      %v862 = vsel %vm615, %v855, %v857
      %v863 = vsel %vm615, %v859, %v861
      %v866 = vmul.f32 %v853, %v862
      %v867 = vmul.f32 %v853, %v863
      %v868 = vadd.f32 %v847, %v866
      %v869 = vadd.f32 %v848, %v867
      %v870 = vld [vmem:[%s1 + $0xf] sm:$0x1]
      %v871 = vld [vmem:[#allocation2] sm:$0xf8]
      %v872 = vld [vmem:[#allocation2 + $0x20] sm:$0x7]
      %v873 = vlaneseq
      %v874 = vshrl.u32 %v873, 7
      %v875 = vsub.s32 0, %v874
      %v876 = vrot.slane %v870, %v875
      %v877 = vmul.f32 %v876, %v871
      %v878 = vmul.f32 %v876, %v521
      %v879 = vmul.f32 %v876, %v872
      %vm883 = vcmask 1044480
      %v884 = vrot.slane %v877, 3
      %v885 = vrot.slane %v878, 3
      %v886 = vsel %vm883, %v884, %v885
      %v887 = vrot.slane %v879, 3
      %v888 = vsel %vm883, %v885, %v887
      %v891 = vadd.f32 %v868, %v886
      %v892 = vadd.f32 %v869, %v888
      %v893 = vld [vmem:[%s1 + $0x10] sm:$0x1]
      %v894 = vld [vmem:[#allocation2 + $0x8] sm:$0xf8]
      %v895 = vld [vmem:[#allocation2 + $0x28] sm:$0x7]
      %v896 = vlaneseq
      %v897 = vshrl.u32 %v896, 7
      %v898 = vsub.s32 0, %v897
      %v899 = vrot.slane %v893, %v898
      %v904 = vrot.slane %v871, 3
      %v905 = vrot.slane %v521, 3
      %v906 = vsel %vm883, %v904, %v905
      %v907 = vrot.slane %v894, 3
      %v908 = vrot.slane %v532, 3
      %v909 = vsel %vm883, %v907, %v908
      %v910 = vrot.slane %v872, 3
      %v911 = vsel %vm883, %v905, %v910
      %v912 = vrot.slane %v895, 3
      %v913 = vsel %vm883, %v908, %v912
      %914 = vrot.lane.b32.xlu0 %v906, 127
      %v915 = vpop.permute.xlu0 %914
      %916 = vrot.lane.b32.xlu0 %v909, 127
      %v917 = vpop.permute.xlu0 %916
      %918 = vrot.lane.b32.xlu0 %v911, 127
      %v919 = vpop.permute.xlu0 %918
      %920 = vrot.lane.b32.xlu0 %v913, 127
      %v921 = vpop.permute.xlu0 %920
      %v922 = vsel %vm549, %v915, %v917
      %v923 = vsel %vm549, %v919, %v921
      %v926 = vmul.f32 %v899, %v922
      %v927 = vmul.f32 %v899, %v923
      %v928 = vadd.f32 %v891, %v926
      %v929 = vadd.f32 %v892, %v927
      %v930 = vld [vmem:[%s1 + $0x11] sm:$0x1]
      %v931 = vlaneseq
      %v932 = vshrl.u32 %v931, 7
      %v933 = vsub.s32 0, %v932
      %v934 = vrot.slane %v930, %v933
      %935 = vrot.lane.b32.xlu0 %v906, 126
      %v936 = vpop.permute.xlu0 %935
      %937 = vrot.lane.b32.xlu0 %v909, 126
      %v938 = vpop.permute.xlu0 %937
      %939 = vrot.lane.b32.xlu0 %v911, 126
      %v940 = vpop.permute.xlu0 %939
      %941 = vrot.lane.b32.xlu0 %v913, 126
      %v942 = vpop.permute.xlu0 %941
      %v943 = vsel %vm571, %v936, %v938
      %v944 = vsel %vm571, %v940, %v942
      %v947 = vmul.f32 %v934, %v943
      %v948 = vmul.f32 %v934, %v944
      %v949 = vadd.f32 %v928, %v947
      %v950 = vadd.f32 %v929, %v948
      %v951 = vld [vmem:[%s1 + $0x12] sm:$0x1]
      %v952 = vlaneseq
      %v953 = vshrl.u32 %v952, 7
      %v954 = vsub.s32 0, %v953
      %v955 = vrot.slane %v951, %v954
      %956 = vrot.lane.b32.xlu0 %v906, 125
      %v957 = vpop.permute.xlu0 %956
      %958 = vrot.lane.b32.xlu0 %v909, 125
      %v959 = vpop.permute.xlu0 %958
      %960 = vrot.lane.b32.xlu0 %v911, 125
      %v961 = vpop.permute.xlu0 %960
      %962 = vrot.lane.b32.xlu0 %v913, 125
      %v963 = vpop.permute.xlu0 %962
      %v964 = vsel %vm593, %v957, %v959
      %v965 = vsel %vm593, %v961, %v963
      %v968 = vmul.f32 %v955, %v964
      %v969 = vmul.f32 %v955, %v965
      %v970 = vadd.f32 %v949, %v968
      %v971 = vadd.f32 %v950, %v969
      %v972 = vld [vmem:[%s1 + $0x13] sm:$0x1]
      %v973 = vlaneseq
      %v974 = vshrl.u32 %v973, 7
      %v975 = vsub.s32 0, %v974
      %v976 = vrot.slane %v972, %v975
      %977 = vrot.lane.b32.xlu0 %v906, 124
      %v978 = vpop.permute.xlu0 %977
      %979 = vrot.lane.b32.xlu0 %v909, 124
      %v980 = vpop.permute.xlu0 %979
      %981 = vrot.lane.b32.xlu0 %v911, 124
      %v982 = vpop.permute.xlu0 %981
      %983 = vrot.lane.b32.xlu0 %v913, 124
      %v984 = vpop.permute.xlu0 %983
      %v985 = vsel %vm615, %v978, %v980
      %v986 = vsel %vm615, %v982, %v984
      %v989 = vmul.f32 %v976, %v985
      %v990 = vmul.f32 %v976, %v986
      %v991 = vadd.f32 %v970, %v989
      %v992 = vadd.f32 %v971, %v990
      %v993 = vld [vmem:[%s1 + $0x14] sm:$0x1]
      %v994 = vld [vmem:[#allocation2] sm:$0xf0]
      %v995 = vld [vmem:[#allocation2 + $0x20] sm:$0xf]
      %v996 = vlaneseq
      %v997 = vshrl.u32 %v996, 7
      %v998 = vsub.s32 0, %v997
      %v999 = vrot.slane %v993, %v998
      %v1000 = vmul.f32 %v999, %v994
      %v1001 = vmul.f32 %v999, %v521
      %v1002 = vmul.f32 %v999, %v995
      %vm1006 = vcmask 1043456
      %v1007 = vrot.slane %v1000, 4
      %v1008 = vrot.slane %v1001, 4
      %v1009 = vsel %vm1006, %v1007, %v1008
      %v1010 = vrot.slane %v1002, 4
      %v1011 = vsel %vm1006, %v1008, %v1010
      %v1014 = vadd.f32 %v991, %v1009
      %v1015 = vadd.f32 %v992, %v1011
      %v1016 = vld [vmem:[%s1 + $0x15] sm:$0x1]
      %v1017 = vld [vmem:[#allocation2 + $0x8] sm:$0xf0]
      %v1018 = vld [vmem:[#allocation2 + $0x28] sm:$0xf]
      %v1019 = vlaneseq
      %v1020 = vshrl.u32 %v1019, 7
      %v1021 = vsub.s32 0, %v1020
      %v1022 = vrot.slane %v1016, %v1021
      %v1027 = vrot.slane %v994, 4
      %v1028 = vrot.slane %v521, 4
      %v1029 = vsel %vm1006, %v1027, %v1028
      %v1030 = vrot.slane %v1017, 4
      %v1031 = vrot.slane %v532, 4
      %v1032 = vsel %vm1006, %v1030, %v1031
      %v1033 = vrot.slane %v995, 4
      %v1034 = vsel %vm1006, %v1028, %v1033
      %v1035 = vrot.slane %v1018, 4
      %v1036 = vsel %vm1006, %v1031, %v1035
      %1037 = vrot.lane.b32.xlu0 %v1029, 127
      %v1038 = vpop.permute.xlu0 %1037
      %1039 = vrot.lane.b32.xlu0 %v1032, 127
      %v1040 = vpop.permute.xlu0 %1039
      %1041 = vrot.lane.b32.xlu0 %v1034, 127
      %v1042 = vpop.permute.xlu0 %1041
      %1043 = vrot.lane.b32.xlu0 %v1036, 127
      %v1044 = vpop.permute.xlu0 %1043
      %v1045 = vsel %vm549, %v1038, %v1040
      %v1046 = vsel %vm549, %v1042, %v1044
      %v1049 = vmul.f32 %v1022, %v1045
      %v1050 = vmul.f32 %v1022, %v1046
      %v1051 = vadd.f32 %v1014, %v1049
      %v1052 = vadd.f32 %v1015, %v1050
      %v1053 = vld [vmem:[%s1 + $0x16] sm:$0x1]
      %v1054 = vlaneseq
      %v1055 = vshrl.u32 %v1054, 7
      %v1056 = vsub.s32 0, %v1055
      %v1057 = vrot.slane %v1053, %v1056
      %1058 = vrot.lane.b32.xlu0 %v1029, 126
      %v1059 = vpop.permute.xlu0 %1058
      %1060 = vrot.lane.b32.xlu0 %v1032, 126
      %v1061 = vpop.permute.xlu0 %1060
      %1062 = vrot.lane.b32.xlu0 %v1034, 126
      %v1063 = vpop.permute.xlu0 %1062
      %1064 = vrot.lane.b32.xlu0 %v1036, 126
      %v1065 = vpop.permute.xlu0 %1064
      %v1066 = vsel %vm571, %v1059, %v1061
      %v1067 = vsel %vm571, %v1063, %v1065
      %v1070 = vmul.f32 %v1057, %v1066
      %v1071 = vmul.f32 %v1057, %v1067
      %v1072 = vadd.f32 %v1051, %v1070
      %v1073 = vadd.f32 %v1052, %v1071
      %v1074 = vld [vmem:[%s1 + $0x17] sm:$0x1]
      %v1075 = vlaneseq
      %v1076 = vshrl.u32 %v1075, 7
      %v1077 = vsub.s32 0, %v1076
      %v1078 = vrot.slane %v1074, %v1077
      %1079 = vrot.lane.b32.xlu0 %v1029, 125
      %v1080 = vpop.permute.xlu0 %1079
      %1081 = vrot.lane.b32.xlu0 %v1032, 125
      %v1082 = vpop.permute.xlu0 %1081
      %1083 = vrot.lane.b32.xlu0 %v1034, 125
      %v1084 = vpop.permute.xlu0 %1083
      %1085 = vrot.lane.b32.xlu0 %v1036, 125
      %v1086 = vpop.permute.xlu0 %1085
      %v1087 = vsel %vm593, %v1080, %v1082
      %v1088 = vsel %vm593, %v1084, %v1086
      %v1091 = vmul.f32 %v1078, %v1087
      %v1092 = vmul.f32 %v1078, %v1088
      %v1093 = vadd.f32 %v1072, %v1091
      %v1094 = vadd.f32 %v1073, %v1092
      %v1095 = vld [vmem:[%s1 + $0x18] sm:$0x1]
      %v1096 = vlaneseq
      %v1097 = vshrl.u32 %v1096, 7
      %v1098 = vsub.s32 0, %v1097
      %v1099 = vrot.slane %v1095, %v1098
      %1100 = vrot.lane.b32.xlu0 %v1029, 124
      %v1101 = vpop.permute.xlu0 %1100
      %1102 = vrot.lane.b32.xlu0 %v1032, 124
      %v1103 = vpop.permute.xlu0 %1102
      %1104 = vrot.lane.b32.xlu0 %v1034, 124
      %v1105 = vpop.permute.xlu0 %1104
      %1106 = vrot.lane.b32.xlu0 %v1036, 124
      %v1107 = vpop.permute.xlu0 %1106
      %v1108 = vsel %vm615, %v1101, %v1103
      %v1109 = vsel %vm615, %v1105, %v1107
      %v1112 = vmul.f32 %v1099, %v1108
      %v1113 = vmul.f32 %v1099, %v1109
      %v1114 = vadd.f32 %v1093, %v1112
      %v1115 = vadd.f32 %v1094, %v1113
      %vm1118 = vcmask 1040384
      %v1119 = vrot.slane %v1114, 7
      %v1120 = vrot.slane %v1115, 7
      %v1121 = vsel %vm1118, %v1119, %v1120
      %1122 = vrot.lane.b32.xlu0 %v1119, 9
      %v1123 = vpop.permute.xlu0 %1122
      %1124 = vrot.lane.b32.xlu0 %v1121, 9
      %v1125 = vpop.permute.xlu0 %1124
      %1126 = vrot.lane.b32.xlu0 %v1120, 9
      %v1127 = vpop.permute.xlu0 %1126
      %vm1131 = vcmask 1047625
      %1132 = vst.msk [vmem:[#allocation3 + $0x10] sm:$0xfe] %vm1131, %v1123
      %vm1133 = vcmask 72705
      %1134 = vst.msk [vmem:[#allocation3 + $0x18] sm:$0xfe] %vm1133, %v1123
      %vm1135 = vcmask 1047624
      %1136 = vst.msk [vmem:[#allocation3 + $0x20] sm:$0xff] %vm1135, %v1125
      %1137 = vst.msk [vmem:[#allocation3 + $0x28] sm:$0xff] %vm469, %v1125
      %vm1138 = vcmask 1040456
      %1139 = vst.msk [vmem:[#allocation3 + $0x30] sm:$0x1] %vm1138, %v1127
      %vm1140 = vcmask 65536
      %1141 = vst.msk [vmem:[#allocation3 + $0x38] sm:$0x1] %vm1140, %v1127
      %v1142 = vld [vmem:[%s4] sm:$0x1]
      %v1144 = vlaneseq
      %v1145 = vshrl.u32 %v1144, 7
      %v1146 = vsub.s32 0, %v1145
      %v1147 = vrot.slane %v1142, %v1146
      %v1149 = vadd.f32 %v1147, 0.0
      %v1150 = vld [vmem:[%s3] sm:$0x1]
      %v1151 = vld [vmem:[#allocation3] sm:$0xff]
      %v1152 = vld [vmem:[#allocation3 + $0x10] sm:$0xff]
      %v1153 = vlaneseq
      %v1154 = vshrl.u32 %v1153, 7
      %v1155 = vsub.s32 0, %v1154
      %v1156 = vrot.slane %v1150, %v1155
      %v1157 = vmul.f32 %v1156, %v1151
      %v1158 = vmul.f32 %v1156, %v1152
      %v1159 = vadd.f32 %v1149, %v1157
      %v1160 = vadd.f32 %v1149, %v1158
      %v1161 = vld [vmem:[%s3 + $0x1] sm:$0x1]
      %v1162 = vld [vmem:[#allocation3 + $0x8] sm:$0xff]
      %v1163 = vld [vmem:[#allocation3 + $0x18] sm:$0xff]
      %v1164 = vlaneseq
      %v1165 = vshrl.u32 %v1164, 7
      %v1166 = vsub.s32 0, %v1165
      %v1167 = vrot.slane %v1161, %v1166
      %1172 = vrot.lane.b32.xlu0 %v1151, 125
      %v1173 = vpop.permute.xlu0 %1172
      %1174 = vrot.lane.b32.xlu0 %v1162, 125
      %v1175 = vpop.permute.xlu0 %1174
      %1176 = vrot.lane.b32.xlu0 %v1152, 125
      %v1177 = vpop.permute.xlu0 %1176
      %1178 = vrot.lane.b32.xlu0 %v1163, 125
      %v1179 = vpop.permute.xlu0 %1178
      %v1180 = vsel %vm593, %v1173, %v1175
      %v1181 = vsel %vm593, %v1177, %v1179
      %v1184 = vmul.f32 %v1167, %v1180
      %v1185 = vmul.f32 %v1167, %v1181
      %v1186 = vadd.f32 %v1159, %v1184
      %v1187 = vadd.f32 %v1160, %v1185
      %v1188 = vld [vmem:[%s3 + $0x2] sm:$0x1]
      %v1189 = vlaneseq
      %v1190 = vshrl.u32 %v1189, 7
      %v1191 = vsub.s32 0, %v1190
      %v1192 = vrot.slane %v1188, %v1191
      %1193 = vrot.lane.b32.xlu0 %v1151, 122
      %v1194 = vpop.permute.xlu0 %1193
      %1195 = vrot.lane.b32.xlu0 %v1162, 122
      %v1196 = vpop.permute.xlu0 %1195
      %1197 = vrot.lane.b32.xlu0 %v1152, 122
      %v1198 = vpop.permute.xlu0 %1197
      %1199 = vrot.lane.b32.xlu0 %v1163, 122
      %v1200 = vpop.permute.xlu0 %1199
      %vm1201 = vcmask 998400
      %v1202 = vsel %vm1201, %v1194, %v1196
      %v1203 = vsel %vm1201, %v1198, %v1200
      %v1206 = vmul.f32 %v1192, %v1202
      %v1207 = vmul.f32 %v1192, %v1203
      %v1208 = vadd.f32 %v1186, %v1206
      %v1209 = vadd.f32 %v1187, %v1207
      %v1210 = vld [vmem:[%s3 + $0x3] sm:$0x1]
      %v1211 = vlaneseq
      %v1212 = vshrl.u32 %v1211, 7
      %v1213 = vsub.s32 0, %v1212
      %v1214 = vrot.slane %v1210, %v1213
      %1215 = vrot.lane.b32.xlu0 %v1151, 119
      %v1216 = vpop.permute.xlu0 %1215
      %1217 = vrot.lane.b32.xlu0 %v1162, 119
      %v1218 = vpop.permute.xlu0 %1217
      %1219 = vrot.lane.b32.xlu0 %v1152, 119
      %v1220 = vpop.permute.xlu0 %1219
      %1221 = vrot.lane.b32.xlu0 %v1163, 119
      %v1222 = vpop.permute.xlu0 %1221
      %vm1223 = vcmask 973824
      %v1224 = vsel %vm1223, %v1216, %v1218
      %v1225 = vsel %vm1223, %v1220, %v1222
      %v1228 = vmul.f32 %v1214, %v1224
      %v1229 = vmul.f32 %v1214, %v1225
      %v1230 = vadd.f32 %v1208, %v1228
      %v1231 = vadd.f32 %v1209, %v1229
      %v1232 = vld [vmem:[%s3 + $0x4] sm:$0x1]
      %v1233 = vlaneseq
      %v1234 = vshrl.u32 %v1233, 7
      %v1235 = vsub.s32 0, %v1234
      %v1236 = vrot.slane %v1232, %v1235
      %1237 = vrot.lane.b32.xlu0 %v1151, 116
      %v1238 = vpop.permute.xlu0 %1237
      %1239 = vrot.lane.b32.xlu0 %v1162, 116
      %v1240 = vpop.permute.xlu0 %1239
      %1241 = vrot.lane.b32.xlu0 %v1152, 116
      %v1242 = vpop.permute.xlu0 %1241
      %1243 = vrot.lane.b32.xlu0 %v1163, 116
      %v1244 = vpop.permute.xlu0 %1243
      %vm1245 = vcmask 949248
      %v1246 = vsel %vm1245, %v1238, %v1240
      %v1247 = vsel %vm1245, %v1242, %v1244
      %v1250 = vmul.f32 %v1236, %v1246
      %v1251 = vmul.f32 %v1236, %v1247
      %v1252 = vadd.f32 %v1230, %v1250
      %v1253 = vadd.f32 %v1231, %v1251
      %v1254 = vld [vmem:[%s3 + $0x5] sm:$0x1]
      %v1255 = vlaneseq
      %v1256 = vshrl.u32 %v1255, 7
      %v1257 = vsub.s32 0, %v1256
      %v1258 = vrot.slane %v1254, %v1257
      %1259 = vrot.lane.b32.xlu0 %v1151, 113
      %v1260 = vpop.permute.xlu0 %1259
      %1261 = vrot.lane.b32.xlu0 %v1162, 113
      %v1262 = vpop.permute.xlu0 %1261
      %1263 = vrot.lane.b32.xlu0 %v1152, 113
      %v1264 = vpop.permute.xlu0 %1263
      %1265 = vrot.lane.b32.xlu0 %v1163, 113
      %v1266 = vpop.permute.xlu0 %1265
      %vm1267 = vcmask 924672
      %v1268 = vsel %vm1267, %v1260, %v1262
      %v1269 = vsel %vm1267, %v1264, %v1266
      %v1272 = vmul.f32 %v1258, %v1268
      %v1273 = vmul.f32 %v1258, %v1269
      %v1274 = vadd.f32 %v1252, %v1272
      %v1275 = vadd.f32 %v1253, %v1273
      %v1276 = vld [vmem:[%s3 + $0x6] sm:$0x1]
      %v1277 = vlaneseq
      %v1278 = vshrl.u32 %v1277, 7
      %v1279 = vsub.s32 0, %v1278
      %v1280 = vrot.slane %v1276, %v1279
      %1281 = vrot.lane.b32.xlu0 %v1151, 110
      %v1282 = vpop.permute.xlu0 %1281
      %1283 = vrot.lane.b32.xlu0 %v1162, 110
      %v1284 = vpop.permute.xlu0 %1283
      %1285 = vrot.lane.b32.xlu0 %v1152, 110
      %v1286 = vpop.permute.xlu0 %1285
      %1287 = vrot.lane.b32.xlu0 %v1163, 110
      %v1288 = vpop.permute.xlu0 %1287
      %vm1289 = vcmask 900096
      %v1290 = vsel %vm1289, %v1282, %v1284
      %v1291 = vsel %vm1289, %v1286, %v1288
      %v1294 = vmul.f32 %v1280, %v1290
      %v1295 = vmul.f32 %v1280, %v1291
      %v1296 = vadd.f32 %v1274, %v1294
      %v1297 = vadd.f32 %v1275, %v1295
      %v1298 = vld [vmem:[%s3 + $0x7] sm:$0x1]
      %v1299 = vld [vmem:[#allocation3] sm:$0xf8]
      %v1300 = vld [vmem:[#allocation3 + $0x20] sm:$0x7]
      %v1301 = vlaneseq
      %v1302 = vshrl.u32 %v1301, 7
      %v1303 = vsub.s32 0, %v1302
      %v1304 = vrot.slane %v1298, %v1303
      %v1305 = vmul.f32 %v1304, %v1299
      %v1306 = vmul.f32 %v1304, %v1152
      %v1307 = vmul.f32 %v1304, %v1300
      %v1311 = vrot.slane %v1305, 3
      %v1312 = vrot.slane %v1306, 3
      %v1313 = vsel %vm883, %v1311, %v1312
      %v1314 = vrot.slane %v1307, 3
      %v1315 = vsel %vm883, %v1312, %v1314
      %v1318 = vadd.f32 %v1296, %v1313
      %v1319 = vadd.f32 %v1297, %v1315
      %v1320 = vld [vmem:[%s3 + $0x8] sm:$0x1]
      %v1321 = vld [vmem:[#allocation3 + $0x8] sm:$0xf8]
      %v1322 = vld [vmem:[#allocation3 + $0x28] sm:$0x7]
      %v1323 = vlaneseq
      %v1324 = vshrl.u32 %v1323, 7
      %v1325 = vsub.s32 0, %v1324
      %v1326 = vrot.slane %v1320, %v1325
      %v1331 = vrot.slane %v1299, 3
      %v1332 = vrot.slane %v1152, 3
      %v1333 = vsel %vm883, %v1331, %v1332
      %v1334 = vrot.slane %v1321, 3
      %v1335 = vrot.slane %v1163, 3
      %v1336 = vsel %vm883, %v1334, %v1335
      %v1337 = vrot.slane %v1300, 3
      %v1338 = vsel %vm883, %v1332, %v1337
      %v1339 = vrot.slane %v1322, 3
      %v1340 = vsel %vm883, %v1335, %v1339
      %1341 = vrot.lane.b32.xlu0 %v1333, 125
      %v1342 = vpop.permute.xlu0 %1341
      %1343 = vrot.lane.b32.xlu0 %v1336, 125
      %v1344 = vpop.permute.xlu0 %1343
      %1345 = vrot.lane.b32.xlu0 %v1338, 125
      %v1346 = vpop.permute.xlu0 %1345
      %1347 = vrot.lane.b32.xlu0 %v1340, 125
      %v1348 = vpop.permute.xlu0 %1347
      %v1349 = vsel %vm593, %v1342, %v1344
      %v1350 = vsel %vm593, %v1346, %v1348
      %v1353 = vmul.f32 %v1326, %v1349
      %v1354 = vmul.f32 %v1326, %v1350
      %v1355 = vadd.f32 %v1318, %v1353
      %v1356 = vadd.f32 %v1319, %v1354
      %v1357 = vld [vmem:[%s3 + $0x9] sm:$0x1]
      %v1358 = vlaneseq
      %v1359 = vshrl.u32 %v1358, 7
      %v1360 = vsub.s32 0, %v1359
      %v1361 = vrot.slane %v1357, %v1360
      %1362 = vrot.lane.b32.xlu0 %v1333, 122
      %v1363 = vpop.permute.xlu0 %1362
      %1364 = vrot.lane.b32.xlu0 %v1336, 122
      %v1365 = vpop.permute.xlu0 %1364
      %1366 = vrot.lane.b32.xlu0 %v1338, 122
      %v1367 = vpop.permute.xlu0 %1366
      %1368 = vrot.lane.b32.xlu0 %v1340, 122
      %v1369 = vpop.permute.xlu0 %1368
      %v1370 = vsel %vm1201, %v1363, %v1365
      %v1371 = vsel %vm1201, %v1367, %v1369
      %v1374 = vmul.f32 %v1361, %v1370
      %v1375 = vmul.f32 %v1361, %v1371
      %v1376 = vadd.f32 %v1355, %v1374
      %v1377 = vadd.f32 %v1356, %v1375
      %v1378 = vld [vmem:[%s3 + $0xa] sm:$0x1]
      %v1379 = vlaneseq
      %v1380 = vshrl.u32 %v1379, 7
      %v1381 = vsub.s32 0, %v1380
      %v1382 = vrot.slane %v1378, %v1381
      %1383 = vrot.lane.b32.xlu0 %v1333, 119
      %v1384 = vpop.permute.xlu0 %1383
      %1385 = vrot.lane.b32.xlu0 %v1336, 119
      %v1386 = vpop.permute.xlu0 %1385
      %1387 = vrot.lane.b32.xlu0 %v1338, 119
      %v1388 = vpop.permute.xlu0 %1387
      %1389 = vrot.lane.b32.xlu0 %v1340, 119
      %v1390 = vpop.permute.xlu0 %1389
      %v1391 = vsel %vm1223, %v1384, %v1386
      %v1392 = vsel %vm1223, %v1388, %v1390
      %v1395 = vmul.f32 %v1382, %v1391
      %v1396 = vmul.f32 %v1382, %v1392
      %v1397 = vadd.f32 %v1376, %v1395
      %v1398 = vadd.f32 %v1377, %v1396
      %v1399 = vld [vmem:[%s3 + $0xb] sm:$0x1]
      %v1400 = vlaneseq
      %v1401 = vshrl.u32 %v1400, 7
      %v1402 = vsub.s32 0, %v1401
      %v1403 = vrot.slane %v1399, %v1402
      %1404 = vrot.lane.b32.xlu0 %v1333, 116
      %v1405 = vpop.permute.xlu0 %1404
      %1406 = vrot.lane.b32.xlu0 %v1336, 116
      %v1407 = vpop.permute.xlu0 %1406
      %1408 = vrot.lane.b32.xlu0 %v1338, 116
      %v1409 = vpop.permute.xlu0 %1408
      %1410 = vrot.lane.b32.xlu0 %v1340, 116
      %v1411 = vpop.permute.xlu0 %1410
      %v1412 = vsel %vm1245, %v1405, %v1407
      %v1413 = vsel %vm1245, %v1409, %v1411
      %v1416 = vmul.f32 %v1403, %v1412
      %v1417 = vmul.f32 %v1403, %v1413
      %v1418 = vadd.f32 %v1397, %v1416
      %v1419 = vadd.f32 %v1398, %v1417
      %v1420 = vld [vmem:[%s3 + $0xc] sm:$0x1]
      %v1421 = vlaneseq
      %v1422 = vshrl.u32 %v1421, 7
      %v1423 = vsub.s32 0, %v1422
      %v1424 = vrot.slane %v1420, %v1423
      %1425 = vrot.lane.b32.xlu0 %v1333, 113
      %v1426 = vpop.permute.xlu0 %1425
      %1427 = vrot.lane.b32.xlu0 %v1336, 113
      %v1428 = vpop.permute.xlu0 %1427
      %1429 = vrot.lane.b32.xlu0 %v1338, 113
      %v1430 = vpop.permute.xlu0 %1429
      %1431 = vrot.lane.b32.xlu0 %v1340, 113
      %v1432 = vpop.permute.xlu0 %1431
      %v1433 = vsel %vm1267, %v1426, %v1428
      %v1434 = vsel %vm1267, %v1430, %v1432
      %v1437 = vmul.f32 %v1424, %v1433
      %v1438 = vmul.f32 %v1424, %v1434
      %v1439 = vadd.f32 %v1418, %v1437
      %v1440 = vadd.f32 %v1419, %v1438
      %v1441 = vld [vmem:[%s3 + $0xd] sm:$0x1]
      %v1442 = vlaneseq
      %v1443 = vshrl.u32 %v1442, 7
      %v1444 = vsub.s32 0, %v1443
      %v1445 = vrot.slane %v1441, %v1444
      %1446 = vrot.lane.b32.xlu0 %v1333, 110
      %v1447 = vpop.permute.xlu0 %1446
      %1448 = vrot.lane.b32.xlu0 %v1336, 110
      %v1449 = vpop.permute.xlu0 %1448
      %1450 = vrot.lane.b32.xlu0 %v1338, 110
      %v1451 = vpop.permute.xlu0 %1450
      %1452 = vrot.lane.b32.xlu0 %v1340, 110
      %v1453 = vpop.permute.xlu0 %1452
      %v1454 = vsel %vm1289, %v1447, %v1449
      %v1455 = vsel %vm1289, %v1451, %v1453
      %v1458 = vmul.f32 %v1445, %v1454
      %v1459 = vmul.f32 %v1445, %v1455
      %v1460 = vadd.f32 %v1439, %v1458
      %v1461 = vadd.f32 %v1440, %v1459
      %v1462 = vld [vmem:[%s3 + $0xe] sm:$0x1]
      %v1463 = vld [vmem:[#allocation3] sm:$0xc0]
      %v1464 = vld [vmem:[#allocation3 + $0x20] sm:$0x3f]
      %v1465 = vlaneseq
      %v1466 = vshrl.u32 %v1465, 7
      %v1467 = vsub.s32 0, %v1466
      %v1468 = vrot.slane %v1462, %v1467
      %v1469 = vmul.f32 %v1468, %v1463
      %v1470 = vmul.f32 %v1468, %v1152
      %v1471 = vmul.f32 %v1468, %v1464
      %v1475 = vrot.slane %v1469, 6
      %v1476 = vrot.slane %v1470, 6
      %v1477 = vsel %vm487, %v1475, %v1476
      %v1478 = vrot.slane %v1471, 6
      %v1479 = vsel %vm487, %v1476, %v1478
      %v1482 = vadd.f32 %v1460, %v1477
      %v1483 = vadd.f32 %v1461, %v1479
      %v1484 = vld [vmem:[%s3 + $0xf] sm:$0x1]
      %v1485 = vld [vmem:[#allocation3 + $0x8] sm:$0xc0]
      %v1486 = vld [vmem:[#allocation3 + $0x28] sm:$0x3f]
      %v1487 = vlaneseq
      %v1488 = vshrl.u32 %v1487, 7
      %v1489 = vsub.s32 0, %v1488
      %v1490 = vrot.slane %v1484, %v1489
      %v1495 = vrot.slane %v1463, 6
      %v1496 = vrot.slane %v1152, 6
      %v1497 = vsel %vm487, %v1495, %v1496
      %v1498 = vrot.slane %v1485, 6
      %v1499 = vrot.slane %v1163, 6
      %v1500 = vsel %vm487, %v1498, %v1499
      %v1501 = vrot.slane %v1464, 6
      %v1502 = vsel %vm487, %v1496, %v1501
      %v1503 = vrot.slane %v1486, 6
      %v1504 = vsel %vm487, %v1499, %v1503
      %1505 = vrot.lane.b32.xlu0 %v1497, 125
      %v1506 = vpop.permute.xlu0 %1505
      %1507 = vrot.lane.b32.xlu0 %v1500, 125
      %v1508 = vpop.permute.xlu0 %1507
      %1509 = vrot.lane.b32.xlu0 %v1502, 125
      %v1510 = vpop.permute.xlu0 %1509
      %1511 = vrot.lane.b32.xlu0 %v1504, 125
      %v1512 = vpop.permute.xlu0 %1511
      %v1513 = vsel %vm593, %v1506, %v1508
      %v1514 = vsel %vm593, %v1510, %v1512
      %v1517 = vmul.f32 %v1490, %v1513
      %v1518 = vmul.f32 %v1490, %v1514
      %v1519 = vadd.f32 %v1482, %v1517
      %v1520 = vadd.f32 %v1483, %v1518
      %v1521 = vld [vmem:[%s3 + $0x10] sm:$0x1]
      %v1522 = vlaneseq
      %v1523 = vshrl.u32 %v1522, 7
      %v1524 = vsub.s32 0, %v1523
      %v1525 = vrot.slane %v1521, %v1524
      %1526 = vrot.lane.b32.xlu0 %v1497, 122
      %v1527 = vpop.permute.xlu0 %1526
      %1528 = vrot.lane.b32.xlu0 %v1500, 122
      %v1529 = vpop.permute.xlu0 %1528
      %1530 = vrot.lane.b32.xlu0 %v1502, 122
      %v1531 = vpop.permute.xlu0 %1530
      %1532 = vrot.lane.b32.xlu0 %v1504, 122
      %v1533 = vpop.permute.xlu0 %1532
      %v1534 = vsel %vm1201, %v1527, %v1529
      %v1535 = vsel %vm1201, %v1531, %v1533
      %v1538 = vmul.f32 %v1525, %v1534
      %v1539 = vmul.f32 %v1525, %v1535
      %v1540 = vadd.f32 %v1519, %v1538
      %v1541 = vadd.f32 %v1520, %v1539
      %v1542 = vld [vmem:[%s3 + $0x11] sm:$0x1]
      %v1543 = vlaneseq
      %v1544 = vshrl.u32 %v1543, 7
      %v1545 = vsub.s32 0, %v1544
      %v1546 = vrot.slane %v1542, %v1545
      %1547 = vrot.lane.b32.xlu0 %v1497, 119
      %v1548 = vpop.permute.xlu0 %1547
      %1549 = vrot.lane.b32.xlu0 %v1500, 119
      %v1550 = vpop.permute.xlu0 %1549
      %1551 = vrot.lane.b32.xlu0 %v1502, 119
      %v1552 = vpop.permute.xlu0 %1551
      %1553 = vrot.lane.b32.xlu0 %v1504, 119
      %v1554 = vpop.permute.xlu0 %1553
      %v1555 = vsel %vm1223, %v1548, %v1550
      %v1556 = vsel %vm1223, %v1552, %v1554
      %v1559 = vmul.f32 %v1546, %v1555
      %v1560 = vmul.f32 %v1546, %v1556
      %v1561 = vadd.f32 %v1540, %v1559
      %v1562 = vadd.f32 %v1541, %v1560
      %v1563 = vld [vmem:[%s3 + $0x12] sm:$0x1]
      %v1564 = vlaneseq
      %v1565 = vshrl.u32 %v1564, 7
      %v1566 = vsub.s32 0, %v1565
      %v1567 = vrot.slane %v1563, %v1566
      %1568 = vrot.lane.b32.xlu0 %v1497, 116
      %v1569 = vpop.permute.xlu0 %1568
      %1570 = vrot.lane.b32.xlu0 %v1500, 116
      %v1571 = vpop.permute.xlu0 %1570
      %1572 = vrot.lane.b32.xlu0 %v1502, 116
      %v1573 = vpop.permute.xlu0 %1572
      %1574 = vrot.lane.b32.xlu0 %v1504, 116
      %v1575 = vpop.permute.xlu0 %1574
      %v1576 = vsel %vm1245, %v1569, %v1571
      %v1577 = vsel %vm1245, %v1573, %v1575
      %v1580 = vmul.f32 %v1567, %v1576
      %v1581 = vmul.f32 %v1567, %v1577
      %v1582 = vadd.f32 %v1561, %v1580
      %v1583 = vadd.f32 %v1562, %v1581
      %v1584 = vld [vmem:[%s3 + $0x13] sm:$0x1]
      %v1585 = vlaneseq
      %v1586 = vshrl.u32 %v1585, 7
      %v1587 = vsub.s32 0, %v1586
      %v1588 = vrot.slane %v1584, %v1587
      %1589 = vrot.lane.b32.xlu0 %v1497, 113
      %v1590 = vpop.permute.xlu0 %1589
      %1591 = vrot.lane.b32.xlu0 %v1500, 113
      %v1592 = vpop.permute.xlu0 %1591
      %1593 = vrot.lane.b32.xlu0 %v1502, 113
      %v1594 = vpop.permute.xlu0 %1593
      %1595 = vrot.lane.b32.xlu0 %v1504, 113
      %v1596 = vpop.permute.xlu0 %1595
      %v1597 = vsel %vm1267, %v1590, %v1592
      %v1598 = vsel %vm1267, %v1594, %v1596
      %v1601 = vmul.f32 %v1588, %v1597
      %v1602 = vmul.f32 %v1588, %v1598
      %v1603 = vadd.f32 %v1582, %v1601
      %v1604 = vadd.f32 %v1583, %v1602
      %v1605 = vld [vmem:[%s3 + $0x14] sm:$0x1]
      %v1606 = vlaneseq
      %v1607 = vshrl.u32 %v1606, 7
      %v1608 = vsub.s32 0, %v1607
      %v1609 = vrot.slane %v1605, %v1608
      %1610 = vrot.lane.b32.xlu0 %v1497, 110
      %v1611 = vpop.permute.xlu0 %1610
      %1612 = vrot.lane.b32.xlu0 %v1500, 110
      %v1613 = vpop.permute.xlu0 %1612
      %1614 = vrot.lane.b32.xlu0 %v1502, 110
      %v1615 = vpop.permute.xlu0 %1614
      %1616 = vrot.lane.b32.xlu0 %v1504, 110
      %v1617 = vpop.permute.xlu0 %1616
      %v1618 = vsel %vm1289, %v1611, %v1613
      %v1619 = vsel %vm1289, %v1615, %v1617
      %v1622 = vmul.f32 %v1609, %v1618
      %v1623 = vmul.f32 %v1609, %v1619
      %v1624 = vadd.f32 %v1603, %v1622
      %v1625 = vadd.f32 %v1604, %v1623
      %v1626 = vld [vmem:[%s3 + $0x15] sm:$0x1]
      %v1627 = vld [vmem:[#allocation3 + $0x10] sm:$0xfe]
      %v1628 = vld [vmem:[#allocation3 + $0x20] sm:$0xff]
      %v1629 = vld [vmem:[#allocation3 + $0x30] sm:$0x1]
      %v1630 = vlaneseq
      %v1631 = vshrl.u32 %v1630, 7
      %v1632 = vsub.s32 0, %v1631
      %v1633 = vrot.slane %v1626, %v1632
      %v1634 = vmul.f32 %v1633, %v1627
      %v1635 = vmul.f32 %v1633, %v1628
      %v1636 = vmul.f32 %v1633, %v1629
      %v1640 = vrot.slane %v1634, 1
      %v1641 = vrot.slane %v1635, 1
      %v1642 = vsel %vm637, %v1640, %v1641
      %v1643 = vrot.slane %v1636, 1
      %v1644 = vsel %vm637, %v1641, %v1643
      %v1647 = vadd.f32 %v1624, %v1642
      %v1648 = vadd.f32 %v1625, %v1644
      %v1649 = vld [vmem:[%s3 + $0x16] sm:$0x1]
      %v1650 = vld [vmem:[#allocation3 + $0x18] sm:$0xfe]
      %v1651 = vld [vmem:[#allocation3 + $0x28] sm:$0xff]
      %v1652 = vld [vmem:[#allocation3 + $0x38] sm:$0x1]
      %v1653 = vlaneseq
      %v1654 = vshrl.u32 %v1653, 7
      %v1655 = vsub.s32 0, %v1654
      %v1656 = vrot.slane %v1649, %v1655
      %v1663 = vrot.slane %v1627, 1
      %v1664 = vrot.slane %v1628, 1
      %v1665 = vsel %vm637, %v1663, %v1664
      %v1666 = vrot.slane %v1650, 1
      %v1667 = vrot.slane %v1651, 1
      %v1668 = vsel %vm637, %v1666, %v1667
      %v1669 = vrot.slane %v1629, 1
      %v1670 = vsel %vm637, %v1664, %v1669
      %v1671 = vrot.slane %v1652, 1
      %v1672 = vsel %vm637, %v1667, %v1671
      %1673 = vrot.lane.b32.xlu0 %v1665, 125
      %v1674 = vpop.permute.xlu0 %1673
      %1675 = vrot.lane.b32.xlu0 %v1668, 125
      %v1676 = vpop.permute.xlu0 %1675
      %1677 = vrot.lane.b32.xlu0 %v1670, 125
      %v1678 = vpop.permute.xlu0 %1677
      %1679 = vrot.lane.b32.xlu0 %v1672, 125
      %v1680 = vpop.permute.xlu0 %1679
      %v1681 = vsel %vm593, %v1674, %v1676
      %v1682 = vsel %vm593, %v1678, %v1680
      %v1685 = vmul.f32 %v1656, %v1681
      %v1686 = vmul.f32 %v1656, %v1682
      %v1687 = vadd.f32 %v1647, %v1685
      %v1688 = vadd.f32 %v1648, %v1686
      %v1689 = vld [vmem:[%s3 + $0x17] sm:$0x1]
      %v1690 = vlaneseq
      %v1691 = vshrl.u32 %v1690, 7
      %v1692 = vsub.s32 0, %v1691
      %v1693 = vrot.slane %v1689, %v1692
      %1694 = vrot.lane.b32.xlu0 %v1665, 122
      %v1695 = vpop.permute.xlu0 %1694
      %1696 = vrot.lane.b32.xlu0 %v1668, 122
      %v1697 = vpop.permute.xlu0 %1696
      %1698 = vrot.lane.b32.xlu0 %v1670, 122
      %v1699 = vpop.permute.xlu0 %1698
      %1700 = vrot.lane.b32.xlu0 %v1672, 122
      %v1701 = vpop.permute.xlu0 %1700
      %v1702 = vsel %vm1201, %v1695, %v1697
      %v1703 = vsel %vm1201, %v1699, %v1701
      %v1706 = vmul.f32 %v1693, %v1702
      %v1707 = vmul.f32 %v1693, %v1703
      %v1708 = vadd.f32 %v1687, %v1706
      %v1709 = vadd.f32 %v1688, %v1707
      %v1710 = vld [vmem:[%s3 + $0x18] sm:$0x1]
      %v1711 = vlaneseq
      %v1712 = vshrl.u32 %v1711, 7
      %v1713 = vsub.s32 0, %v1712
      %v1714 = vrot.slane %v1710, %v1713
      %1715 = vrot.lane.b32.xlu0 %v1665, 119
      %v1716 = vpop.permute.xlu0 %1715
      %1717 = vrot.lane.b32.xlu0 %v1668, 119
      %v1718 = vpop.permute.xlu0 %1717
      %1719 = vrot.lane.b32.xlu0 %v1670, 119
      %v1720 = vpop.permute.xlu0 %1719
      %1721 = vrot.lane.b32.xlu0 %v1672, 119
      %v1722 = vpop.permute.xlu0 %1721
      %v1723 = vsel %vm1223, %v1716, %v1718
      %v1724 = vsel %vm1223, %v1720, %v1722
      %v1727 = vmul.f32 %v1714, %v1723
      %v1728 = vmul.f32 %v1714, %v1724
      %v1729 = vadd.f32 %v1708, %v1727
      %v1730 = vadd.f32 %v1709, %v1728
      %v1731 = vld [vmem:[%s3 + $0x19] sm:$0x1]
      %v1732 = vlaneseq
      %v1733 = vshrl.u32 %v1732, 7
      %v1734 = vsub.s32 0, %v1733
      %v1735 = vrot.slane %v1731, %v1734
      %1736 = vrot.lane.b32.xlu0 %v1665, 116
      %v1737 = vpop.permute.xlu0 %1736
      %1738 = vrot.lane.b32.xlu0 %v1668, 116
      %v1739 = vpop.permute.xlu0 %1738
      %1740 = vrot.lane.b32.xlu0 %v1670, 116
      %v1741 = vpop.permute.xlu0 %1740
      %1742 = vrot.lane.b32.xlu0 %v1672, 116
      %v1743 = vpop.permute.xlu0 %1742
      %v1744 = vsel %vm1245, %v1737, %v1739
      %v1745 = vsel %vm1245, %v1741, %v1743
      %v1748 = vmul.f32 %v1735, %v1744
      %v1749 = vmul.f32 %v1735, %v1745
      %v1750 = vadd.f32 %v1729, %v1748
      %v1751 = vadd.f32 %v1730, %v1749
      %v1752 = vld [vmem:[%s3 + $0x1a] sm:$0x1]
      %v1753 = vlaneseq
      %v1754 = vshrl.u32 %v1753, 7
      %v1755 = vsub.s32 0, %v1754
      %v1756 = vrot.slane %v1752, %v1755
      %1757 = vrot.lane.b32.xlu0 %v1665, 113
      %v1758 = vpop.permute.xlu0 %1757
      %1759 = vrot.lane.b32.xlu0 %v1668, 113
      %v1760 = vpop.permute.xlu0 %1759
      %1761 = vrot.lane.b32.xlu0 %v1670, 113
      %v1762 = vpop.permute.xlu0 %1761
      %1763 = vrot.lane.b32.xlu0 %v1672, 113
      %v1764 = vpop.permute.xlu0 %1763
      %v1765 = vsel %vm1267, %v1758, %v1760
      %v1766 = vsel %vm1267, %v1762, %v1764
      %v1769 = vmul.f32 %v1756, %v1765
      %v1770 = vmul.f32 %v1756, %v1766
      %v1771 = vadd.f32 %v1750, %v1769
      %v1772 = vadd.f32 %v1751, %v1770
      %v1773 = vld [vmem:[%s3 + $0x1b] sm:$0x1]
      %v1774 = vlaneseq
      %v1775 = vshrl.u32 %v1774, 7
      %v1776 = vsub.s32 0, %v1775
      %v1777 = vrot.slane %v1773, %v1776
      %1778 = vrot.lane.b32.xlu0 %v1665, 110
      %v1779 = vpop.permute.xlu0 %1778
      %1780 = vrot.lane.b32.xlu0 %v1668, 110
      %v1781 = vpop.permute.xlu0 %1780
      %1782 = vrot.lane.b32.xlu0 %v1670, 110
      %v1783 = vpop.permute.xlu0 %1782
      %1784 = vrot.lane.b32.xlu0 %v1672, 110
      %v1785 = vpop.permute.xlu0 %1784
      %v1786 = vsel %vm1289, %v1779, %v1781
      %v1787 = vsel %vm1289, %v1783, %v1785
      %v1790 = vmul.f32 %v1777, %v1786
      %v1791 = vmul.f32 %v1777, %v1787
      %v1792 = vadd.f32 %v1771, %v1790
      %v1793 = vadd.f32 %v1772, %v1791
      %v1794 = vld [vmem:[%s3 + $0x1c] sm:$0x1]
      %v1795 = vld [vmem:[#allocation3 + $0x10] sm:$0xf0]
      %v1796 = vld [vmem:[#allocation3 + $0x30] sm:$0xf]
      %v1797 = vlaneseq
      %v1798 = vshrl.u32 %v1797, 7
      %v1799 = vsub.s32 0, %v1798
      %v1800 = vrot.slane %v1794, %v1799
      %v1801 = vmul.f32 %v1800, %v1795
      %v1802 = vmul.f32 %v1800, %v1628
      %v1803 = vmul.f32 %v1800, %v1796
      %v1807 = vrot.slane %v1801, 4
      %v1808 = vrot.slane %v1802, 4
      %v1809 = vsel %vm1006, %v1807, %v1808
      %v1810 = vrot.slane %v1803, 4
      %v1811 = vsel %vm1006, %v1808, %v1810
      %v1814 = vadd.f32 %v1792, %v1809
      %v1815 = vadd.f32 %v1793, %v1811
      %v1816 = vld [vmem:[%s3 + $0x1d] sm:$0x1]
      %v1817 = vld [vmem:[#allocation3 + $0x18] sm:$0xf0]
      %v1818 = vld [vmem:[#allocation3 + $0x38] sm:$0xf]
      %v1819 = vlaneseq
      %v1820 = vshrl.u32 %v1819, 7
      %v1821 = vsub.s32 0, %v1820
      %v1822 = vrot.slane %v1816, %v1821
      %v1827 = vrot.slane %v1795, 4
      %v1828 = vrot.slane %v1628, 4
      %v1829 = vsel %vm1006, %v1827, %v1828
      %v1830 = vrot.slane %v1817, 4
      %v1831 = vrot.slane %v1651, 4
      %v1832 = vsel %vm1006, %v1830, %v1831
      %v1833 = vrot.slane %v1796, 4
      %v1834 = vsel %vm1006, %v1828, %v1833
      %v1835 = vrot.slane %v1818, 4
      %v1836 = vsel %vm1006, %v1831, %v1835
      %1837 = vrot.lane.b32.xlu0 %v1829, 125
      %v1838 = vpop.permute.xlu0 %1837
      %1839 = vrot.lane.b32.xlu0 %v1832, 125
      %v1840 = vpop.permute.xlu0 %1839
      %1841 = vrot.lane.b32.xlu0 %v1834, 125
      %v1842 = vpop.permute.xlu0 %1841
      %1843 = vrot.lane.b32.xlu0 %v1836, 125
      %v1844 = vpop.permute.xlu0 %1843
      %v1845 = vsel %vm593, %v1838, %v1840
      %v1846 = vsel %vm593, %v1842, %v1844
      %v1849 = vmul.f32 %v1822, %v1845
      %v1850 = vmul.f32 %v1822, %v1846
      %v1851 = vadd.f32 %v1814, %v1849
      %v1852 = vadd.f32 %v1815, %v1850
      %v1853 = vld [vmem:[%s3 + $0x1e] sm:$0x1]
      %v1854 = vlaneseq
      %v1855 = vshrl.u32 %v1854, 7
      %v1856 = vsub.s32 0, %v1855
      %v1857 = vrot.slane %v1853, %v1856
      %1858 = vrot.lane.b32.xlu0 %v1829, 122
      %v1859 = vpop.permute.xlu0 %1858
      %1860 = vrot.lane.b32.xlu0 %v1832, 122
      %v1861 = vpop.permute.xlu0 %1860
      %1862 = vrot.lane.b32.xlu0 %v1834, 122
      %v1863 = vpop.permute.xlu0 %1862
      %1864 = vrot.lane.b32.xlu0 %v1836, 122
      %v1865 = vpop.permute.xlu0 %1864
      %v1866 = vsel %vm1201, %v1859, %v1861
      %v1867 = vsel %vm1201, %v1863, %v1865
      %v1870 = vmul.f32 %v1857, %v1866
      %v1871 = vmul.f32 %v1857, %v1867
      %v1872 = vadd.f32 %v1851, %v1870
      %v1873 = vadd.f32 %v1852, %v1871
      %v1874 = vld [vmem:[%s3 + $0x1f] sm:$0x1]
      %v1875 = vlaneseq
      %v1876 = vshrl.u32 %v1875, 7
      %v1877 = vsub.s32 0, %v1876
      %v1878 = vrot.slane %v1874, %v1877
      %1879 = vrot.lane.b32.xlu0 %v1829, 119
      %v1880 = vpop.permute.xlu0 %1879
      %1881 = vrot.lane.b32.xlu0 %v1832, 119
      %v1882 = vpop.permute.xlu0 %1881
      %1883 = vrot.lane.b32.xlu0 %v1834, 119
      %v1884 = vpop.permute.xlu0 %1883
      %1885 = vrot.lane.b32.xlu0 %v1836, 119
      %v1886 = vpop.permute.xlu0 %1885
      %v1887 = vsel %vm1223, %v1880, %v1882
      %v1888 = vsel %vm1223, %v1884, %v1886
      %v1891 = vmul.f32 %v1878, %v1887
      %v1892 = vmul.f32 %v1878, %v1888
      %v1893 = vadd.f32 %v1872, %v1891
      %v1894 = vadd.f32 %v1873, %v1892
      %v1895 = vld [vmem:[%s3 + $0x20] sm:$0x1]
      %v1896 = vlaneseq
      %v1897 = vshrl.u32 %v1896, 7
      %v1898 = vsub.s32 0, %v1897
      %v1899 = vrot.slane %v1895, %v1898
      %1900 = vrot.lane.b32.xlu0 %v1829, 116
      %v1901 = vpop.permute.xlu0 %1900
      %1902 = vrot.lane.b32.xlu0 %v1832, 116
      %v1903 = vpop.permute.xlu0 %1902
      %1904 = vrot.lane.b32.xlu0 %v1834, 116
      %v1905 = vpop.permute.xlu0 %1904
      %1906 = vrot.lane.b32.xlu0 %v1836, 116
      %v1907 = vpop.permute.xlu0 %1906
      %v1908 = vsel %vm1245, %v1901, %v1903
      %v1909 = vsel %vm1245, %v1905, %v1907
      %v1912 = vmul.f32 %v1899, %v1908
      %v1913 = vmul.f32 %v1899, %v1909
      %v1914 = vadd.f32 %v1893, %v1912
      %v1915 = vadd.f32 %v1894, %v1913
      %v1916 = vld [vmem:[%s3 + $0x21] sm:$0x1]
      %v1917 = vlaneseq
      %v1918 = vshrl.u32 %v1917, 7
      %v1919 = vsub.s32 0, %v1918
      %v1920 = vrot.slane %v1916, %v1919
      %1921 = vrot.lane.b32.xlu0 %v1829, 113
      %v1922 = vpop.permute.xlu0 %1921
      %1923 = vrot.lane.b32.xlu0 %v1832, 113
      %v1924 = vpop.permute.xlu0 %1923
      %1925 = vrot.lane.b32.xlu0 %v1834, 113
      %v1926 = vpop.permute.xlu0 %1925
      %1927 = vrot.lane.b32.xlu0 %v1836, 113
      %v1928 = vpop.permute.xlu0 %1927
      %v1929 = vsel %vm1267, %v1922, %v1924
      %v1930 = vsel %vm1267, %v1926, %v1928
      %v1933 = vmul.f32 %v1920, %v1929
      %v1934 = vmul.f32 %v1920, %v1930
      %v1935 = vadd.f32 %v1914, %v1933
      %v1936 = vadd.f32 %v1915, %v1934
      %v1937 = vld [vmem:[%s3 + $0x22] sm:$0x1]
      %v1938 = vlaneseq
      %v1939 = vshrl.u32 %v1938, 7
      %v1940 = vsub.s32 0, %v1939
      %v1941 = vrot.slane %v1937, %v1940
      %1942 = vrot.lane.b32.xlu0 %v1829, 110
      %v1943 = vpop.permute.xlu0 %1942
      %1944 = vrot.lane.b32.xlu0 %v1832, 110
      %v1945 = vpop.permute.xlu0 %1944
      %1946 = vrot.lane.b32.xlu0 %v1834, 110
      %v1947 = vpop.permute.xlu0 %1946
      %1948 = vrot.lane.b32.xlu0 %v1836, 110
      %v1949 = vpop.permute.xlu0 %1948
      %v1950 = vsel %vm1289, %v1943, %v1945
      %v1951 = vsel %vm1289, %v1947, %v1949
      %v1954 = vmul.f32 %v1941, %v1950
      %v1955 = vmul.f32 %v1941, %v1951
      %v1956 = vadd.f32 %v1935, %v1954
      %v1957 = vadd.f32 %v1936, %v1955
      %v1958 = vld [vmem:[%s3 + $0x23] sm:$0x1]
      %v1959 = vld [vmem:[#allocation3 + $0x10] sm:$0x80]
      %v1960 = vld [vmem:[#allocation3 + $0x30] sm:$0x7f]
      %v1961 = vlaneseq
      %v1962 = vshrl.u32 %v1961, 7
      %v1963 = vsub.s32 0, %v1962
      %v1964 = vrot.slane %v1958, %v1963
      %v1965 = vmul.f32 %v1964, %v1959
      %v1966 = vmul.f32 %v1964, %v1628
      %v1967 = vmul.f32 %v1964, %v1960
      %v1971 = vrot.slane %v1965, 7
      %v1972 = vrot.slane %v1966, 7
      %v1973 = vsel %vm1118, %v1971, %v1972
      %v1974 = vrot.slane %v1967, 7
      %v1975 = vsel %vm1118, %v1972, %v1974
      %v1978 = vadd.f32 %v1956, %v1973
      %v1979 = vadd.f32 %v1957, %v1975
      %v1980 = vld [vmem:[%s3 + $0x24] sm:$0x1]
      %v1981 = vld [vmem:[#allocation3 + $0x18] sm:$0x80]
      %v1982 = vld [vmem:[#allocation3 + $0x38] sm:$0x7f]
      %v1983 = vlaneseq
      %v1984 = vshrl.u32 %v1983, 7
      %v1985 = vsub.s32 0, %v1984
      %v1986 = vrot.slane %v1980, %v1985
      %v1991 = vrot.slane %v1959, 7
      %v1992 = vrot.slane %v1628, 7
      %v1993 = vsel %vm1118, %v1991, %v1992
      %v1994 = vrot.slane %v1981, 7
      %v1995 = vrot.slane %v1651, 7
      %v1996 = vsel %vm1118, %v1994, %v1995
      %v1997 = vrot.slane %v1960, 7
      %v1998 = vsel %vm1118, %v1992, %v1997
      %v1999 = vrot.slane %v1982, 7
      %v2000 = vsel %vm1118, %v1995, %v1999
      %2001 = vrot.lane.b32.xlu0 %v1993, 125
      %v2002 = vpop.permute.xlu0 %2001
      %2003 = vrot.lane.b32.xlu0 %v1996, 125
      %v2004 = vpop.permute.xlu0 %2003
      %2005 = vrot.lane.b32.xlu0 %v1998, 125
      %v2006 = vpop.permute.xlu0 %2005
      %2007 = vrot.lane.b32.xlu0 %v2000, 125
      %v2008 = vpop.permute.xlu0 %2007
      %v2009 = vsel %vm593, %v2002, %v2004
      %v2010 = vsel %vm593, %v2006, %v2008
      %v2013 = vmul.f32 %v1986, %v2009
      %v2014 = vmul.f32 %v1986, %v2010
      %v2015 = vadd.f32 %v1978, %v2013
      %v2016 = vadd.f32 %v1979, %v2014
      %v2017 = vld [vmem:[%s3 + $0x25] sm:$0x1]
      %v2018 = vlaneseq
      %v2019 = vshrl.u32 %v2018, 7
      %v2020 = vsub.s32 0, %v2019
      %v2021 = vrot.slane %v2017, %v2020
      %2022 = vrot.lane.b32.xlu0 %v1993, 122
      %v2023 = vpop.permute.xlu0 %2022
      %2024 = vrot.lane.b32.xlu0 %v1996, 122
      %v2025 = vpop.permute.xlu0 %2024
      %2026 = vrot.lane.b32.xlu0 %v1998, 122
      %v2027 = vpop.permute.xlu0 %2026
      %2028 = vrot.lane.b32.xlu0 %v2000, 122
      %v2029 = vpop.permute.xlu0 %2028
      %v2030 = vsel %vm1201, %v2023, %v2025
      %v2031 = vsel %vm1201, %v2027, %v2029
      %v2034 = vmul.f32 %v2021, %v2030
      %v2035 = vmul.f32 %v2021, %v2031
      %v2036 = vadd.f32 %v2015, %v2034
      %v2037 = vadd.f32 %v2016, %v2035
      %v2038 = vld [vmem:[%s3 + $0x26] sm:$0x1]
      %v2039 = vlaneseq
      %v2040 = vshrl.u32 %v2039, 7
      %v2041 = vsub.s32 0, %v2040
      %v2042 = vrot.slane %v2038, %v2041
      %2043 = vrot.lane.b32.xlu0 %v1993, 119
      %v2044 = vpop.permute.xlu0 %2043
      %2045 = vrot.lane.b32.xlu0 %v1996, 119
      %v2046 = vpop.permute.xlu0 %2045
      %2047 = vrot.lane.b32.xlu0 %v1998, 119
      %v2048 = vpop.permute.xlu0 %2047
      %2049 = vrot.lane.b32.xlu0 %v2000, 119
      %v2050 = vpop.permute.xlu0 %2049
      %v2051 = vsel %vm1223, %v2044, %v2046
      %v2052 = vsel %vm1223, %v2048, %v2050
      %v2055 = vmul.f32 %v2042, %v2051
      %v2056 = vmul.f32 %v2042, %v2052
      %v2057 = vadd.f32 %v2036, %v2055
      %v2058 = vadd.f32 %v2037, %v2056
      %v2059 = vld [vmem:[%s3 + $0x27] sm:$0x1]
      %v2060 = vlaneseq
      %v2061 = vshrl.u32 %v2060, 7
      %v2062 = vsub.s32 0, %v2061
      %v2063 = vrot.slane %v2059, %v2062
      %2064 = vrot.lane.b32.xlu0 %v1993, 116
      %v2065 = vpop.permute.xlu0 %2064
      %2066 = vrot.lane.b32.xlu0 %v1996, 116
      %v2067 = vpop.permute.xlu0 %2066
      %2068 = vrot.lane.b32.xlu0 %v1998, 116
      %v2069 = vpop.permute.xlu0 %2068
      %2070 = vrot.lane.b32.xlu0 %v2000, 116
      %v2071 = vpop.permute.xlu0 %2070
      %v2072 = vsel %vm1245, %v2065, %v2067
      %v2073 = vsel %vm1245, %v2069, %v2071
      %v2076 = vmul.f32 %v2063, %v2072
      %v2077 = vmul.f32 %v2063, %v2073
      %v2078 = vadd.f32 %v2057, %v2076
      %v2079 = vadd.f32 %v2058, %v2077
      %v2080 = vld [vmem:[%s3 + $0x28] sm:$0x1]
      %v2081 = vlaneseq
      %v2082 = vshrl.u32 %v2081, 7
      %v2083 = vsub.s32 0, %v2082
      %v2084 = vrot.slane %v2080, %v2083
      %2085 = vrot.lane.b32.xlu0 %v1993, 113
      %v2086 = vpop.permute.xlu0 %2085
      %2087 = vrot.lane.b32.xlu0 %v1996, 113
      %v2088 = vpop.permute.xlu0 %2087
      %2089 = vrot.lane.b32.xlu0 %v1998, 113
      %v2090 = vpop.permute.xlu0 %2089
      %2091 = vrot.lane.b32.xlu0 %v2000, 113
      %v2092 = vpop.permute.xlu0 %2091
      %v2093 = vsel %vm1267, %v2086, %v2088
      %v2094 = vsel %vm1267, %v2090, %v2092
      %v2097 = vmul.f32 %v2084, %v2093
      %v2098 = vmul.f32 %v2084, %v2094
      %v2099 = vadd.f32 %v2078, %v2097
      %v2100 = vadd.f32 %v2079, %v2098
      %v2101 = vld [vmem:[%s3 + $0x29] sm:$0x1]
      %v2102 = vlaneseq
      %v2103 = vshrl.u32 %v2102, 7
      %v2104 = vsub.s32 0, %v2103
      %v2105 = vrot.slane %v2101, %v2104
      %2106 = vrot.lane.b32.xlu0 %v1993, 110
      %v2107 = vpop.permute.xlu0 %2106
      %2108 = vrot.lane.b32.xlu0 %v1996, 110
      %v2109 = vpop.permute.xlu0 %2108
      %2110 = vrot.lane.b32.xlu0 %v1998, 110
      %v2111 = vpop.permute.xlu0 %2110
      %2112 = vrot.lane.b32.xlu0 %v2000, 110
      %v2113 = vpop.permute.xlu0 %2112
      %v2114 = vsel %vm1289, %v2107, %v2109
      %v2115 = vsel %vm1289, %v2111, %v2113
      %v2118 = vmul.f32 %v2105, %v2114
      %v2119 = vmul.f32 %v2105, %v2115
      %v2120 = vadd.f32 %v2099, %v2118
      %v2121 = vadd.f32 %v2100, %v2119
      %v2122 = vld [vmem:[%s3 + $0x2a] sm:$0x1]
      %v2123 = vld [vmem:[#allocation3 + $0x20] sm:$0xfc]
      %v2124 = vld [vmem:[#allocation3 + $0x30] sm:$0xff]
      %v2125 = vld [vmem:[#allocation3 + $0x40] sm:$0x3]
      %v2126 = vlaneseq
      %v2127 = vshrl.u32 %v2126, 7
      %v2128 = vsub.s32 0, %v2127
      %v2129 = vrot.slane %v2122, %v2128
      %v2130 = vmul.f32 %v2129, %v2123
      %v2131 = vmul.f32 %v2129, %v2124
      %v2132 = vmul.f32 %v2129, %v2125
      %v2136 = vrot.slane %v2130, 2
      %v2137 = vrot.slane %v2131, 2
      %v2138 = vsel %vm760, %v2136, %v2137
      %v2139 = vrot.slane %v2132, 2
      %v2140 = vsel %vm760, %v2137, %v2139
      %v2143 = vadd.f32 %v2120, %v2138
      %v2144 = vadd.f32 %v2121, %v2140
      %v2145 = vld [vmem:[%s3 + $0x2b] sm:$0x1]
      %v2146 = vld [vmem:[#allocation3 + $0x28] sm:$0xfc]
      %v2147 = vld [vmem:[#allocation3 + $0x38] sm:$0xff]
      %v2148 = vld [vmem:[#allocation3 + $0x48] sm:$0x3]
      %v2149 = vlaneseq
      %v2150 = vshrl.u32 %v2149, 7
      %v2151 = vsub.s32 0, %v2150
      %v2152 = vrot.slane %v2145, %v2151
      %v2159 = vrot.slane %v2123, 2
      %v2160 = vrot.slane %v2124, 2
      %v2161 = vsel %vm760, %v2159, %v2160
      %v2162 = vrot.slane %v2146, 2
      %v2163 = vrot.slane %v2147, 2
      %v2164 = vsel %vm760, %v2162, %v2163
      %v2165 = vrot.slane %v2125, 2
      %v2166 = vsel %vm760, %v2160, %v2165
      %v2167 = vrot.slane %v2148, 2
      %v2168 = vsel %vm760, %v2163, %v2167
      %2169 = vrot.lane.b32.xlu0 %v2161, 125
      %v2170 = vpop.permute.xlu0 %2169
      %2171 = vrot.lane.b32.xlu0 %v2164, 125
      %v2172 = vpop.permute.xlu0 %2171
      %2173 = vrot.lane.b32.xlu0 %v2166, 125
      %v2174 = vpop.permute.xlu0 %2173
      %2175 = vrot.lane.b32.xlu0 %v2168, 125
      %v2176 = vpop.permute.xlu0 %2175
      %v2177 = vsel %vm593, %v2170, %v2172
      %v2178 = vsel %vm593, %v2174, %v2176
      %v2181 = vmul.f32 %v2152, %v2177
      %v2182 = vmul.f32 %v2152, %v2178
      %v2183 = vadd.f32 %v2143, %v2181
      %v2184 = vadd.f32 %v2144, %v2182
      %v2185 = vld [vmem:[%s3 + $0x2c] sm:$0x1]
      %v2186 = vlaneseq
      %v2187 = vshrl.u32 %v2186, 7
      %v2188 = vsub.s32 0, %v2187
      %v2189 = vrot.slane %v2185, %v2188
      %2190 = vrot.lane.b32.xlu0 %v2161, 122
      %v2191 = vpop.permute.xlu0 %2190
      %2192 = vrot.lane.b32.xlu0 %v2164, 122
      %v2193 = vpop.permute.xlu0 %2192
      %2194 = vrot.lane.b32.xlu0 %v2166, 122
      %v2195 = vpop.permute.xlu0 %2194
      %2196 = vrot.lane.b32.xlu0 %v2168, 122
      %v2197 = vpop.permute.xlu0 %2196
      %v2198 = vsel %vm1201, %v2191, %v2193
      %v2199 = vsel %vm1201, %v2195, %v2197
      %v2202 = vmul.f32 %v2189, %v2198
      %v2203 = vmul.f32 %v2189, %v2199
      %v2204 = vadd.f32 %v2183, %v2202
      %v2205 = vadd.f32 %v2184, %v2203
      %v2206 = vld [vmem:[%s3 + $0x2d] sm:$0x1]
      %v2207 = vlaneseq
      %v2208 = vshrl.u32 %v2207, 7
      %v2209 = vsub.s32 0, %v2208
      %v2210 = vrot.slane %v2206, %v2209
      %2211 = vrot.lane.b32.xlu0 %v2161, 119
      %v2212 = vpop.permute.xlu0 %2211
      %2213 = vrot.lane.b32.xlu0 %v2164, 119
      %v2214 = vpop.permute.xlu0 %2213
      %2215 = vrot.lane.b32.xlu0 %v2166, 119
      %v2216 = vpop.permute.xlu0 %2215
      %2217 = vrot.lane.b32.xlu0 %v2168, 119
      %v2218 = vpop.permute.xlu0 %2217
      %v2219 = vsel %vm1223, %v2212, %v2214
      %v2220 = vsel %vm1223, %v2216, %v2218
      %v2223 = vmul.f32 %v2210, %v2219
      %v2224 = vmul.f32 %v2210, %v2220
      %v2225 = vadd.f32 %v2204, %v2223
      %v2226 = vadd.f32 %v2205, %v2224
      %v2227 = vld [vmem:[%s3 + $0x2e] sm:$0x1]
      %v2228 = vlaneseq
      %v2229 = vshrl.u32 %v2228, 7
      %v2230 = vsub.s32 0, %v2229
      %v2231 = vrot.slane %v2227, %v2230
      %2232 = vrot.lane.b32.xlu0 %v2161, 116
      %v2233 = vpop.permute.xlu0 %2232
      %2234 = vrot.lane.b32.xlu0 %v2164, 116
      %v2235 = vpop.permute.xlu0 %2234
      %2236 = vrot.lane.b32.xlu0 %v2166, 116
      %v2237 = vpop.permute.xlu0 %2236
      %2238 = vrot.lane.b32.xlu0 %v2168, 116
      %v2239 = vpop.permute.xlu0 %2238
      %v2240 = vsel %vm1245, %v2233, %v2235
      %v2241 = vsel %vm1245, %v2237, %v2239
      %v2244 = vmul.f32 %v2231, %v2240
      %v2245 = vmul.f32 %v2231, %v2241
      %v2246 = vadd.f32 %v2225, %v2244
      %v2247 = vadd.f32 %v2226, %v2245
      %v2248 = vld [vmem:[%s3 + $0x2f] sm:$0x1]
      %v2249 = vlaneseq
      %v2250 = vshrl.u32 %v2249, 7
      %v2251 = vsub.s32 0, %v2250
      %v2252 = vrot.slane %v2248, %v2251
      %2253 = vrot.lane.b32.xlu0 %v2161, 113
      %v2254 = vpop.permute.xlu0 %2253
      %2255 = vrot.lane.b32.xlu0 %v2164, 113
      %v2256 = vpop.permute.xlu0 %2255
      %2257 = vrot.lane.b32.xlu0 %v2166, 113
      %v2258 = vpop.permute.xlu0 %2257
      %2259 = vrot.lane.b32.xlu0 %v2168, 113
      %v2260 = vpop.permute.xlu0 %2259
      %v2261 = vsel %vm1267, %v2254, %v2256
      %v2262 = vsel %vm1267, %v2258, %v2260
      %v2265 = vmul.f32 %v2252, %v2261
      %v2266 = vmul.f32 %v2252, %v2262
      %v2267 = vadd.f32 %v2246, %v2265
      %v2268 = vadd.f32 %v2247, %v2266
      %v2269 = vld [vmem:[%s3 + $0x30] sm:$0x1]
      %v2270 = vlaneseq
      %v2271 = vshrl.u32 %v2270, 7
      %v2272 = vsub.s32 0, %v2271
      %v2273 = vrot.slane %v2269, %v2272
      %2274 = vrot.lane.b32.xlu0 %v2161, 110
      %v2275 = vpop.permute.xlu0 %2274
      %2276 = vrot.lane.b32.xlu0 %v2164, 110
      %v2277 = vpop.permute.xlu0 %2276
      %2278 = vrot.lane.b32.xlu0 %v2166, 110
      %v2279 = vpop.permute.xlu0 %2278
      %2280 = vrot.lane.b32.xlu0 %v2168, 110
      %v2281 = vpop.permute.xlu0 %2280
      %v2282 = vsel %vm1289, %v2275, %v2277
      %v2283 = vsel %vm1289, %v2279, %v2281
      %v2286 = vmul.f32 %v2273, %v2282
      %v2287 = vmul.f32 %v2273, %v2283
      %v2288 = vadd.f32 %v2267, %v2286
      %v2289 = vadd.f32 %v2268, %v2287
      %v2290 = vld [vmem:[%s6] sm:$0x1]
      %v2292 = vlaneseq
      %v2293 = vshrl.u32 %v2292, 7
      %v2294 = vsub.s32 0, %v2293
      %v2295 = vrot.slane %v2290, %v2294
      %v2297 = vadd.f32 %v2295, 0.0
      %v2298 = vld [vmem:[%s8] sm:$0x1]
      %v2300 = vlaneseq
      %v2301 = vshrl.u32 %v2300, 7
      %v2302 = vsub.s32 0, %v2301
      %v2303 = vrot.slane %v2298, %v2302
      %v2305 = vadd.f32 %v2303, 0.0
      %v2306 = vld [vmem:[%s5] sm:$0x1]
      %2307 = vrot.lane.b32.xlu0 %v1114, 16
      %v2308 = vpop.permute.xlu0 %2307
      %2309 = vrot.lane.b32.xlu0 %v1115, 16
      %v2310 = vpop.permute.xlu0 %2309
      %2313 = vrot.lane.b32.xlu0 %v1114, 32
      %v2314 = vpop.permute.xlu0 %2313
      %2315 = vrot.lane.b32.xlu0 %v1115, 32
      %v2316 = vpop.permute.xlu0 %2315
      %2319 = vrot.lane.b32.xlu0 %v1114, 48
      %v2320 = vpop.permute.xlu0 %2319
      %2321 = vrot.lane.b32.xlu0 %v1115, 48
      %v2322 = vpop.permute.xlu0 %2321
      %vm2325 = vcmask 130048
      %v2326 = vsel %vm2325, %v1114, %v2308
      %v2327 = vsel %vm2325, %v1115, %v2310
      %vm2328 = vcmask 261120
      %v2329 = vsel %vm2328, %v2326, %v2314
      %v2330 = vsel %vm2328, %v2327, %v2316
      %vm2331 = vcmask 392192
      %v2332 = vsel %vm2331, %v2329, %v2320
      %v2333 = vsel %vm2331, %v2330, %v2322
      %v2334 = vlaneseq
      %v2335 = vshrl.u32 %v2334, 7
      %v2336 = vsub.s32 0, %v2335
      %v2337 = vrot.slane %v2306, %v2336
      %v2338 = vmul.f32 %v2337, %v2332
      %v2339 = vmul.f32 %v2337, %v2333
      %v2340 = vadd.f32 %v2297, %v2338
      %v2341 = vadd.f32 %v2297, %v2339
      %v2342 = vld [vmem:[%s7] sm:$0x1]
      %2345 = vrot.lane.b32.xlu0 %v2288, 16
      %v2346 = vpop.permute.xlu0 %2345
      %2347 = vrot.lane.b32.xlu0 %v2289, 16
      %v2348 = vpop.permute.xlu0 %2347
      %2351 = vrot.lane.b32.xlu0 %v2288, 32
      %v2352 = vpop.permute.xlu0 %2351
      %2353 = vrot.lane.b32.xlu0 %v2289, 32
      %v2354 = vpop.permute.xlu0 %2353
      %2357 = vrot.lane.b32.xlu0 %v2288, 48
      %v2358 = vpop.permute.xlu0 %2357
      %2359 = vrot.lane.b32.xlu0 %v2289, 48
      %v2360 = vpop.permute.xlu0 %2359
      %v2363 = vsel %vm2325, %v2288, %v2346
      %v2364 = vsel %vm2325, %v2289, %v2348
      %v2365 = vsel %vm2328, %v2363, %v2352
      %v2366 = vsel %vm2328, %v2364, %v2354
      %v2367 = vsel %vm2331, %v2365, %v2358
      %v2368 = vsel %vm2331, %v2366, %v2360
      %v2369 = vlaneseq
      %v2370 = vshrl.u32 %v2369, 7
      %v2371 = vsub.s32 0, %v2370
      %v2372 = vrot.slane %v2342, %v2371
      %v2373 = vmul.f32 %v2372, %v2367
      %v2374 = vmul.f32 %v2372, %v2368
      %v2375 = vadd.f32 %v2305, %v2373
      %v2376 = vadd.f32 %v2305, %v2374
      %v2377 = vld [vmem:[%s5 + $0x1] sm:$0x1]
      %2378 = vrot.lane.b32.xlu0 %v1114, 112
      %v2379 = vpop.permute.xlu0 %2378
      %2380 = vrot.lane.b32.xlu0 %v1115, 112
      %v2381 = vpop.permute.xlu0 %2380
      %v2384 = vsel %vm2325, %v2379, %v1114
      %v2385 = vsel %vm2325, %v2381, %v1115
      %v2386 = vsel %vm2328, %v2384, %v2308
      %v2387 = vsel %vm2328, %v2385, %v2310
      %v2388 = vsel %vm2331, %v2386, %v2314
      %v2389 = vsel %vm2331, %v2387, %v2316
      %v2390 = vlaneseq
      %v2391 = vshrl.u32 %v2390, 7
      %v2392 = vsub.s32 0, %v2391
      %v2393 = vrot.slane %v2377, %v2392
      %v2394 = vmul.f32 %v2393, %v2388
      %v2395 = vmul.f32 %v2393, %v2389
      %v2396 = vadd.f32 %v2340, %v2394
      %v2397 = vadd.f32 %v2341, %v2395
      %v2398 = vld [vmem:[%s7 + $0x1] sm:$0x1]
      %2399 = vrot.lane.b32.xlu0 %v2288, 112
      %v2400 = vpop.permute.xlu0 %2399
      %2401 = vrot.lane.b32.xlu0 %v2289, 112
      %v2402 = vpop.permute.xlu0 %2401
      %v2405 = vsel %vm2325, %v2400, %v2288
      %v2406 = vsel %vm2325, %v2402, %v2289
      %v2407 = vsel %vm2328, %v2405, %v2346
      %v2408 = vsel %vm2328, %v2406, %v2348
      %v2409 = vsel %vm2331, %v2407, %v2352
      %v2410 = vsel %vm2331, %v2408, %v2354
      %v2411 = vlaneseq
      %v2412 = vshrl.u32 %v2411, 7
      %v2413 = vsub.s32 0, %v2412
      %v2414 = vrot.slane %v2398, %v2413
      %v2415 = vmul.f32 %v2414, %v2409
      %v2416 = vmul.f32 %v2414, %v2410
      %v2417 = vadd.f32 %v2375, %v2415
      %v2418 = vadd.f32 %v2376, %v2416
      %v2419 = vld [vmem:[%s5 + $0x2] sm:$0x1]
      %2420 = vrot.lane.b32.xlu0 %v1114, 96
      %v2421 = vpop.permute.xlu0 %2420
      %2422 = vrot.lane.b32.xlu0 %v1115, 96
      %v2423 = vpop.permute.xlu0 %2422
      %v2426 = vsel %vm2325, %v2421, %v2379
      %v2427 = vsel %vm2325, %v2423, %v2381
      %v2428 = vsel %vm2328, %v2426, %v1114
      %v2429 = vsel %vm2328, %v2427, %v1115
      %v2430 = vsel %vm2331, %v2428, %v2308
      %v2431 = vsel %vm2331, %v2429, %v2310
      %v2432 = vlaneseq
      %v2433 = vshrl.u32 %v2432, 7
      %v2434 = vsub.s32 0, %v2433
      %v2435 = vrot.slane %v2419, %v2434
      %v2436 = vmul.f32 %v2435, %v2430
      %v2437 = vmul.f32 %v2435, %v2431
      %v2438 = vadd.f32 %v2396, %v2436
      %v2439 = vadd.f32 %v2397, %v2437
      %v2440 = vld [vmem:[%s7 + $0x2] sm:$0x1]
      %2441 = vrot.lane.b32.xlu0 %v2288, 96
      %v2442 = vpop.permute.xlu0 %2441
      %2443 = vrot.lane.b32.xlu0 %v2289, 96
      %v2444 = vpop.permute.xlu0 %2443
      %v2447 = vsel %vm2325, %v2442, %v2400
      %v2448 = vsel %vm2325, %v2444, %v2402
      %v2449 = vsel %vm2328, %v2447, %v2288
      %v2450 = vsel %vm2328, %v2448, %v2289
      %v2451 = vsel %vm2331, %v2449, %v2346
      %v2452 = vsel %vm2331, %v2450, %v2348
      %v2453 = vlaneseq
      %v2454 = vshrl.u32 %v2453, 7
      %v2455 = vsub.s32 0, %v2454
      %v2456 = vrot.slane %v2440, %v2455
      %v2457 = vmul.f32 %v2456, %v2451
      %v2458 = vmul.f32 %v2456, %v2452
      %v2459 = vadd.f32 %v2417, %v2457
      %v2460 = vadd.f32 %v2418, %v2458
      %v2461 = vld [vmem:[%s5 + $0x3] sm:$0x1]
      %2462 = vrot.lane.b32.xlu0 %v1114, 80
      %v2463 = vpop.permute.xlu0 %2462
      %2464 = vrot.lane.b32.xlu0 %v1115, 80
      %v2465 = vpop.permute.xlu0 %2464
      %v2468 = vsel %vm2325, %v2463, %v2421
      %v2469 = vsel %vm2325, %v2465, %v2423
      %v2470 = vsel %vm2328, %v2468, %v2379
      %v2471 = vsel %vm2328, %v2469, %v2381
      %v2472 = vsel %vm2331, %v2470, %v1114
      %v2473 = vsel %vm2331, %v2471, %v1115
      %v2474 = vlaneseq
      %v2475 = vshrl.u32 %v2474, 7
      %v2476 = vsub.s32 0, %v2475
      %v2477 = vrot.slane %v2461, %v2476
      %v2478 = vmul.f32 %v2477, %v2472
      %v2479 = vmul.f32 %v2477, %v2473
      %v2480 = vadd.f32 %v2438, %v2478
      %v2481 = vadd.f32 %v2439, %v2479
      %v2482 = vld [vmem:[%s7 + $0x3] sm:$0x1]
      %2483 = vrot.lane.b32.xlu0 %v2288, 80
      %v2484 = vpop.permute.xlu0 %2483
      %2485 = vrot.lane.b32.xlu0 %v2289, 80
      %v2486 = vpop.permute.xlu0 %2485
      %v2489 = vsel %vm2325, %v2484, %v2442
      %v2490 = vsel %vm2325, %v2486, %v2444
      %v2491 = vsel %vm2328, %v2489, %v2400
      %v2492 = vsel %vm2328, %v2490, %v2402
      %v2493 = vsel %vm2331, %v2491, %v2288
      %v2494 = vsel %vm2331, %v2492, %v2289
      %v2495 = vlaneseq
      %v2496 = vshrl.u32 %v2495, 7
      %v2497 = vsub.s32 0, %v2496
      %v2498 = vrot.slane %v2482, %v2497
      %v2499 = vmul.f32 %v2498, %v2493
      %v2500 = vmul.f32 %v2498, %v2494
      %v2501 = vadd.f32 %v2459, %v2499
      %v2502 = vadd.f32 %v2460, %v2500
      %v2503 = vld [vmem:[%s5 + $0x4] sm:$0x1]
      %2504 = vrot.lane.b32.xlu0 %v1114, 64
      %v2505 = vpop.permute.xlu0 %2504
      %2506 = vrot.lane.b32.xlu0 %v1115, 64
      %v2507 = vpop.permute.xlu0 %2506
      %v2510 = vsel %vm2325, %v2505, %v2463
      %v2511 = vsel %vm2325, %v2507, %v2465
      %v2512 = vsel %vm2328, %v2510, %v2421
      %v2513 = vsel %vm2328, %v2511, %v2423
      %v2514 = vsel %vm2331, %v2512, %v2379
      %v2515 = vsel %vm2331, %v2513, %v2381
      %v2516 = vlaneseq
      %v2517 = vshrl.u32 %v2516, 7
      %v2518 = vsub.s32 0, %v2517
      %v2519 = vrot.slane %v2503, %v2518
      %v2520 = vmul.f32 %v2519, %v2514
      %v2521 = vmul.f32 %v2519, %v2515
      %v2522 = vadd.f32 %v2480, %v2520
      %v2523 = vadd.f32 %v2481, %v2521
      %v2524 = vld [vmem:[%s7 + $0x4] sm:$0x1]
      %2525 = vrot.lane.b32.xlu0 %v2288, 64
      %v2526 = vpop.permute.xlu0 %2525
      %2527 = vrot.lane.b32.xlu0 %v2289, 64
      %v2528 = vpop.permute.xlu0 %2527
      %v2531 = vsel %vm2325, %v2526, %v2484
      %v2532 = vsel %vm2325, %v2528, %v2486
      %v2533 = vsel %vm2328, %v2531, %v2442
      %v2534 = vsel %vm2328, %v2532, %v2444
      %v2535 = vsel %vm2331, %v2533, %v2400
      %v2536 = vsel %vm2331, %v2534, %v2402
      %v2537 = vlaneseq
      %v2538 = vshrl.u32 %v2537, 7
      %v2539 = vsub.s32 0, %v2538
      %v2540 = vrot.slane %v2524, %v2539
      %v2541 = vmul.f32 %v2540, %v2535
      %v2542 = vmul.f32 %v2540, %v2536
      %v2543 = vadd.f32 %v2501, %v2541
      %v2544 = vadd.f32 %v2502, %v2542
      %v2545 = vld [vmem:[%s5 + $0x5] sm:$0x1]
      %v2546 = vsel %vm2325, %v2320, %v2505
      %v2547 = vsel %vm2325, %v2322, %v2507
      %v2548 = vsel %vm2328, %v2546, %v2463
      %v2549 = vsel %vm2328, %v2547, %v2465
      %v2550 = vsel %vm2331, %v2548, %v2421
      %v2551 = vsel %vm2331, %v2549, %v2423
      %v2552 = vlaneseq
      %v2553 = vshrl.u32 %v2552, 7
      %v2554 = vsub.s32 0, %v2553
      %v2555 = vrot.slane %v2545, %v2554
      %v2556 = vmul.f32 %v2555, %v2550
      %v2557 = vmul.f32 %v2555, %v2551
      %v2558 = vadd.f32 %v2522, %v2556
      %v2559 = vadd.f32 %v2523, %v2557
      %v2560 = vld [vmem:[%s7 + $0x5] sm:$0x1]
      %v2561 = vsel %vm2325, %v2358, %v2526
      %v2562 = vsel %vm2325, %v2360, %v2528
      %v2563 = vsel %vm2328, %v2561, %v2484
      %v2564 = vsel %vm2328, %v2562, %v2486
      %v2565 = vsel %vm2331, %v2563, %v2442
      %v2566 = vsel %vm2331, %v2564, %v2444
      %v2567 = vlaneseq
      %v2568 = vshrl.u32 %v2567, 7
      %v2569 = vsub.s32 0, %v2568
      %v2570 = vrot.slane %v2560, %v2569
      %v2571 = vmul.f32 %v2570, %v2565
      %v2572 = vmul.f32 %v2570, %v2566
      %v2573 = vadd.f32 %v2543, %v2571
      %v2574 = vadd.f32 %v2544, %v2572
      %v2575 = vld [vmem:[%s5 + $0x6] sm:$0x1]
      %v2576 = vsel %vm2325, %v2314, %v2320
      %v2577 = vsel %vm2325, %v2316, %v2322
      %v2578 = vsel %vm2328, %v2576, %v2505
      %v2579 = vsel %vm2328, %v2577, %v2507
      %v2580 = vsel %vm2331, %v2578, %v2463
      %v2581 = vsel %vm2331, %v2579, %v2465
      %v2582 = vlaneseq
      %v2583 = vshrl.u32 %v2582, 7
      %v2584 = vsub.s32 0, %v2583
      %v2585 = vrot.slane %v2575, %v2584
      %v2586 = vmul.f32 %v2585, %v2580
      %v2587 = vmul.f32 %v2585, %v2581
      %v2588 = vadd.f32 %v2558, %v2586
      %v2589 = vadd.f32 %v2559, %v2587
      %v2590 = vld [vmem:[%s7 + $0x6] sm:$0x1]
      %v2591 = vsel %vm2325, %v2352, %v2358
      %v2592 = vsel %vm2325, %v2354, %v2360
      %v2593 = vsel %vm2328, %v2591, %v2526
      %v2594 = vsel %vm2328, %v2592, %v2528
      %v2595 = vsel %vm2331, %v2593, %v2484
      %v2596 = vsel %vm2331, %v2594, %v2486
      %v2597 = vlaneseq
      %v2598 = vshrl.u32 %v2597, 7
      %v2599 = vsub.s32 0, %v2598
      %v2600 = vrot.slane %v2590, %v2599
      %v2601 = vmul.f32 %v2600, %v2595
      %v2602 = vmul.f32 %v2600, %v2596
      %v2603 = vadd.f32 %v2573, %v2601
      %v2604 = vadd.f32 %v2574, %v2602
      %v2605 = vld [vmem:[%s5 + $0x7] sm:$0x1]
      %v2606 = vsel %vm2325, %v2308, %v2314
      %v2607 = vsel %vm2325, %v2310, %v2316
      %v2608 = vsel %vm2328, %v2606, %v2320
      %v2609 = vsel %vm2328, %v2607, %v2322
      %v2610 = vsel %vm2331, %v2608, %v2505
      %v2611 = vsel %vm2331, %v2609, %v2507
      %v2612 = vlaneseq
      %v2613 = vshrl.u32 %v2612, 7
      %v2614 = vsub.s32 0, %v2613
      %v2615 = vrot.slane %v2605, %v2614
      %v2616 = vmul.f32 %v2615, %v2610
      %v2617 = vmul.f32 %v2615, %v2611
      %v2618 = vadd.f32 %v2588, %v2616
      %v2619 = vadd.f32 %v2589, %v2617
      %v2620 = vld [vmem:[%s7 + $0x7] sm:$0x1]
      %v2621 = vsel %vm2325, %v2346, %v2352
      %v2622 = vsel %vm2325, %v2348, %v2354
      %v2623 = vsel %vm2328, %v2621, %v2358
      %v2624 = vsel %vm2328, %v2622, %v2360
      %v2625 = vsel %vm2331, %v2623, %v2526
      %v2626 = vsel %vm2331, %v2624, %v2528
      %v2627 = vlaneseq
      %v2628 = vshrl.u32 %v2627, 7
      %v2629 = vsub.s32 0, %v2628
      %v2630 = vrot.slane %v2620, %v2629
      %v2631 = vmul.f32 %v2630, %v2625
      %v2632 = vmul.f32 %v2630, %v2626
      %v2633 = vadd.f32 %v2603, %v2631
      %v2634 = vadd.f32 %v2604, %v2632
      %v2635 = vadd.f32 %v2618, %v2633
      %v2636 = vadd.f32 %v2619, %v2634
      %v2637 = vmax.f32 %v2618, %v2633
      %v2638 = vmax.f32 %v2619, %v2634
      %2641 = vrot.lane.b32.xlu0 %v2635, 112
      %v2642 = vpop.permute.xlu0 %2641
      %2643 = vrot.lane.b32.xlu0 %v2636, 112
      %v2644 = vpop.permute.xlu0 %2643
      %v2647 = vadd.f32 %v2635, %v2642
      %v2648 = vadd.f32 %v2636, %v2644
      %2651 = vrot.lane.b32.xlu0 %v2637, 112
      %v2652 = vpop.permute.xlu0 %2651
      %2653 = vrot.lane.b32.xlu0 %v2638, 112
      %v2654 = vpop.permute.xlu0 %2653
      %v2657 = vmax.f32 %v2637, %v2652
      %v2658 = vmax.f32 %v2638, %v2654
      %2659 = vrot.lane.b32.xlu0 %v2635, 96
      %v2660 = vpop.permute.xlu0 %2659
      %2661 = vrot.lane.b32.xlu0 %v2636, 96
      %v2662 = vpop.permute.xlu0 %2661
      %v2665 = vadd.f32 %v2647, %v2660
      %v2666 = vadd.f32 %v2648, %v2662
      %2667 = vrot.lane.b32.xlu0 %v2637, 96
      %v2668 = vpop.permute.xlu0 %2667
      %2669 = vrot.lane.b32.xlu0 %v2638, 96
      %v2670 = vpop.permute.xlu0 %2669
      %v2673 = vmax.f32 %v2657, %v2668
      %v2674 = vmax.f32 %v2658, %v2670
      %2675 = vrot.lane.b32.xlu0 %v2635, 80
      %v2676 = vpop.permute.xlu0 %2675
      %2677 = vrot.lane.b32.xlu0 %v2636, 80
      %v2678 = vpop.permute.xlu0 %2677
      %v2681 = vadd.f32 %v2665, %v2676
      %v2682 = vadd.f32 %v2666, %v2678
      %2683 = vrot.lane.b32.xlu0 %v2637, 80
      %v2684 = vpop.permute.xlu0 %2683
      %2685 = vrot.lane.b32.xlu0 %v2638, 80
      %v2686 = vpop.permute.xlu0 %2685
      %v2689 = vmax.f32 %v2673, %v2684
      %v2690 = vmax.f32 %v2674, %v2686
      %v2691 = vmul.f32 %v2681, 0.125
      %v2692 = vmul.f32 %v2682, 0.125
      %vm2693 = vcmask 785408
      %2694 = vst.msk [vmem:[#allocation4] sm:$0xff] %vm2693, 0.0
      %2695 = vst.msk [vmem:[#allocation4 + $0x8] sm:$0xff] %vm2693, 0.0
      %vm2696 = vcmask 783360
      %2697 = vst.msk [vmem:[#allocation4 + $0x10] sm:$0x3f] %vm2696, 0.0
      %2700 = vrot.lane.b32.xlu0 %v2691, 3
      %v2701 = vpop.permute.xlu0 %2700
      %2702 = vrot.lane.b32.xlu0 %v2692, 3
      %v2703 = vpop.permute.xlu0 %2702
      %vm2706 = vcmask 154648
      %2707 = vst.msk [vmem:[#allocation4 + $0x3] sm:$0xff] %vm2706, %v2701
      %2708 = vst.msk [vmem:[#allocation4 + $0xb] sm:$0xff] %vm2706, %v2703
      %2711 = vrot.lane.b32.xlu0 %v2689, 25
      %v2712 = vpop.permute.xlu0 %2711
      %2713 = vrot.lane.b32.xlu0 %v2690, 25
      %v2714 = vpop.permute.xlu0 %2713
      %vm2717 = vcmask 335048
      %2718 = vst.msk [vmem:[#allocation4 + $0x3] sm:$0xff] %vm2717, %v2712
      %2719 = vst.msk [vmem:[#allocation4 + $0xb] sm:$0xff] %vm2717, %v2714
      %2720 = vrot.lane.b32.xlu0 %v2691, 47
      %v2721 = vpop.permute.xlu0 %2720
      %2722 = vrot.lane.b32.xlu0 %v2692, 47
      %v2723 = vpop.permute.xlu0 %2722
      %vm2726 = vcmask 515448
      %2727 = vst.msk [vmem:[#allocation4 + $0x3] sm:$0xff] %vm2726, %v2721
      %2728 = vst.msk [vmem:[#allocation4 + $0xb] sm:$0xff] %vm2726, %v2723
      %2729 = vrot.lane.b32.xlu0 %v2689, 69
      %v2730 = vpop.permute.xlu0 %2729
      %2731 = vrot.lane.b32.xlu0 %v2690, 69
      %v2732 = vpop.permute.xlu0 %2731
      %vm2735 = vcmask 695848
      %2736 = vst.msk [vmem:[#allocation4 + $0x3] sm:$0xff] %vm2735, %v2730
      %2737 = vst.msk [vmem:[#allocation4 + $0xb] sm:$0xff] %vm2735, %v2732
      %v2738 = vld [vmem:[%s10] sm:$0x1]
      %v2740 = vlaneseq
      %v2741 = vshrl.u32 %v2740, 7
      %v2742 = vsub.s32 0, %v2741
      %v2743 = vrot.slane %v2738, %v2742
      %v2745 = vadd.f32 %v2743, 0.0
      %v2746 = vld [vmem:[%s9] sm:$0x1]
      %v2747 = vld [vmem:[#allocation4] sm:$0xff]
      %v2748 = vld [vmem:[#allocation4 + $0x8] sm:$0xff]
      %v2749 = vlaneseq
      %v2750 = vshrl.u32 %v2749, 7
      %v2751 = vsub.s32 0, %v2750
      %v2752 = vrot.slane %v2746, %v2751
      %v2753 = vmul.f32 %v2752, %v2747
      %v2754 = vmul.f32 %v2752, %v2748
      %v2755 = vadd.f32 %v2745, %v2753
      %v2756 = vadd.f32 %v2745, %v2754
      %v2757 = vld [vmem:[%s9 + $0x1] sm:$0x1]
      %v2758 = vlaneseq
      %v2759 = vshrl.u32 %v2758, 7
      %v2760 = vsub.s32 0, %v2759
      %v2761 = vrot.slane %v2757, %v2760
      %2764 = vrot.lane.b32.xlu0 %v2747, 127
      %v2765 = vpop.permute.xlu0 %2764
      %2766 = vrot.lane.b32.xlu0 %v2748, 127
      %v2767 = vpop.permute.xlu0 %2766
      %v2770 = vmul.f32 %v2761, %v2765
      %v2771 = vmul.f32 %v2761, %v2767
      %v2772 = vadd.f32 %v2755, %v2770
      %v2773 = vadd.f32 %v2756, %v2771
      %v2774 = vld [vmem:[%s9 + $0x2] sm:$0x1]
      %v2775 = vlaneseq
      %v2776 = vshrl.u32 %v2775, 7
      %v2777 = vsub.s32 0, %v2776
      %v2778 = vrot.slane %v2774, %v2777
      %2779 = vrot.lane.b32.xlu0 %v2747, 126
      %v2780 = vpop.permute.xlu0 %2779
      %2781 = vrot.lane.b32.xlu0 %v2748, 126
      %v2782 = vpop.permute.xlu0 %2781
      %v2785 = vmul.f32 %v2778, %v2780
      %v2786 = vmul.f32 %v2778, %v2782
      %v2787 = vadd.f32 %v2772, %v2785
      %v2788 = vadd.f32 %v2773, %v2786
      %v2789 = vld [vmem:[%s9 + $0x3] sm:$0x1]
      %v2790 = vlaneseq
      %v2791 = vshrl.u32 %v2790, 7
      %v2792 = vsub.s32 0, %v2791
      %v2793 = vrot.slane %v2789, %v2792
      %2794 = vrot.lane.b32.xlu0 %v2747, 125
      %v2795 = vpop.permute.xlu0 %2794
      %2796 = vrot.lane.b32.xlu0 %v2748, 125
      %v2797 = vpop.permute.xlu0 %2796
      %v2800 = vmul.f32 %v2793, %v2795
      %v2801 = vmul.f32 %v2793, %v2797
      %v2802 = vadd.f32 %v2787, %v2800
      %v2803 = vadd.f32 %v2788, %v2801
      %v2804 = vld [vmem:[%s9 + $0x4] sm:$0x1]
      %v2805 = vlaneseq
      %v2806 = vshrl.u32 %v2805, 7
      %v2807 = vsub.s32 0, %v2806
      %v2808 = vrot.slane %v2804, %v2807
      %2809 = vrot.lane.b32.xlu0 %v2747, 124
      %v2810 = vpop.permute.xlu0 %2809
      %2811 = vrot.lane.b32.xlu0 %v2748, 124
      %v2812 = vpop.permute.xlu0 %2811
      %v2815 = vmul.f32 %v2808, %v2810
      %v2816 = vmul.f32 %v2808, %v2812
      %v2817 = vadd.f32 %v2802, %v2815
      %v2818 = vadd.f32 %v2803, %v2816
      %v2819 = vld [vmem:[%s9 + $0x5] sm:$0x1]
      %v2820 = vlaneseq
      %v2821 = vshrl.u32 %v2820, 7
      %v2822 = vsub.s32 0, %v2821
      %v2823 = vrot.slane %v2819, %v2822
      %2824 = vrot.lane.b32.xlu0 %v2747, 123
      %v2825 = vpop.permute.xlu0 %2824
      %2826 = vrot.lane.b32.xlu0 %v2748, 123
      %v2827 = vpop.permute.xlu0 %2826
      %v2830 = vmul.f32 %v2823, %v2825
      %v2831 = vmul.f32 %v2823, %v2827
      %v2832 = vadd.f32 %v2817, %v2830
      %v2833 = vadd.f32 %v2818, %v2831
      %v2834 = vld [vmem:[%s9 + $0x6] sm:$0x1]
      %v2835 = vlaneseq
      %v2836 = vshrl.u32 %v2835, 7
      %v2837 = vsub.s32 0, %v2836
      %v2838 = vrot.slane %v2834, %v2837
      %2839 = vrot.lane.b32.xlu0 %v2747, 122
      %v2840 = vpop.permute.xlu0 %2839
      %2841 = vrot.lane.b32.xlu0 %v2748, 122
      %v2842 = vpop.permute.xlu0 %2841
      %v2845 = vmul.f32 %v2838, %v2840
      %v2846 = vmul.f32 %v2838, %v2842
      %v2847 = vadd.f32 %v2832, %v2845
      %v2848 = vadd.f32 %v2833, %v2846
      %v2849 = vld [vmem:[%s9 + $0x7] sm:$0x1]
      %v2850 = vld [vmem:[#allocation4 + $0x1] sm:$0xff]
      %v2851 = vld [vmem:[#allocation4 + $0x9] sm:$0xff]
      %v2852 = vlaneseq
      %v2853 = vshrl.u32 %v2852, 7
      %v2854 = vsub.s32 0, %v2853
      %v2855 = vrot.slane %v2849, %v2854
      %v2856 = vmul.f32 %v2855, %v2850
      %v2857 = vmul.f32 %v2855, %v2851
      %v2858 = vadd.f32 %v2847, %v2856
      %v2859 = vadd.f32 %v2848, %v2857
      %v2860 = vld [vmem:[%s9 + $0x8] sm:$0x1]
      %v2861 = vlaneseq
      %v2862 = vshrl.u32 %v2861, 7
      %v2863 = vsub.s32 0, %v2862
      %v2864 = vrot.slane %v2860, %v2863
      %2867 = vrot.lane.b32.xlu0 %v2850, 127
      %v2868 = vpop.permute.xlu0 %2867
      %2869 = vrot.lane.b32.xlu0 %v2851, 127
      %v2870 = vpop.permute.xlu0 %2869
      %v2873 = vmul.f32 %v2864, %v2868
      %v2874 = vmul.f32 %v2864, %v2870
      %v2875 = vadd.f32 %v2858, %v2873
      %v2876 = vadd.f32 %v2859, %v2874
      %v2877 = vld [vmem:[%s9 + $0x9] sm:$0x1]
      %v2878 = vlaneseq
      %v2879 = vshrl.u32 %v2878, 7
      %v2880 = vsub.s32 0, %v2879
      %v2881 = vrot.slane %v2877, %v2880
      %2882 = vrot.lane.b32.xlu0 %v2850, 126
      %v2883 = vpop.permute.xlu0 %2882
      %2884 = vrot.lane.b32.xlu0 %v2851, 126
      %v2885 = vpop.permute.xlu0 %2884
      %v2888 = vmul.f32 %v2881, %v2883
      %v2889 = vmul.f32 %v2881, %v2885
      %v2890 = vadd.f32 %v2875, %v2888
      %v2891 = vadd.f32 %v2876, %v2889
      %v2892 = vld [vmem:[%s9 + $0xa] sm:$0x1]
      %v2893 = vlaneseq
      %v2894 = vshrl.u32 %v2893, 7
      %v2895 = vsub.s32 0, %v2894
      %v2896 = vrot.slane %v2892, %v2895
      %2897 = vrot.lane.b32.xlu0 %v2850, 125
      %v2898 = vpop.permute.xlu0 %2897
      %2899 = vrot.lane.b32.xlu0 %v2851, 125
      %v2900 = vpop.permute.xlu0 %2899
      %v2903 = vmul.f32 %v2896, %v2898
      %v2904 = vmul.f32 %v2896, %v2900
      %v2905 = vadd.f32 %v2890, %v2903
      %v2906 = vadd.f32 %v2891, %v2904
      %v2907 = vld [vmem:[%s9 + $0xb] sm:$0x1]
      %v2908 = vlaneseq
      %v2909 = vshrl.u32 %v2908, 7
      %v2910 = vsub.s32 0, %v2909
      %v2911 = vrot.slane %v2907, %v2910
      %2912 = vrot.lane.b32.xlu0 %v2850, 124
      %v2913 = vpop.permute.xlu0 %2912
      %2914 = vrot.lane.b32.xlu0 %v2851, 124
      %v2915 = vpop.permute.xlu0 %2914
      %v2918 = vmul.f32 %v2911, %v2913
      %v2919 = vmul.f32 %v2911, %v2915
      %v2920 = vadd.f32 %v2905, %v2918
      %v2921 = vadd.f32 %v2906, %v2919
      %v2922 = vld [vmem:[%s9 + $0xc] sm:$0x1]
      %v2923 = vlaneseq
      %v2924 = vshrl.u32 %v2923, 7
      %v2925 = vsub.s32 0, %v2924
      %v2926 = vrot.slane %v2922, %v2925
      %2927 = vrot.lane.b32.xlu0 %v2850, 123
      %v2928 = vpop.permute.xlu0 %2927
      %2929 = vrot.lane.b32.xlu0 %v2851, 123
      %v2930 = vpop.permute.xlu0 %2929
      %v2933 = vmul.f32 %v2926, %v2928
      %v2934 = vmul.f32 %v2926, %v2930
      %v2935 = vadd.f32 %v2920, %v2933
      %v2936 = vadd.f32 %v2921, %v2934
      %v2937 = vld [vmem:[%s9 + $0xd] sm:$0x1]
      %v2938 = vlaneseq
      %v2939 = vshrl.u32 %v2938, 7
      %v2940 = vsub.s32 0, %v2939
      %v2941 = vrot.slane %v2937, %v2940
      %2942 = vrot.lane.b32.xlu0 %v2850, 122
      %v2943 = vpop.permute.xlu0 %2942
      %2944 = vrot.lane.b32.xlu0 %v2851, 122
      %v2945 = vpop.permute.xlu0 %2944
      %v2948 = vmul.f32 %v2941, %v2943
      %v2949 = vmul.f32 %v2941, %v2945
      %v2950 = vadd.f32 %v2935, %v2948
      %v2951 = vadd.f32 %v2936, %v2949
      %v2952 = vld [vmem:[%s9 + $0xe] sm:$0x1]
      %v2953 = vld [vmem:[#allocation4 + $0x2] sm:$0xff]
      %v2954 = vld [vmem:[#allocation4 + $0xa] sm:$0xff]
      %v2955 = vlaneseq
      %v2956 = vshrl.u32 %v2955, 7
      %v2957 = vsub.s32 0, %v2956
      %v2958 = vrot.slane %v2952, %v2957
      %v2959 = vmul.f32 %v2958, %v2953
      %v2960 = vmul.f32 %v2958, %v2954
      %v2961 = vadd.f32 %v2950, %v2959
      %v2962 = vadd.f32 %v2951, %v2960
      %v2963 = vld [vmem:[%s9 + $0xf] sm:$0x1]
      %v2964 = vlaneseq
      %v2965 = vshrl.u32 %v2964, 7
      %v2966 = vsub.s32 0, %v2965
      %v2967 = vrot.slane %v2963, %v2966
      %2970 = vrot.lane.b32.xlu0 %v2953, 127
      %v2971 = vpop.permute.xlu0 %2970
      %2972 = vrot.lane.b32.xlu0 %v2954, 127
      %v2973 = vpop.permute.xlu0 %2972
      %v2976 = vmul.f32 %v2967, %v2971
      %v2977 = vmul.f32 %v2967, %v2973
      %v2978 = vadd.f32 %v2961, %v2976
      %v2979 = vadd.f32 %v2962, %v2977
      %v2980 = vld [vmem:[%s9 + $0x10] sm:$0x1]
      %v2981 = vlaneseq
      %v2982 = vshrl.u32 %v2981, 7
      %v2983 = vsub.s32 0, %v2982
      %v2984 = vrot.slane %v2980, %v2983
      %2985 = vrot.lane.b32.xlu0 %v2953, 126
      %v2986 = vpop.permute.xlu0 %2985
      %2987 = vrot.lane.b32.xlu0 %v2954, 126
      %v2988 = vpop.permute.xlu0 %2987
      %v2991 = vmul.f32 %v2984, %v2986
      %v2992 = vmul.f32 %v2984, %v2988
      %v2993 = vadd.f32 %v2978, %v2991
      %v2994 = vadd.f32 %v2979, %v2992
      %v2995 = vld [vmem:[%s9 + $0x11] sm:$0x1]
      %v2996 = vlaneseq
      %v2997 = vshrl.u32 %v2996, 7
      %v2998 = vsub.s32 0, %v2997
      %v2999 = vrot.slane %v2995, %v2998
      %3000 = vrot.lane.b32.xlu0 %v2953, 125
      %v3001 = vpop.permute.xlu0 %3000
      %3002 = vrot.lane.b32.xlu0 %v2954, 125
      %v3003 = vpop.permute.xlu0 %3002
      %v3006 = vmul.f32 %v2999, %v3001
      %v3007 = vmul.f32 %v2999, %v3003
      %v3008 = vadd.f32 %v2993, %v3006
      %v3009 = vadd.f32 %v2994, %v3007
      %v3010 = vld [vmem:[%s9 + $0x12] sm:$0x1]
      %v3011 = vlaneseq
      %v3012 = vshrl.u32 %v3011, 7
      %v3013 = vsub.s32 0, %v3012
      %v3014 = vrot.slane %v3010, %v3013
      %3015 = vrot.lane.b32.xlu0 %v2953, 124
      %v3016 = vpop.permute.xlu0 %3015
      %3017 = vrot.lane.b32.xlu0 %v2954, 124
      %v3018 = vpop.permute.xlu0 %3017
      %v3021 = vmul.f32 %v3014, %v3016
      %v3022 = vmul.f32 %v3014, %v3018
      %v3023 = vadd.f32 %v3008, %v3021
      %v3024 = vadd.f32 %v3009, %v3022
      %v3025 = vld [vmem:[%s9 + $0x13] sm:$0x1]
      %v3026 = vlaneseq
      %v3027 = vshrl.u32 %v3026, 7
      %v3028 = vsub.s32 0, %v3027
      %v3029 = vrot.slane %v3025, %v3028
      %3030 = vrot.lane.b32.xlu0 %v2953, 123
      %v3031 = vpop.permute.xlu0 %3030
      %3032 = vrot.lane.b32.xlu0 %v2954, 123
      %v3033 = vpop.permute.xlu0 %3032
      %v3036 = vmul.f32 %v3029, %v3031
      %v3037 = vmul.f32 %v3029, %v3033
      %v3038 = vadd.f32 %v3023, %v3036
      %v3039 = vadd.f32 %v3024, %v3037
      %v3040 = vld [vmem:[%s9 + $0x14] sm:$0x1]
      %v3041 = vlaneseq
      %v3042 = vshrl.u32 %v3041, 7
      %v3043 = vsub.s32 0, %v3042
      %v3044 = vrot.slane %v3040, %v3043
      %3045 = vrot.lane.b32.xlu0 %v2953, 122
      %v3046 = vpop.permute.xlu0 %3045
      %3047 = vrot.lane.b32.xlu0 %v2954, 122
      %v3048 = vpop.permute.xlu0 %3047
      %v3051 = vmul.f32 %v3044, %v3046
      %v3052 = vmul.f32 %v3044, %v3048
      %v3053 = vadd.f32 %v3038, %v3051
      %v3054 = vadd.f32 %v3039, %v3052
      %v3055 = vld [vmem:[%s9 + $0x15] sm:$0x1]
      %v3056 = vld [vmem:[#allocation4 + $0x3] sm:$0xff]
      %v3057 = vld [vmem:[#allocation4 + $0xb] sm:$0xff]
      %v3058 = vlaneseq
      %v3059 = vshrl.u32 %v3058, 7
      %v3060 = vsub.s32 0, %v3059
      %v3061 = vrot.slane %v3055, %v3060
      %v3062 = vmul.f32 %v3061, %v3056
      %v3063 = vmul.f32 %v3061, %v3057
      %v3064 = vadd.f32 %v3053, %v3062
      %v3065 = vadd.f32 %v3054, %v3063
      %v3066 = vld [vmem:[%s9 + $0x16] sm:$0x1]
      %v3067 = vlaneseq
      %v3068 = vshrl.u32 %v3067, 7
      %v3069 = vsub.s32 0, %v3068
      %v3070 = vrot.slane %v3066, %v3069
      %3073 = vrot.lane.b32.xlu0 %v3056, 127
      %v3074 = vpop.permute.xlu0 %3073
      %3075 = vrot.lane.b32.xlu0 %v3057, 127
      %v3076 = vpop.permute.xlu0 %3075
      %v3079 = vmul.f32 %v3070, %v3074
      %v3080 = vmul.f32 %v3070, %v3076
      %v3081 = vadd.f32 %v3064, %v3079
      %v3082 = vadd.f32 %v3065, %v3080
      %v3083 = vld [vmem:[%s9 + $0x17] sm:$0x1]
      %v3084 = vlaneseq
      %v3085 = vshrl.u32 %v3084, 7
      %v3086 = vsub.s32 0, %v3085
      %v3087 = vrot.slane %v3083, %v3086
      %3088 = vrot.lane.b32.xlu0 %v3056, 126
      %v3089 = vpop.permute.xlu0 %3088
      %3090 = vrot.lane.b32.xlu0 %v3057, 126
      %v3091 = vpop.permute.xlu0 %3090
      %v3094 = vmul.f32 %v3087, %v3089
      %v3095 = vmul.f32 %v3087, %v3091
      %v3096 = vadd.f32 %v3081, %v3094
      %v3097 = vadd.f32 %v3082, %v3095
      %v3098 = vld [vmem:[%s9 + $0x18] sm:$0x1]
      %v3099 = vlaneseq
      %v3100 = vshrl.u32 %v3099, 7
      %v3101 = vsub.s32 0, %v3100
      %v3102 = vrot.slane %v3098, %v3101
      %3103 = vrot.lane.b32.xlu0 %v3056, 125
      %v3104 = vpop.permute.xlu0 %3103
      %3105 = vrot.lane.b32.xlu0 %v3057, 125
      %v3106 = vpop.permute.xlu0 %3105
      %v3109 = vmul.f32 %v3102, %v3104
      %v3110 = vmul.f32 %v3102, %v3106
      %v3111 = vadd.f32 %v3096, %v3109
      %v3112 = vadd.f32 %v3097, %v3110
      %v3113 = vld [vmem:[%s9 + $0x19] sm:$0x1]
      %v3114 = vlaneseq
      %v3115 = vshrl.u32 %v3114, 7
      %v3116 = vsub.s32 0, %v3115
      %v3117 = vrot.slane %v3113, %v3116
      %3118 = vrot.lane.b32.xlu0 %v3056, 124
      %v3119 = vpop.permute.xlu0 %3118
      %3120 = vrot.lane.b32.xlu0 %v3057, 124
      %v3121 = vpop.permute.xlu0 %3120
      %v3124 = vmul.f32 %v3117, %v3119
      %v3125 = vmul.f32 %v3117, %v3121
      %v3126 = vadd.f32 %v3111, %v3124
      %v3127 = vadd.f32 %v3112, %v3125
      %v3128 = vld [vmem:[%s9 + $0x1a] sm:$0x1]
      %v3129 = vlaneseq
      %v3130 = vshrl.u32 %v3129, 7
      %v3131 = vsub.s32 0, %v3130
      %v3132 = vrot.slane %v3128, %v3131
      %3133 = vrot.lane.b32.xlu0 %v3056, 123
      %v3134 = vpop.permute.xlu0 %3133
      %3135 = vrot.lane.b32.xlu0 %v3057, 123
      %v3136 = vpop.permute.xlu0 %3135
      %v3139 = vmul.f32 %v3132, %v3134
      %v3140 = vmul.f32 %v3132, %v3136
      %v3141 = vadd.f32 %v3126, %v3139
      %v3142 = vadd.f32 %v3127, %v3140
      %v3143 = vld [vmem:[%s9 + $0x1b] sm:$0x1]
      %v3144 = vlaneseq
      %v3145 = vshrl.u32 %v3144, 7
      %v3146 = vsub.s32 0, %v3145
      %v3147 = vrot.slane %v3143, %v3146
      %3148 = vrot.lane.b32.xlu0 %v3056, 122
      %v3149 = vpop.permute.xlu0 %3148
      %3150 = vrot.lane.b32.xlu0 %v3057, 122
      %v3151 = vpop.permute.xlu0 %3150
      %v3154 = vmul.f32 %v3147, %v3149
      %v3155 = vmul.f32 %v3147, %v3151
      %v3156 = vadd.f32 %v3141, %v3154
      %v3157 = vadd.f32 %v3142, %v3155
      %v3158 = vld [vmem:[%s9 + $0x1c] sm:$0x1]
      %v3159 = vld [vmem:[#allocation4 + $0x4] sm:$0xff]
      %v3160 = vld [vmem:[#allocation4 + $0xc] sm:$0xff]
      %v3161 = vlaneseq
      %v3162 = vshrl.u32 %v3161, 7
      %v3163 = vsub.s32 0, %v3162
      %v3164 = vrot.slane %v3158, %v3163
      %v3165 = vmul.f32 %v3164, %v3159
      %v3166 = vmul.f32 %v3164, %v3160
      %v3167 = vadd.f32 %v3156, %v3165
      %v3168 = vadd.f32 %v3157, %v3166
      %v3169 = vld [vmem:[%s9 + $0x1d] sm:$0x1]
      %v3170 = vlaneseq
      %v3171 = vshrl.u32 %v3170, 7
      %v3172 = vsub.s32 0, %v3171
      %v3173 = vrot.slane %v3169, %v3172
      %3176 = vrot.lane.b32.xlu0 %v3159, 127
      %v3177 = vpop.permute.xlu0 %3176
      %3178 = vrot.lane.b32.xlu0 %v3160, 127
      %v3179 = vpop.permute.xlu0 %3178
      %v3182 = vmul.f32 %v3173, %v3177
      %v3183 = vmul.f32 %v3173, %v3179
      %v3184 = vadd.f32 %v3167, %v3182
      %v3185 = vadd.f32 %v3168, %v3183
      %v3186 = vld [vmem:[%s9 + $0x1e] sm:$0x1]
      %v3187 = vlaneseq
      %v3188 = vshrl.u32 %v3187, 7
      %v3189 = vsub.s32 0, %v3188
      %v3190 = vrot.slane %v3186, %v3189
      %3191 = vrot.lane.b32.xlu0 %v3159, 126
      %v3192 = vpop.permute.xlu0 %3191
      %3193 = vrot.lane.b32.xlu0 %v3160, 126
      %v3194 = vpop.permute.xlu0 %3193
      %v3197 = vmul.f32 %v3190, %v3192
      %v3198 = vmul.f32 %v3190, %v3194
      %v3199 = vadd.f32 %v3184, %v3197
      %v3200 = vadd.f32 %v3185, %v3198
      %v3201 = vld [vmem:[%s9 + $0x1f] sm:$0x1]
      %v3202 = vlaneseq
      %v3203 = vshrl.u32 %v3202, 7
      %v3204 = vsub.s32 0, %v3203
      %v3205 = vrot.slane %v3201, %v3204
      %3206 = vrot.lane.b32.xlu0 %v3159, 125
      %v3207 = vpop.permute.xlu0 %3206
      %3208 = vrot.lane.b32.xlu0 %v3160, 125
      %v3209 = vpop.permute.xlu0 %3208
      %v3212 = vmul.f32 %v3205, %v3207
      %v3213 = vmul.f32 %v3205, %v3209
      %v3214 = vadd.f32 %v3199, %v3212
      %v3215 = vadd.f32 %v3200, %v3213
      %v3216 = vld [vmem:[%s9 + $0x20] sm:$0x1]
      %v3217 = vlaneseq
      %v3218 = vshrl.u32 %v3217, 7
      %v3219 = vsub.s32 0, %v3218
      %v3220 = vrot.slane %v3216, %v3219
      %3221 = vrot.lane.b32.xlu0 %v3159, 124
      %v3222 = vpop.permute.xlu0 %3221
      %3223 = vrot.lane.b32.xlu0 %v3160, 124
      %v3224 = vpop.permute.xlu0 %3223
      %v3227 = vmul.f32 %v3220, %v3222
      %v3228 = vmul.f32 %v3220, %v3224
      %v3229 = vadd.f32 %v3214, %v3227
      %v3230 = vadd.f32 %v3215, %v3228
      %v3231 = vld [vmem:[%s9 + $0x21] sm:$0x1]
      %v3232 = vlaneseq
      %v3233 = vshrl.u32 %v3232, 7
      %v3234 = vsub.s32 0, %v3233
      %v3235 = vrot.slane %v3231, %v3234
      %3236 = vrot.lane.b32.xlu0 %v3159, 123
      %v3237 = vpop.permute.xlu0 %3236
      %3238 = vrot.lane.b32.xlu0 %v3160, 123
      %v3239 = vpop.permute.xlu0 %3238
      %v3242 = vmul.f32 %v3235, %v3237
      %v3243 = vmul.f32 %v3235, %v3239
      %v3244 = vadd.f32 %v3229, %v3242
      %v3245 = vadd.f32 %v3230, %v3243
      %v3246 = vld [vmem:[%s9 + $0x22] sm:$0x1]
      %v3247 = vlaneseq
      %v3248 = vshrl.u32 %v3247, 7
      %v3249 = vsub.s32 0, %v3248
      %v3250 = vrot.slane %v3246, %v3249
      %3251 = vrot.lane.b32.xlu0 %v3159, 122
      %v3252 = vpop.permute.xlu0 %3251
      %3253 = vrot.lane.b32.xlu0 %v3160, 122
      %v3254 = vpop.permute.xlu0 %3253
      %v3257 = vmul.f32 %v3250, %v3252
      %v3258 = vmul.f32 %v3250, %v3254
      %v3259 = vadd.f32 %v3244, %v3257
      %v3260 = vadd.f32 %v3245, %v3258
      %v3261 = vld [vmem:[%s9 + $0x23] sm:$0x1]
      %v3262 = vld [vmem:[#allocation4 + $0x5] sm:$0xff]
      %v3263 = vld [vmem:[#allocation4 + $0xd] sm:$0xff]
      %v3264 = vlaneseq
      %v3265 = vshrl.u32 %v3264, 7
      %v3266 = vsub.s32 0, %v3265
      %v3267 = vrot.slane %v3261, %v3266
      %v3268 = vmul.f32 %v3267, %v3262
      %v3269 = vmul.f32 %v3267, %v3263
      %v3270 = vadd.f32 %v3259, %v3268
      %v3271 = vadd.f32 %v3260, %v3269
      %v3272 = vld [vmem:[%s9 + $0x24] sm:$0x1]
      %v3273 = vlaneseq
      %v3274 = vshrl.u32 %v3273, 7
      %v3275 = vsub.s32 0, %v3274
      %v3276 = vrot.slane %v3272, %v3275
      %3279 = vrot.lane.b32.xlu0 %v3262, 127
      %v3280 = vpop.permute.xlu0 %3279
      %3281 = vrot.lane.b32.xlu0 %v3263, 127
      %v3282 = vpop.permute.xlu0 %3281
      %v3285 = vmul.f32 %v3276, %v3280
      %v3286 = vmul.f32 %v3276, %v3282
      %v3287 = vadd.f32 %v3270, %v3285
      %v3288 = vadd.f32 %v3271, %v3286
      %v3289 = vld [vmem:[%s9 + $0x25] sm:$0x1]
      %v3290 = vlaneseq
      %v3291 = vshrl.u32 %v3290, 7
      %v3292 = vsub.s32 0, %v3291
      %v3293 = vrot.slane %v3289, %v3292
      %3294 = vrot.lane.b32.xlu0 %v3262, 126
      %v3295 = vpop.permute.xlu0 %3294
      %3296 = vrot.lane.b32.xlu0 %v3263, 126
      %v3297 = vpop.permute.xlu0 %3296
      %v3300 = vmul.f32 %v3293, %v3295
      %v3301 = vmul.f32 %v3293, %v3297
      %v3302 = vadd.f32 %v3287, %v3300
      %v3303 = vadd.f32 %v3288, %v3301
      %v3304 = vld [vmem:[%s9 + $0x26] sm:$0x1]
      %v3305 = vlaneseq
      %v3306 = vshrl.u32 %v3305, 7
      %v3307 = vsub.s32 0, %v3306
      %v3308 = vrot.slane %v3304, %v3307
      %3309 = vrot.lane.b32.xlu0 %v3262, 125
      %v3310 = vpop.permute.xlu0 %3309
      %3311 = vrot.lane.b32.xlu0 %v3263, 125
      %v3312 = vpop.permute.xlu0 %3311
      %v3315 = vmul.f32 %v3308, %v3310
      %v3316 = vmul.f32 %v3308, %v3312
      %v3317 = vadd.f32 %v3302, %v3315
      %v3318 = vadd.f32 %v3303, %v3316
      %v3319 = vld [vmem:[%s9 + $0x27] sm:$0x1]
      %v3320 = vlaneseq
      %v3321 = vshrl.u32 %v3320, 7
      %v3322 = vsub.s32 0, %v3321
      %v3323 = vrot.slane %v3319, %v3322
      %3324 = vrot.lane.b32.xlu0 %v3262, 124
      %v3325 = vpop.permute.xlu0 %3324
      %3326 = vrot.lane.b32.xlu0 %v3263, 124
      %v3327 = vpop.permute.xlu0 %3326
      %v3330 = vmul.f32 %v3323, %v3325
      %v3331 = vmul.f32 %v3323, %v3327
      %v3332 = vadd.f32 %v3317, %v3330
      %v3333 = vadd.f32 %v3318, %v3331
      %v3334 = vld [vmem:[%s9 + $0x28] sm:$0x1]
      %v3335 = vlaneseq
      %v3336 = vshrl.u32 %v3335, 7
      %v3337 = vsub.s32 0, %v3336
      %v3338 = vrot.slane %v3334, %v3337
      %3339 = vrot.lane.b32.xlu0 %v3262, 123
      %v3340 = vpop.permute.xlu0 %3339
      %3341 = vrot.lane.b32.xlu0 %v3263, 123
      %v3342 = vpop.permute.xlu0 %3341
      %v3345 = vmul.f32 %v3338, %v3340
      %v3346 = vmul.f32 %v3338, %v3342
      %v3347 = vadd.f32 %v3332, %v3345
      %v3348 = vadd.f32 %v3333, %v3346
      %v3349 = vld [vmem:[%s9 + $0x29] sm:$0x1]
      %v3350 = vlaneseq
      %v3351 = vshrl.u32 %v3350, 7
      %v3352 = vsub.s32 0, %v3351
      %v3353 = vrot.slane %v3349, %v3352
      %3354 = vrot.lane.b32.xlu0 %v3262, 122
      %v3355 = vpop.permute.xlu0 %3354
      %3356 = vrot.lane.b32.xlu0 %v3263, 122
      %v3357 = vpop.permute.xlu0 %3356
      %v3360 = vmul.f32 %v3353, %v3355
      %v3361 = vmul.f32 %v3353, %v3357
      %v3362 = vadd.f32 %v3347, %v3360
      %v3363 = vadd.f32 %v3348, %v3361
      %v3364 = vld [vmem:[%s9 + $0x2a] sm:$0x1]
      %v3365 = vld [vmem:[#allocation4 + $0x6] sm:$0xff]
      %v3366 = vld [vmem:[#allocation4 + $0xe] sm:$0xff]
      %v3367 = vlaneseq
      %v3368 = vshrl.u32 %v3367, 7
      %v3369 = vsub.s32 0, %v3368
      %v3370 = vrot.slane %v3364, %v3369
      %v3371 = vmul.f32 %v3370, %v3365
      %v3372 = vmul.f32 %v3370, %v3366
      %v3373 = vadd.f32 %v3362, %v3371
      %v3374 = vadd.f32 %v3363, %v3372
      %v3375 = vld [vmem:[%s9 + $0x2b] sm:$0x1]
      %v3376 = vlaneseq
      %v3377 = vshrl.u32 %v3376, 7
      %v3378 = vsub.s32 0, %v3377
      %v3379 = vrot.slane %v3375, %v3378
      %3382 = vrot.lane.b32.xlu0 %v3365, 127
      %v3383 = vpop.permute.xlu0 %3382
      %3384 = vrot.lane.b32.xlu0 %v3366, 127
      %v3385 = vpop.permute.xlu0 %3384
      %v3388 = vmul.f32 %v3379, %v3383
      %v3389 = vmul.f32 %v3379, %v3385
      %v3390 = vadd.f32 %v3373, %v3388
      %v3391 = vadd.f32 %v3374, %v3389
      %v3392 = vld [vmem:[%s9 + $0x2c] sm:$0x1]
      %v3393 = vlaneseq
      %v3394 = vshrl.u32 %v3393, 7
      %v3395 = vsub.s32 0, %v3394
      %v3396 = vrot.slane %v3392, %v3395
      %3397 = vrot.lane.b32.xlu0 %v3365, 126
      %v3398 = vpop.permute.xlu0 %3397
      %3399 = vrot.lane.b32.xlu0 %v3366, 126
      %v3400 = vpop.permute.xlu0 %3399
      %v3403 = vmul.f32 %v3396, %v3398
      %v3404 = vmul.f32 %v3396, %v3400
      %v3405 = vadd.f32 %v3390, %v3403
      %v3406 = vadd.f32 %v3391, %v3404
      %v3407 = vld [vmem:[%s9 + $0x2d] sm:$0x1]
      %v3408 = vlaneseq
      %v3409 = vshrl.u32 %v3408, 7
      %v3410 = vsub.s32 0, %v3409
      %v3411 = vrot.slane %v3407, %v3410
      %3412 = vrot.lane.b32.xlu0 %v3365, 125
      %v3413 = vpop.permute.xlu0 %3412
      %3414 = vrot.lane.b32.xlu0 %v3366, 125
      %v3415 = vpop.permute.xlu0 %3414
      %v3418 = vmul.f32 %v3411, %v3413
      %v3419 = vmul.f32 %v3411, %v3415
      %v3420 = vadd.f32 %v3405, %v3418
      %v3421 = vadd.f32 %v3406, %v3419
      %v3422 = vld [vmem:[%s9 + $0x2e] sm:$0x1]
      %v3423 = vlaneseq
      %v3424 = vshrl.u32 %v3423, 7
      %v3425 = vsub.s32 0, %v3424
      %v3426 = vrot.slane %v3422, %v3425
      %3427 = vrot.lane.b32.xlu0 %v3365, 124
      %v3428 = vpop.permute.xlu0 %3427
      %3429 = vrot.lane.b32.xlu0 %v3366, 124
      %v3430 = vpop.permute.xlu0 %3429
      %v3433 = vmul.f32 %v3426, %v3428
      %v3434 = vmul.f32 %v3426, %v3430
      %v3435 = vadd.f32 %v3420, %v3433
      %v3436 = vadd.f32 %v3421, %v3434
      %v3437 = vld [vmem:[%s9 + $0x2f] sm:$0x1]
      %v3438 = vlaneseq
      %v3439 = vshrl.u32 %v3438, 7
      %v3440 = vsub.s32 0, %v3439
      %v3441 = vrot.slane %v3437, %v3440
      %3442 = vrot.lane.b32.xlu0 %v3365, 123
      %v3443 = vpop.permute.xlu0 %3442
      %3444 = vrot.lane.b32.xlu0 %v3366, 123
      %v3445 = vpop.permute.xlu0 %3444
      %v3448 = vmul.f32 %v3441, %v3443
      %v3449 = vmul.f32 %v3441, %v3445
      %v3450 = vadd.f32 %v3435, %v3448
      %v3451 = vadd.f32 %v3436, %v3449
      %v3452 = vld [vmem:[%s9 + $0x30] sm:$0x1]
      %v3453 = vlaneseq
      %v3454 = vshrl.u32 %v3453, 7
      %v3455 = vsub.s32 0, %v3454
      %v3456 = vrot.slane %v3452, %v3455
      %3457 = vrot.lane.b32.xlu0 %v3365, 122
      %v3458 = vpop.permute.xlu0 %3457
      %3459 = vrot.lane.b32.xlu0 %v3366, 122
      %v3460 = vpop.permute.xlu0 %3459
      %v3463 = vmul.f32 %v3456, %v3458
      %v3464 = vmul.f32 %v3456, %v3460
      %v3465 = vadd.f32 %v3450, %v3463
      %v3466 = vadd.f32 %v3451, %v3464
      %3469 = vrot.lane.b32.xlu0 %v3465, 106
      %v3470 = vpop.permute.xlu0 %3469
      %3471 = vrot.lane.b32.xlu0 %v3466, 106
      %v3472 = vpop.permute.xlu0 %3471
      %v3475 = vadd.f32 %v3465, %v3470
      %v3476 = vadd.f32 %v3466, %v3472
      %v3477 = vxor.u32 %v3475, 2147483648
      %v3478 = vxor.u32 %v3476, 2147483648
      %v3479 = vmul.f32 %v3477, 1.442695
      %v3480 = vpow.pop %v3479
      %v3481 = vmul.f32 %v3478, 1.442695
      %v3482 = vpow.pop %v3481
      %v3483 = vadd.f32 %v3480, 1.0
      %v3484 = vadd.f32 %v3482, 1.0
      %v3485 = vrcp.pop %v3483
      %v3486 = vmul.f32 1.0, %v3485
      %v3487 = vrcp.pop %v3484
      %v3488 = vmul.f32 1.0, %v3487
      %3491 = vrot.lane.b32.xlu0 %v3486, 16
      %v3492 = vpop.permute.xlu0 %3491
      %3493 = vrot.lane.b32.xlu0 %v3488, 16
      %v3494 = vpop.permute.xlu0 %3493
      %3497 = vrot.lane.b32.xlu0 %v3486, 32
      %v3498 = vpop.permute.xlu0 %3497
      %3499 = vrot.lane.b32.xlu0 %v3488, 32
      %v3500 = vpop.permute.xlu0 %3499
      %3503 = vrot.lane.b32.xlu0 %v3486, 48
      %v3504 = vpop.permute.xlu0 %3503
      %3505 = vrot.lane.b32.xlu0 %v3488, 48
      %v3506 = vpop.permute.xlu0 %3505
      %v3509 = vsel %vm2325, %v3486, %v3492
      %v3510 = vsel %vm2325, %v3488, %v3494
      %v3511 = vsel %vm2328, %v3509, %v3498
      %v3512 = vsel %vm2328, %v3510, %v3500
      %v3513 = vsel %vm2331, %v3511, %v3504
      %v3514 = vsel %vm2331, %v3512, %v3506
      %v3515 = vmul.f32 %v2618, %v3513
      %v3516 = vmul.f32 %v2619, %v3514
      %3517 = vrot.lane.b32.xlu0 %v3486, 84
      %v3518 = vpop.permute.xlu0 %3517
      %3519 = vrot.lane.b32.xlu0 %v3488, 84
      %v3520 = vpop.permute.xlu0 %3519
      %3523 = vrot.lane.b32.xlu0 %v3486, 100
      %v3524 = vpop.permute.xlu0 %3523
      %3525 = vrot.lane.b32.xlu0 %v3488, 100
      %v3526 = vpop.permute.xlu0 %3525
      %3529 = vrot.lane.b32.xlu0 %v3486, 116
      %v3530 = vpop.permute.xlu0 %3529
      %3531 = vrot.lane.b32.xlu0 %v3488, 116
      %v3532 = vpop.permute.xlu0 %3531
      %3535 = vrot.lane.b32.xlu0 %v3486, 4
      %v3536 = vpop.permute.xlu0 %3535
      %3537 = vrot.lane.b32.xlu0 %v3488, 4
      %v3538 = vpop.permute.xlu0 %3537
      %v3541 = vsel %vm2325, %v3518, %v3524
      %v3542 = vsel %vm2325, %v3520, %v3526
      %v3543 = vsel %vm2328, %v3541, %v3530
      %v3544 = vsel %vm2328, %v3542, %v3532
      %v3545 = vsel %vm2331, %v3543, %v3536
      %v3546 = vsel %vm2331, %v3544, %v3538
      %v3547 = vmul.f32 %v2633, %v3545
      %v3548 = vmul.f32 %v2634, %v3546
      %v3549 = vadd.f32 %v3515, %v3547
      %v3550 = vadd.f32 %v3516, %v3548
      %v3551 = vld [vmem:[%s12] sm:$0x1]
      %v3553 = vlaneseq
      %v3554 = vshrl.u32 %v3553, 7
      %v3555 = vsub.s32 0, %v3554
      %v3556 = vrot.slane %v3551, %v3555
      %v3558 = vadd.f32 %v3556, 0.0
      %v3559 = vld [vmem:[%s11] sm:$0x1]
      %3562 = vrot.lane.b32.xlu0 %v3549, 16
      %v3563 = vpop.permute.xlu0 %3562
      %3564 = vrot.lane.b32.xlu0 %v3550, 16
      %v3565 = vpop.permute.xlu0 %3564
      %3568 = vrot.lane.b32.xlu0 %v3549, 32
      %v3569 = vpop.permute.xlu0 %3568
      %3570 = vrot.lane.b32.xlu0 %v3550, 32
      %v3571 = vpop.permute.xlu0 %3570
      %3574 = vrot.lane.b32.xlu0 %v3549, 48
      %v3575 = vpop.permute.xlu0 %3574
      %3576 = vrot.lane.b32.xlu0 %v3550, 48
      %v3577 = vpop.permute.xlu0 %3576
      %3580 = vrot.lane.b32.xlu0 %v3549, 64
      %v3581 = vpop.permute.xlu0 %3580
      %3582 = vrot.lane.b32.xlu0 %v3550, 64
      %v3583 = vpop.permute.xlu0 %3582
      %3586 = vrot.lane.b32.xlu0 %v3549, 80
      %v3587 = vpop.permute.xlu0 %3586
      %3588 = vrot.lane.b32.xlu0 %v3550, 80
      %v3589 = vpop.permute.xlu0 %3588
      %3592 = vrot.lane.b32.xlu0 %v3549, 96
      %v3593 = vpop.permute.xlu0 %3592
      %3594 = vrot.lane.b32.xlu0 %v3550, 96
      %v3595 = vpop.permute.xlu0 %3594
      %3598 = vrot.lane.b32.xlu0 %v3549, 112
      %v3599 = vpop.permute.xlu0 %3598
      %3600 = vrot.lane.b32.xlu0 %v3550, 112
      %v3601 = vpop.permute.xlu0 %3600
      %v3604 = vsel %vm2325, %v3549, %v3563
      %v3605 = vsel %vm2325, %v3550, %v3565
      %v3606 = vsel %vm2328, %v3604, %v3569
      %v3607 = vsel %vm2328, %v3605, %v3571
      %v3608 = vsel %vm2331, %v3606, %v3575
      %v3609 = vsel %vm2331, %v3607, %v3577
      %vm3610 = vcmask 523264
      %v3611 = vsel %vm3610, %v3608, %v3581
      %v3612 = vsel %vm3610, %v3609, %v3583
      %vm3613 = vcmask 654336
      %v3614 = vsel %vm3613, %v3611, %v3587
      %v3615 = vsel %vm3613, %v3612, %v3589
      %v3616 = vsel %vm2693, %v3614, %v3593
      %v3617 = vsel %vm2693, %v3615, %v3595
      %vm3618 = vcmask 916480
      %v3619 = vsel %vm3618, %v3616, %v3599
      %v3620 = vsel %vm3618, %v3617, %v3601
      %v3621 = vlaneseq
      %v3622 = vshrl.u32 %v3621, 7
      %v3623 = vsub.s32 0, %v3622
      %v3624 = vrot.slane %v3559, %v3623
      %v3625 = vmul.f32 %v3624, %v3619
      %v3626 = vmul.f32 %v3624, %v3620
      %v3627 = vadd.f32 %v3558, %v3625
      %v3628 = vadd.f32 %v3558, %v3626
      %v3629 = vld [vmem:[%s11 + $0x1] sm:$0x1]
      %v3630 = vsel %vm2325, %v3599, %v3549
      %v3631 = vsel %vm2325, %v3601, %v3550
      %v3632 = vsel %vm2328, %v3630, %v3563
      %v3633 = vsel %vm2328, %v3631, %v3565
      %v3634 = vsel %vm2331, %v3632, %v3569
      %v3635 = vsel %vm2331, %v3633, %v3571
      %v3636 = vsel %vm3610, %v3634, %v3575
      %v3637 = vsel %vm3610, %v3635, %v3577
      %v3638 = vsel %vm3613, %v3636, %v3581
      %v3639 = vsel %vm3613, %v3637, %v3583
      %v3640 = vsel %vm2693, %v3638, %v3587
      %v3641 = vsel %vm2693, %v3639, %v3589
      %v3642 = vsel %vm3618, %v3640, %v3593
      %v3643 = vsel %vm3618, %v3641, %v3595
      %v3644 = vlaneseq
      %v3645 = vshrl.u32 %v3644, 7
      %v3646 = vsub.s32 0, %v3645
      %v3647 = vrot.slane %v3629, %v3646
      %v3648 = vmul.f32 %v3647, %v3642
      %v3649 = vmul.f32 %v3647, %v3643
      %v3650 = vadd.f32 %v3627, %v3648
      %v3651 = vadd.f32 %v3628, %v3649
      %v3652 = vld [vmem:[%s11 + $0x2] sm:$0x1]
      %v3653 = vsel %vm2325, %v3593, %v3599
      %v3654 = vsel %vm2325, %v3595, %v3601
      %v3655 = vsel %vm2328, %v3653, %v3549
      %v3656 = vsel %vm2328, %v3654, %v3550
      %v3657 = vsel %vm2331, %v3655, %v3563
      %v3658 = vsel %vm2331, %v3656, %v3565
      %v3659 = vsel %vm3610, %v3657, %v3569
      %v3660 = vsel %vm3610, %v3658, %v3571
      %v3661 = vsel %vm3613, %v3659, %v3575
      %v3662 = vsel %vm3613, %v3660, %v3577
      %v3663 = vsel %vm2693, %v3661, %v3581
      %v3664 = vsel %vm2693, %v3662, %v3583
      %v3665 = vsel %vm3618, %v3663, %v3587
      %v3666 = vsel %vm3618, %v3664, %v3589
      %v3667 = vlaneseq
      %v3668 = vshrl.u32 %v3667, 7
      %v3669 = vsub.s32 0, %v3668
      %v3670 = vrot.slane %v3652, %v3669
      %v3671 = vmul.f32 %v3670, %v3665
      %v3672 = vmul.f32 %v3670, %v3666
      %v3673 = vadd.f32 %v3650, %v3671
      %v3674 = vadd.f32 %v3651, %v3672
      %v3675 = vld [vmem:[%s11 + $0x3] sm:$0x1]
      %v3676 = vsel %vm2325, %v3587, %v3593
      %v3677 = vsel %vm2325, %v3589, %v3595
      %v3678 = vsel %vm2328, %v3676, %v3599
      %v3679 = vsel %vm2328, %v3677, %v3601
      %v3680 = vsel %vm2331, %v3678, %v3549
      %v3681 = vsel %vm2331, %v3679, %v3550
      %v3682 = vsel %vm3610, %v3680, %v3563
      %v3683 = vsel %vm3610, %v3681, %v3565
      %v3684 = vsel %vm3613, %v3682, %v3569
      %v3685 = vsel %vm3613, %v3683, %v3571
      %v3686 = vsel %vm2693, %v3684, %v3575
      %v3687 = vsel %vm2693, %v3685, %v3577
      %v3688 = vsel %vm3618, %v3686, %v3581
      %v3689 = vsel %vm3618, %v3687, %v3583
      %v3690 = vlaneseq
      %v3691 = vshrl.u32 %v3690, 7
      %v3692 = vsub.s32 0, %v3691
      %v3693 = vrot.slane %v3675, %v3692
      %v3694 = vmul.f32 %v3693, %v3688
      %v3695 = vmul.f32 %v3693, %v3689
      %v3696 = vadd.f32 %v3673, %v3694
      %v3697 = vadd.f32 %v3674, %v3695
      %v3698 = vld [vmem:[%s435] sm:$0xff]
      %v3699 = vld [vmem:[%s435 + $0x8] sm:$0xff]
      %v3700 = vmul.f32 %v3698, %v3696
      %v3701 = vmul.f32 %v3699, %v3697
      %3702 = vst [vmem:[%s440] sm:$0xff] %v3700
      %3703 = vst [vmem:[%s440 + $0x8] sm:$0xff] %v3701
      %p3704 = scmp.lt.s32.totalorder %s24, 1
      %s3705 = scalar_select %p3704, %s24, 1
      %s3706 = smul.addr %s3705, 2
      %s3707 = smul.addr %s3706, 8
      %s3708 = scalar_lea.vmem %s13, %s3707
      // Predicated region
      $region73: #{lsk_block.1} parent=71 // pred_check
        %p3709 = pneg %p320
      $region74: #{lsk_block.1} parent=71 // pred_check_branch
        %3711 = sbr.rel (%p3709) target = $region76
      $region75: #{lsk_block.1} parent=71 // pred_region
        _
      $region76: #{lsk_block.1} parent=71 // pred_fallthru
        _
    $region72: #{lsk_block.1} parent=5 // pred_fallthru
      _
    %p3712 = scmp.le.s32.totalorder 2, %s19
    // Predicated region
    $region77: #{lsk_block.1} parent=5 // pred_check
      %p3713 = pneg %p3712
    $region78: #{lsk_block.1} parent=5 // pred_check_branch
      %3715 = sbr.rel (%p3713) target = $region80
    $region79: #{lsk_block.1} parent=5 // pred_region
      %s3716 = ssub.s32 %s19, 2
      // Predicated region
      $region81: #{lsk_block.1} parent=79 // pred_check
        %p3717 = pneg %p326
      $region82: #{lsk_block.1} parent=79 // pred_check_branch
        %3719 = sbr.rel (%p3717) target = $region84
      $region83: #{lsk_block.1} parent=79 // pred_region
        %p3720 = scmp.lt.s32.totalorder %s25, 1
        %s3721 = scalar_select %p3720, %s25, 1
        %s3722 = smul.addr %s3721, 2
        %s3723 = smul.addr %s3722, 8
        %s3724 = scalar_lea.vmem %s13, %s3723
      $region84: #{lsk_block.1} parent=79 // pred_fallthru
        _
    $region80: #{lsk_block.1} parent=5 // pred_fallthru
      _
  $region6: #{lsk_block.1} parent=0 // loop_footer
    %s23 = sadd.s32 1, %s19
  $region7: #{lsk_block.1} parent=0 // loop_footer_branch
    %18 = sbr.rel target = $region3
  $region8: #{lsk_block.1} parent=0 // loop_exit
    _

</llo_original>
